<compile_context>
chip_gen: v6e
topology: v6e:2x2x1
jax: 0.10.0
libtpu: 0.0.40
codegen_flags: <defaults>
</compile_context>

<pallas_src>
import jax
import jax.numpy as jnp
import numpy as np
from jax.experimental import pallas as pl
from jax.experimental.pallas import tpu as pltpu


def _round_up(x, m):
    return ((x + m - 1) // m) * m


def _decoder_kernel(tok_ref,                      # SMEM scalar prefetch: (Bp,) int32 token ids
                    emb_hbm,                      # HBM (ANY): (Vvocab, Fp) embedding table
                    h_ref, enc_ref,               # (Bp, Hp), (Bp, Lp, Hp)
                    wae_ref, wah_ref, abias_ref,  # (1, Hp), (1, Hp), (1, Lp) [bias + -1e30 L-mask]
                    wcomb_ref, bc_ref,            # (Fp+Hp, Fp), (1, Fp)
                    wih_ref, whh_ref,             # (Fp, 3Hp), (Hp, 3Hp)   fused gate weights
                    bih_ref, bhh_ref,             # (1, 3Hp), (1, 3Hp)
                    wo_ref, bo_ref,               # (Hp, TV), (1, TV)      streamed vocab tiles
                    logp_ref, hnew_ref, attw_ref,
                    xemb_sc, h_sc, m_sc, l_sc, emb_sem):
    v = pl.program_id(0)
    nv = pl.num_programs(0)
    Bp, Hp = h_ref.shape
    Lp = enc_ref.shape[1]
    TV = wo_ref.shape[1]

    # ---------- front end (gather, attention, combine, GRU): once, at vocab tile 0 ----------
    @pl.when(v == 0)
    def _front():
        # Embedding row gather: Bp tiny HBM->VMEM DMAs driven by the SMEM token ids.
        copies = [
            pltpu.make_async_copy(emb_hbm.at[pl.ds(tok_ref[i], 1)],
                                  xemb_sc.at[pl.ds(i, 1)],
                                  emb_sem.at[i])
            for i in range(Bp)
        ]
        for cp in copies:
            cp.start()
        for cp in copies:
            cp.wait()
        # TODO(synk): nn.Dropout is identity here (eval / inference mode).

        h_last = h_ref[...]                                                  # (Bp, Hp)
        enc = enc_ref[...]                                                   # (Bp, Lp, Hp)

        # Bahdanau scores on the MXU: score[b,l] = <enc[b,l,:], w_e> + <h[b,:], w_h> + b (+mask)
        wq = jnp.broadcast_to(wae_ref[...].reshape(1, 1, Hp), (Bp, 1, Hp))
        score = jnp.einsum('bqh,blh->bql', wq, enc,
                           preferred_element_type=jnp.float32)               # (Bp, 1, Lp)
        score_hid = jnp.sum(h_last * wah_ref[...], axis=-1, keepdims=True)   # (Bp, 1)
        score = score + score_hid[:, :, None] + abias_ref[...].reshape(1, 1, Lp)

        m = jnp.max(score, axis=-1, keepdims=True)
        e = jnp.exp(score - m)
        denom = jnp.sum(e, axis=-1, keepdims=True)
        # approx=True would push this onto the EUP but costs a few ULPs; keep exact here.
        attw = e * pl.reciprocal(denom, approx=False)                        # (Bp, 1, Lp)
        attw_ref[...] = attw

        # context = attw @ encoderOutput on the MXU
        context = jnp.sum(
            jnp.einsum('bql,blh->bqh', attw, enc, preferred_element_type=jnp.float32),
            axis=1)                                                          # (Bp, Hp)

        # attention_combine: one fused (Bp, Fp+Hp) @ (Fp+Hp, Fp) matmul, then ReLU
        cat = jnp.concatenate([xemb_sc[...], context], axis=-1)
        comb = jnp.dot(cat, wcomb_ref[...],
                       preferred_element_type=jnp.float32) + bc_ref[...]
        gru_in = jnp.maximum(comb, 0.0)

        # single-step GRU with two fused matmuls (PyTorch gate order r, z, n)
        gi = jnp.dot(gru_in, wih_ref[...],
                     preferred_element_type=jnp.float32) + bih_ref[...]      # (Bp, 3Hp)
        gh = jnp.dot(h_last, whh_ref[...],
                     preferred_element_type=jnp.float32) + bhh_ref[...]      # (Bp, 3Hp)
        r = jax.nn.sigmoid(gi[:, 0:Hp] + gh[:, 0:Hp])
        z = jax.nn.sigmoid(gi[:, Hp:2 * Hp] + gh[:, Hp:2 * Hp])
        n = jnp.tanh(gi[:, 2 * Hp:3 * Hp] + r * gh[:, 2 * Hp:3 * Hp])
        h_new = (1.0 - z) * n + z * h_last
        h_sc[...] = h_new
        hnew_ref[...] = h_new

        # init online logsumexp state for the streamed vocab projection
        m_sc[...] = jnp.full_like(m_sc, -1e30)
        l_sc[...] = jnp.zeros_like(l_sc)

    # ---------- streamed output projection: one vocab tile per grid step ----------
    logits = jnp.dot(h_sc[...], wo_ref[...],
                     preferred_element_type=jnp.float32) + bo_ref[...]       # (Bp, TV)
    m_prev = m_sc[...]
    m_new = jnp.maximum(m_prev, jnp.max(logits, axis=-1, keepdims=True))
    l_sc[...] = (l_sc[...] * jnp.exp(m_prev - m_new)
                 + jnp.sum(jnp.exp(logits - m_new), axis=-1, keepdims=True))
    m_sc[...] = m_new
    col = pl.multiple_of(v * TV, TV)
    logp_ref[:, pl.ds(col, TV)] = logits           # raw logits; normalized on the last tile

    @pl.when(v == nv - 1)
    def _finalize():
        logp_ref[...] = logp_ref[...] - (m_sc[...] + jnp.log(l_sc[...]))


def pack_params(params, max_len):
    """One-time packing (hoisted out of the decode loop): pad every lane dim to a multiple
    of 128, transpose / split / fuse all weights, fold the attention bias + length mask."""
    emb = params["embedding"].astype(jnp.float32)
    Vvocab, F = emb.shape
    H = params["gru_w_hh"].shape[1]
    Vout = params["out_w"].shape[0]
    L = max_len

    Fp, Hp, Lp = _round_up(F, 128), _round_up(H, 128), _round_up(L, 128)
    TV = min(512, _round_up(Vout, 128))          # vocab tile width (multiple of 128)
    Vp = _round_up(Vout, TV)

    emb_p = jnp.zeros((Vvocab, Fp), jnp.float32).at[:, :F].set(emb)

    wa = params["att_w"]                          # (1, 2H): [encoder half | hidden half]
    wa_enc = jnp.zeros((1, Hp), jnp.float32).at[:, :H].set(wa[:, :H])
    wa_hid = jnp.zeros((1, Hp), jnp.float32).at[:, :H].set(wa[:, H:])
    abias = jnp.full((1, Lp), -1e30, jnp.float32).at[:, :L].set(
        params["att_b"].reshape(1, 1))            # bias on real L, -1e30 mask on padding

    wc = params["comb_w"]                         # (F, F+H)
    wcomb = jnp.zeros((Fp + Hp, Fp), jnp.float32)
    wcomb = wcomb.at[:F, :F].set(wc[:, :F].T)             # embedding part
    wcomb = wcomb.at[Fp:Fp + H, :F].set(wc[:, F:].T)      # context part
    bc = jnp.zeros((1, Fp), jnp.float32).at[:, :F].set(params["comb_b"].reshape(1, F))

    wih, whh = params["gru_w_ih"], params["gru_w_hh"]     # (3H, F), (3H, H)
    bih, bhh = params["gru_b_ih"], params["gru_b_hh"]
    wih_f = jnp.zeros((Fp, 3 * Hp), jnp.float32)
    whh_f = jnp.zeros((Hp, 3 * Hp), jnp.float32)
    bih_f = jnp.zeros((1, 3 * Hp), jnp.float32)
    bhh_f = jnp.zeros((1, 3 * Hp), jnp.float32)
    for g in range(3):                                    # gate order: r, z, n
        wih_f = wih_f.at[:F, g * Hp:g * Hp + H].set(wih[g * H:(g + 1) * H].T)
        whh_f = whh_f.at[:H, g * Hp:g * Hp + H].set(whh[g * H:(g + 1) * H].T)
        bih_f = bih_f.at[:, g * Hp:g * Hp + H].set(bih[g * H:(g + 1) * H].reshape(1, H))
        bhh_f = bhh_f.at[:, g * Hp:g * Hp + H].set(bhh[g * H:(g + 1) * H].reshape(1, H))

    wo = jnp.zeros((Hp, Vp), jnp.float32).at[:H, :Vout].set(params["out_w"].T)
    # -1e30 bias on padded vocab columns -> exp underflows to 0 in the logsumexp
    bo = jnp.full((1, Vp), -1e30, jnp.float32).at[:, :Vout].set(
        params["out_b"].reshape(1, Vout))

    packed = dict(emb=emb_p, wa_enc=wa_enc, wa_hid=wa_hid, abias=abias,
                  wcomb=wcomb, bc=bc, wih=wih_f, whh=whh_f, bih=bih_f, bhh=bhh_f,
                  wo=wo, bo=bo)
    dims = dict(F=F, H=H, L=L, Vout=Vout, Fp=Fp, Hp=Hp, Lp=Lp, Vp=Vp, TV=TV)
    return packed, dims


def bahdanau_decoder_step(tok_ids, hidden, encoder_output, packed, dims):
    B, L, H = encoder_output.shape
    Vout = dims["Vout"]
    Fp, Hp, Lp, Vp, TV = dims["Fp"], dims["Hp"], dims["Lp"], dims["Vp"], dims["TV"]
    assert L == dims["L"] and H == dims["H"]
    Bp = _round_up(B, 8)
    nv = Vp // TV

    tok_p = jnp.zeros((Bp,), jnp.int32).at[:B].set(tok_ids.reshape(B).astype(jnp.int32))
    h_p = jnp.zeros((Bp, Hp), jnp.float32).at[:B, :H].set(hidden[-1])
    enc_p = jnp.zeros((Bp, Lp, Hp), jnp.float32).at[:B, :L, :H].set(encoder_output)

    grid_spec = pltpu.PrefetchScalarGridSpec(
        num_scalar_prefetch=1,
        grid=(nv,),
        in_specs=[
            pl.BlockSpec(memory_space=pl.ANY),                      # embedding table (HBM)
            pl.BlockSpec((Bp, Hp), lambda v, tok: (0, 0)),          # h_last (resident)
            pl.BlockSpec((Bp, Lp, Hp), lambda v, tok: (0, 0, 0)),   # encoder output
            pl.BlockSpec((1, Hp), lambda v, tok: (0, 0)),           # attention w (enc half)
            pl.BlockSpec((1, Hp), lambda v, tok: (0, 0)),           # attention w (hid half)
            pl.BlockSpec((1, Lp), lambda v, tok: (0, 0)),           # attention bias + L mask
            pl.BlockSpec((Fp + Hp, Fp), lambda v, tok: (0, 0)),     # fused combine weight
            pl.BlockSpec((1, Fp), lambda v, tok: (0, 0)),           # combine bias
            pl.BlockSpec((Fp, 3 * Hp), lambda v, tok: (0, 0)),      # fused GRU W_ih
            pl.BlockSpec((Hp, 3 * Hp), lambda v, tok: (0, 0)),      # fused GRU W_hh
            pl.BlockSpec((1, 3 * Hp), lambda v, tok: (0, 0)),       # GRU b_ih
            pl.BlockSpec((1, 3 * Hp), lambda v, tok: (0, 0)),       # GRU b_hh
            pl.BlockSpec((Hp, TV), lambda v, tok: (0, v)),          # out weight (streamed)
            pl.BlockSpec((1, TV), lambda v, tok: (0, v)),           # out bias (streamed)
        ],
        out_specs=[
            pl.BlockSpec((Bp, Vp), lambda v, tok: (0, 0)),          # log-probs (VMEM resident)
            pl.BlockSpec((Bp, Hp), lambda v, tok: (0, 0)),          # new hidden
            pl.BlockSpec((Bp, 1, Lp), lambda v, tok: (0, 0, 0)),    # attention weights
        ],
        scratch_shapes=[
            pltpu.VMEM((Bp, Fp), jnp.float32),      # gathered embedding rows
            pltpu.VMEM((Bp, Hp), jnp.float32),      # h_new carry
            pltpu.VMEM((Bp, 1), jnp.float32),       # running max
            pltpu.VMEM((Bp, 1), jnp.float32),       # running sum-exp
            pltpu.SemaphoreType.DMA((Bp,)),         # embedding-gather DMA semaphores
        ],
    )
    out_shapes = (
        jax.ShapeDtypeStruct((Bp, Vp), jnp.float32),
        jax.ShapeDtypeStruct((Bp, Hp), jnp.float32),
        jax.ShapeDtypeStruct((Bp, 1, Lp), jnp.float32),
    )
    logp, h_new, attw = pl.pallas_call(
        _decoder_kernel,
        out_shape=out_shapes,
        grid_spec=grid_spec,
        # in-place hidden update: h_last input (index 2, counting the scalar-prefetch
        # token operand) aliases the new-hidden output (output index 1).
        input_output_aliases={2: 1},
        compiler_params=pltpu.CompilerParams(
            dimension_semantics=("arbitrary",),     # vocab tiles carry the online logsumexp
            vmem_limit_bytes=48 * 1024 * 1024,
        ),
    )(tok_p, packed["emb"], h_p, enc_p,
      packed["wa_enc"], packed["wa_hid"], packed["abias"],
      packed["wcomb"], packed["bc"],
      packed["wih"], packed["whh"], packed["bih"], packed["bhh"],
      packed["wo"], packed["bo"])

    output = logp[:B, :Vout].reshape(B, 1, Vout)     # (B, 1, outputSize) log-probs
    hidden_new = h_new[:B, :H].reshape(1, B, H)      # (numLayers=1, B, hiddenSize)
    attention_weight = attw[:B, :, :L]               # (B, 1, L)
    return output, hidden_new, attention_weight


def _reference(tok_ids, hidden, encoder_output, params):
    """Pure-JAX re-implementation of the PyTorch forward (eval mode) for validation."""
    B, L, H = encoder_output.shape
    emb = params["embedding"][tok_ids].reshape(B, 1, -1)        # (B, 1, F)
    F = emb.shape[-1]
    h_last = hidden[-1]                                         # (B, H)
    hid_exp = jnp.broadcast_to(h_last[:, None, :], (B, L, H))
    cat = jnp.concatenate([encoder_output, hid_exp], axis=2)    # (B, L, 2H)
    score = cat @ params["att_w"].T + params["att_b"]           # (B, L, 1)
    score = jnp.transpose(score, (0, 2, 1))                     # (B, 1, L)
    attw = jax.nn.softmax(score, axis=2)                        # (B, 1, L)
    context = jnp.einsum("bol,blh->boh", attw, encoder_output)  # (B, 1, H)
    comb_in = jnp.concatenate([emb, context], axis=2)           # (B, 1, F+H)
    comb = comb_in @ params["comb_w"].T + params["comb_b"]      # (B, 1, F)
    x = jax.nn.relu(comb)[:, 0, :]                              # (B, F)
    gi = x @ params["gru_w_ih"].T + params["gru_b_ih"]          # (B, 3H)
    gh = h_last @ params["gru_w_hh"].T + params["gru_b_hh"]     # (B, 3H)
    r = jax.nn.sigmoid(gi[:, :H] + gh[:, :H])
    z = jax.nn.sigmoid(gi[:, H:2 * H] + gh[:, H:2 * H])
    n = jnp.tanh(gi[:, 2 * H:] + r * gh[:, 2 * H:])
    h_new = (1.0 - z) * n + z * h_last                          # (B, H)
    logits = h_new @ params["out_w"].T + params["out_b"]        # (B, Vout)
    logp = jax.nn.log_softmax(logits, axis=-1)
    return logp[:, None, :], h_new[None], attw


if __name__ == "__main__":
    B, L, F, H, Vvocab, Vout = 2, 8, 32, 32, 64, 64

    key = jax.random.PRNGKey(0)
    keys = jax.random.split(key, 16)
    params = {
        "embedding": 0.1 * jax.random.normal(keys[0], (Vvocab, F), jnp.float32),
        "att_w":     0.1 * jax.random.normal(keys[1], (1, 2 * H), jnp.float32),
        "att_b":     0.1 * jax.random.normal(keys[2], (1,), jnp.float32),
        "comb_w":    0.1 * jax.random.normal(keys[3], (F, F + H), jnp.float32),
        "comb_b":    0.1 * jax.random.normal(keys[4], (F,), jnp.float32),
        "gru_w_ih":  0.1 * jax.random.normal(keys[5], (3 * H, F), jnp.float32),
        "gru_w_hh":  0.1 * jax.random.normal(keys[6], (3 * H, H), jnp.float32),
        "gru_b_ih":  0.1 * jax.random.normal(keys[7], (3 * H,), jnp.float32),
        "gru_b_hh":  0.1 * jax.random.normal(keys[8], (3 * H,), jnp.float32),
        "out_w":     0.1 * jax.random.normal(keys[9], (Vout, H), jnp.float32),
        "out_b":     0.1 * jax.random.normal(keys[10], (Vout,), jnp.float32),
    }

    tok = jax.random.randint(keys[11], (B,), 0, Vvocab, jnp.int32)     # inputStep token ids
    hidden = 0.1 * jax.random.normal(keys[12], (1, B, H), jnp.float32)
    enc = 0.1 * jax.random.normal(keys[13], (B, L, H), jnp.float32)

    # one-time parameter packing (would be hoisted out of the decode loop in production)
    packed, dims = pack_params(params, max_len=L)

    out, h_new, attw = bahdanau_decoder_step(tok, hidden, enc, packed, dims)
    (out, h_new, attw) = jax.block_until_ready((out, h_new, attw))

    ref_out, ref_h, ref_attw = _reference(tok, hidden, enc, params)
    assert np.allclose(np.asarray(out), np.asarray(ref_out), atol=2e-5), "log-probs mismatch"
    assert np.allclose(np.asarray(h_new), np.asarray(ref_h), atol=2e-5), "hidden mismatch"
    assert np.allclose(np.asarray(attw), np.asarray(ref_attw), atol=2e-5), "attention mismatch"

    print("KERNEL_OK")
</pallas_src>

<mosaic_0001>
module attributes {stable_mosaic.version = 11 : i64} {
  func.func @_decoder_kernel(%arg0: i32, %arg1: memref<8xi32, #tpu.memory_space<smem>>, %arg2: memref<64x128xf32, #tpu.memory_space<any>>, %arg3: memref<8x128xf32, #tpu.memory_space<vmem>>, %arg4: memref<8x128x128xf32, #tpu.memory_space<vmem>>, %arg5: memref<1x128xf32, #tpu.memory_space<vmem>>, %arg6: memref<1x128xf32, #tpu.memory_space<vmem>>, %arg7: memref<1x128xf32, #tpu.memory_space<vmem>>, %arg8: memref<256x128xf32, #tpu.memory_space<vmem>>, %arg9: memref<1x128xf32, #tpu.memory_space<vmem>>, %arg10: memref<128x384xf32, #tpu.memory_space<vmem>>, %arg11: memref<128x384xf32, #tpu.memory_space<vmem>>, %arg12: memref<1x384xf32, #tpu.memory_space<vmem>>, %arg13: memref<1x384xf32, #tpu.memory_space<vmem>>, %arg14: memref<128x128xf32, #tpu.memory_space<vmem>>, %arg15: memref<1x128xf32, #tpu.memory_space<vmem>>, %arg16: memref<8x128xf32, #tpu.memory_space<vmem>>, %arg17: memref<8x128xf32, #tpu.memory_space<vmem>>, %arg18: memref<8x1x128xf32, #tpu.memory_space<vmem>>, %arg19: memref<8x128xf32, #tpu.memory_space<vmem>>, %arg20: memref<8x128xf32, #tpu.memory_space<vmem>>, %arg21: memref<8x1xf32, #tpu.memory_space<vmem>>, %arg22: memref<8x1xf32, #tpu.memory_space<vmem>>, %arg23: memref<8x!tpu.dma_semaphore, #tpu.memory_space<semaphore_mem>>) attributes {dimension_semantics = [#tpu.dimension_semantics<arbitrary>], iteration_bounds = array<i64: 1>, scalar_prefetch = 1 : i64, scratch_operands = 5 : i64, tpu.core_type = #tpu.core_type<tc>, window_params = [{}, {pipeline_mode = #tpu.pipeline_mode<synchronous>, transform_indices = @transform_1, window_bounds = array<i64: 8, 128>}, {pipeline_mode = #tpu.pipeline_mode<synchronous>, transform_indices = @transform_2, window_bounds = array<i64: 8, 128, 128>}, {pipeline_mode = #tpu.pipeline_mode<synchronous>, transform_indices = @transform_3, window_bounds = array<i64: 1, 128>}, {pipeline_mode = #tpu.pipeline_mode<synchronous>, transform_indices = @transform_4, window_bounds = array<i64: 1, 128>}, {pipeline_mode = #tpu.pipeline_mode<synchronous>, transform_indices = @transform_5, window_bounds = array<i64: 1, 128>}, {pipeline_mode = #tpu.pipeline_mode<synchronous>, transform_indices = @transform_6, window_bounds = array<i64: 256, 128>}, {pipeline_mode = #tpu.pipeline_mode<synchronous>, transform_indices = @transform_7, window_bounds = array<i64: 1, 128>}, {pipeline_mode = #tpu.pipeline_mode<synchronous>, transform_indices = @transform_8, window_bounds = array<i64: 128, 384>}, {pipeline_mode = #tpu.pipeline_mode<synchronous>, transform_indices = @transform_9, window_bounds = array<i64: 128, 384>}, {pipeline_mode = #tpu.pipeline_mode<synchronous>, transform_indices = @transform_10, window_bounds = array<i64: 1, 384>}, {pipeline_mode = #tpu.pipeline_mode<synchronous>, transform_indices = @transform_11, window_bounds = array<i64: 1, 384>}, {transform_indices = @transform_12, window_bounds = array<i64: 128, 128>}, {transform_indices = @transform_13, window_bounds = array<i64: 1, 128>}, {pipeline_mode = #tpu.pipeline_mode<synchronous>, transform_indices = @transform_14, window_bounds = array<i64: 8, 128>}, {pipeline_mode = #tpu.pipeline_mode<synchronous>, transform_indices = @transform_15, window_bounds = array<i64: 8, 128>}, {pipeline_mode = #tpu.pipeline_mode<synchronous>, transform_indices = @transform_16, window_bounds = array<i64: 8, 1, 128>}]} {
    %c0_i32 = arith.constant 0 : i32
    %0 = arith.cmpi eq, %arg0, %c0_i32 : i32
    %1 = arith.extui %0 : i1 to i32
    %c0_i32_0 = arith.constant 0 : i32
    %2 = arith.cmpi ne, %1, %c0_i32_0 : i32
    scf.if %2 {
      %c0_19 = arith.constant 0 : index
      %32 = memref.load %arg1[%c0_19] : memref<8xi32, #tpu.memory_space<smem>>
      %c1 = arith.constant 1 : index
      %33 = memref.load %arg1[%c1] : memref<8xi32, #tpu.memory_space<smem>>
      %c2 = arith.constant 2 : index
      %34 = memref.load %arg1[%c2] : memref<8xi32, #tpu.memory_space<smem>>
      %c3 = arith.constant 3 : index
      %35 = memref.load %arg1[%c3] : memref<8xi32, #tpu.memory_space<smem>>
      %c4 = arith.constant 4 : index
      %36 = memref.load %arg1[%c4] : memref<8xi32, #tpu.memory_space<smem>>
      %c5 = arith.constant 5 : index
      %37 = memref.load %arg1[%c5] : memref<8xi32, #tpu.memory_space<smem>>
      %c6 = arith.constant 6 : index
      %38 = memref.load %arg1[%c6] : memref<8xi32, #tpu.memory_space<smem>>
      %c7 = arith.constant 7 : index
      %39 = memref.load %arg1[%c7] : memref<8xi32, #tpu.memory_space<smem>>
      %c0_i32_20 = arith.constant 0 : i32
      %c0_i32_21 = arith.constant 0 : i32
      %40 = tpu.memref_slice %arg2[%32, %c0_i32_21] : memref<64x128xf32, #tpu.memory_space<any>> -> memref<1x128xf32, #tpu.memory_space<any>>
      %c0_i32_22 = arith.constant 0 : i32
      %c0_i32_23 = arith.constant 0 : i32
      %41 = tpu.memref_slice %arg19[%c0_i32_22, %c0_i32_23] : memref<8x128xf32, #tpu.memory_space<vmem>> -> memref<1x128xf32, #tpu.memory_space<vmem>>
      %42 = tpu.memref_slice %arg23[%c0_i32_20] : memref<8x!tpu.dma_semaphore, #tpu.memory_space<semaphore_mem>> -> memref<1x!tpu.dma_semaphore, #tpu.memory_space<semaphore_mem>>
      %43 = tpu.memref_squeeze %42 : memref<1x!tpu.dma_semaphore, #tpu.memory_space<semaphore_mem>> -> memref<!tpu.dma_semaphore, #tpu.memory_space<semaphore_mem>>
      tpu.enqueue_dma source(%40 : memref<1x128xf32, #tpu.memory_space<any>>) target(%41 : memref<1x128xf32, #tpu.memory_space<vmem>>) target_semaphore(%43 : memref<!tpu.dma_semaphore, #tpu.memory_space<semaphore_mem>>)
      %c1_i32 = arith.constant 1 : i32
      %c0_i32_24 = arith.constant 0 : i32
      %44 = tpu.memref_slice %arg2[%33, %c0_i32_24] : memref<64x128xf32, #tpu.memory_space<any>> -> memref<1x128xf32, #tpu.memory_space<any>>
      %c1_i32_25 = arith.constant 1 : i32
      %c0_i32_26 = arith.constant 0 : i32
      %45 = tpu.memref_slice %arg19[%c1_i32_25, %c0_i32_26] : memref<8x128xf32, #tpu.memory_space<vmem>> -> memref<1x128xf32, #tpu.memory_space<vmem>>
      %46 = tpu.memref_slice %arg23[%c1_i32] : memref<8x!tpu.dma_semaphore, #tpu.memory_space<semaphore_mem>> -> memref<1x!tpu.dma_semaphore, #tpu.memory_space<semaphore_mem>>
      %47 = tpu.memref_squeeze %46 : memref<1x!tpu.dma_semaphore, #tpu.memory_space<semaphore_mem>> -> memref<!tpu.dma_semaphore, #tpu.memory_space<semaphore_mem>>
      tpu.enqueue_dma source(%44 : memref<1x128xf32, #tpu.memory_space<any>>) target(%45 : memref<1x128xf32, #tpu.memory_space<vmem>>) target_semaphore(%47 : memref<!tpu.dma_semaphore, #tpu.memory_space<semaphore_mem>>)
      %c2_i32 = arith.constant 2 : i32
      %c0_i32_27 = arith.constant 0 : i32
      %48 = tpu.memref_slice %arg2[%34, %c0_i32_27] : memref<64x128xf32, #tpu.memory_space<any>> -> memref<1x128xf32, #tpu.memory_space<any>>
      %c2_i32_28 = arith.constant 2 : i32
      %c0_i32_29 = arith.constant 0 : i32
      %49 = tpu.memref_slice %arg19[%c2_i32_28, %c0_i32_29] : memref<8x128xf32, #tpu.memory_space<vmem>> -> memref<1x128xf32, #tpu.memory_space<vmem>>
      %50 = tpu.memref_slice %arg23[%c2_i32] : memref<8x!tpu.dma_semaphore, #tpu.memory_space<semaphore_mem>> -> memref<1x!tpu.dma_semaphore, #tpu.memory_space<semaphore_mem>>
      %51 = tpu.memref_squeeze %50 : memref<1x!tpu.dma_semaphore, #tpu.memory_space<semaphore_mem>> -> memref<!tpu.dma_semaphore, #tpu.memory_space<semaphore_mem>>
      tpu.enqueue_dma source(%48 : memref<1x128xf32, #tpu.memory_space<any>>) target(%49 : memref<1x128xf32, #tpu.memory_space<vmem>>) target_semaphore(%51 : memref<!tpu.dma_semaphore, #tpu.memory_space<semaphore_mem>>)
      %c3_i32 = arith.constant 3 : i32
      %c0_i32_30 = arith.constant 0 : i32
      %52 = tpu.memref_slice %arg2[%35, %c0_i32_30] : memref<64x128xf32, #tpu.memory_space<any>> -> memref<1x128xf32, #tpu.memory_space<any>>
      %c3_i32_31 = arith.constant 3 : i32
      %c0_i32_32 = arith.constant 0 : i32
      %53 = tpu.memref_slice %arg19[%c3_i32_31, %c0_i32_32] : memref<8x128xf32, #tpu.memory_space<vmem>> -> memref<1x128xf32, #tpu.memory_space<vmem>>
      %54 = tpu.memref_slice %arg23[%c3_i32] : memref<8x!tpu.dma_semaphore, #tpu.memory_space<semaphore_mem>> -> memref<1x!tpu.dma_semaphore, #tpu.memory_space<semaphore_mem>>
      %55 = tpu.memref_squeeze %54 : memref<1x!tpu.dma_semaphore, #tpu.memory_space<semaphore_mem>> -> memref<!tpu.dma_semaphore, #tpu.memory_space<semaphore_mem>>
      tpu.enqueue_dma source(%52 : memref<1x128xf32, #tpu.memory_space<any>>) target(%53 : memref<1x128xf32, #tpu.memory_space<vmem>>) target_semaphore(%55 : memref<!tpu.dma_semaphore, #tpu.memory_space<semaphore_mem>>)
      %c4_i32 = arith.constant 4 : i32
      %c0_i32_33 = arith.constant 0 : i32
      %56 = tpu.memref_slice %arg2[%36, %c0_i32_33] : memref<64x128xf32, #tpu.memory_space<any>> -> memref<1x128xf32, #tpu.memory_space<any>>
      %c4_i32_34 = arith.constant 4 : i32
      %c0_i32_35 = arith.constant 0 : i32
      %57 = tpu.memref_slice %arg19[%c4_i32_34, %c0_i32_35] : memref<8x128xf32, #tpu.memory_space<vmem>> -> memref<1x128xf32, #tpu.memory_space<vmem>>
      %58 = tpu.memref_slice %arg23[%c4_i32] : memref<8x!tpu.dma_semaphore, #tpu.memory_space<semaphore_mem>> -> memref<1x!tpu.dma_semaphore, #tpu.memory_space<semaphore_mem>>
      %59 = tpu.memref_squeeze %58 : memref<1x!tpu.dma_semaphore, #tpu.memory_space<semaphore_mem>> -> memref<!tpu.dma_semaphore, #tpu.memory_space<semaphore_mem>>
      tpu.enqueue_dma source(%56 : memref<1x128xf32, #tpu.memory_space<any>>) target(%57 : memref<1x128xf32, #tpu.memory_space<vmem>>) target_semaphore(%59 : memref<!tpu.dma_semaphore, #tpu.memory_space<semaphore_mem>>)
      %c5_i32 = arith.constant 5 : i32
      %c0_i32_36 = arith.constant 0 : i32
      %60 = tpu.memref_slice %arg2[%37, %c0_i32_36] : memref<64x128xf32, #tpu.memory_space<any>> -> memref<1x128xf32, #tpu.memory_space<any>>
      %c5_i32_37 = arith.constant 5 : i32
      %c0_i32_38 = arith.constant 0 : i32
      %61 = tpu.memref_slice %arg19[%c5_i32_37, %c0_i32_38] : memref<8x128xf32, #tpu.memory_space<vmem>> -> memref<1x128xf32, #tpu.memory_space<vmem>>
      %62 = tpu.memref_slice %arg23[%c5_i32] : memref<8x!tpu.dma_semaphore, #tpu.memory_space<semaphore_mem>> -> memref<1x!tpu.dma_semaphore, #tpu.memory_space<semaphore_mem>>
      %63 = tpu.memref_squeeze %62 : memref<1x!tpu.dma_semaphore, #tpu.memory_space<semaphore_mem>> -> memref<!tpu.dma_semaphore, #tpu.memory_space<semaphore_mem>>
      tpu.enqueue_dma source(%60 : memref<1x128xf32, #tpu.memory_space<any>>) target(%61 : memref<1x128xf32, #tpu.memory_space<vmem>>) target_semaphore(%63 : memref<!tpu.dma_semaphore, #tpu.memory_space<semaphore_mem>>)
      %c6_i32 = arith.constant 6 : i32
      %c0_i32_39 = arith.constant 0 : i32
      %64 = tpu.memref_slice %arg2[%38, %c0_i32_39] : memref<64x128xf32, #tpu.memory_space<any>> -> memref<1x128xf32, #tpu.memory_space<any>>
      %c6_i32_40 = arith.constant 6 : i32
      %c0_i32_41 = arith.constant 0 : i32
      %65 = tpu.memref_slice %arg19[%c6_i32_40, %c0_i32_41] : memref<8x128xf32, #tpu.memory_space<vmem>> -> memref<1x128xf32, #tpu.memory_space<vmem>>
      %66 = tpu.memref_slice %arg23[%c6_i32] : memref<8x!tpu.dma_semaphore, #tpu.memory_space<semaphore_mem>> -> memref<1x!tpu.dma_semaphore, #tpu.memory_space<semaphore_mem>>
      %67 = tpu.memref_squeeze %66 : memref<1x!tpu.dma_semaphore, #tpu.memory_space<semaphore_mem>> -> memref<!tpu.dma_semaphore, #tpu.memory_space<semaphore_mem>>
      tpu.enqueue_dma source(%64 : memref<1x128xf32, #tpu.memory_space<any>>) target(%65 : memref<1x128xf32, #tpu.memory_space<vmem>>) target_semaphore(%67 : memref<!tpu.dma_semaphore, #tpu.memory_space<semaphore_mem>>)
      %c7_i32 = arith.constant 7 : i32
      %c0_i32_42 = arith.constant 0 : i32
      %68 = tpu.memref_slice %arg2[%39, %c0_i32_42] : memref<64x128xf32, #tpu.memory_space<any>> -> memref<1x128xf32, #tpu.memory_space<any>>
      %c7_i32_43 = arith.constant 7 : i32
      %c0_i32_44 = arith.constant 0 : i32
      %69 = tpu.memref_slice %arg19[%c7_i32_43, %c0_i32_44] : memref<8x128xf32, #tpu.memory_space<vmem>> -> memref<1x128xf32, #tpu.memory_space<vmem>>
      %70 = tpu.memref_slice %arg23[%c7_i32] : memref<8x!tpu.dma_semaphore, #tpu.memory_space<semaphore_mem>> -> memref<1x!tpu.dma_semaphore, #tpu.memory_space<semaphore_mem>>
      %71 = tpu.memref_squeeze %70 : memref<1x!tpu.dma_semaphore, #tpu.memory_space<semaphore_mem>> -> memref<!tpu.dma_semaphore, #tpu.memory_space<semaphore_mem>>
      tpu.enqueue_dma source(%68 : memref<1x128xf32, #tpu.memory_space<any>>) target(%69 : memref<1x128xf32, #tpu.memory_space<vmem>>) target_semaphore(%71 : memref<!tpu.dma_semaphore, #tpu.memory_space<semaphore_mem>>)
      %c0_i32_45 = arith.constant 0 : i32
      %c0_i32_46 = arith.constant 0 : i32
      %72 = tpu.memref_slice %arg2[%32, %c0_i32_46] : memref<64x128xf32, #tpu.memory_space<any>> -> memref<1x128xf32, #tpu.memory_space<any>>
      %c0_i32_47 = arith.constant 0 : i32
      %c0_i32_48 = arith.constant 0 : i32
      %73 = tpu.memref_slice %arg19[%c0_i32_47, %c0_i32_48] : memref<8x128xf32, #tpu.memory_space<vmem>> -> memref<1x128xf32, #tpu.memory_space<vmem>>
      %74 = tpu.memref_slice %arg23[%c0_i32_45] : memref<8x!tpu.dma_semaphore, #tpu.memory_space<semaphore_mem>> -> memref<1x!tpu.dma_semaphore, #tpu.memory_space<semaphore_mem>>
      %75 = tpu.memref_squeeze %74 : memref<1x!tpu.dma_semaphore, #tpu.memory_space<semaphore_mem>> -> memref<!tpu.dma_semaphore, #tpu.memory_space<semaphore_mem>>
      tpu.wait_dma2 semaphore(%75 : memref<!tpu.dma_semaphore, #tpu.memory_space<semaphore_mem>>) src(%72 : memref<1x128xf32, #tpu.memory_space<any>>) dst(%73 : memref<1x128xf32, #tpu.memory_space<vmem>>)
      %c1_i32_49 = arith.constant 1 : i32
      %c0_i32_50 = arith.constant 0 : i32
      %76 = tpu.memref_slice %arg2[%33, %c0_i32_50] : memref<64x128xf32, #tpu.memory_space<any>> -> memref<1x128xf32, #tpu.memory_space<any>>
      %c1_i32_51 = arith.constant 1 : i32
      %c0_i32_52 = arith.constant 0 : i32
      %77 = tpu.memref_slice %arg19[%c1_i32_51, %c0_i32_52] : memref<8x128xf32, #tpu.memory_space<vmem>> -> memref<1x128xf32, #tpu.memory_space<vmem>>
      %78 = tpu.memref_slice %arg23[%c1_i32_49] : memref<8x!tpu.dma_semaphore, #tpu.memory_space<semaphore_mem>> -> memref<1x!tpu.dma_semaphore, #tpu.memory_space<semaphore_mem>>
      %79 = tpu.memref_squeeze %78 : memref<1x!tpu.dma_semaphore, #tpu.memory_space<semaphore_mem>> -> memref<!tpu.dma_semaphore, #tpu.memory_space<semaphore_mem>>
      tpu.wait_dma2 semaphore(%79 : memref<!tpu.dma_semaphore, #tpu.memory_space<semaphore_mem>>) src(%76 : memref<1x128xf32, #tpu.memory_space<any>>) dst(%77 : memref<1x128xf32, #tpu.memory_space<vmem>>)
      %c2_i32_53 = arith.constant 2 : i32
      %c0_i32_54 = arith.constant 0 : i32
      %80 = tpu.memref_slice %arg2[%34, %c0_i32_54] : memref<64x128xf32, #tpu.memory_space<any>> -> memref<1x128xf32, #tpu.memory_space<any>>
      %c2_i32_55 = arith.constant 2 : i32
      %c0_i32_56 = arith.constant 0 : i32
      %81 = tpu.memref_slice %arg19[%c2_i32_55, %c0_i32_56] : memref<8x128xf32, #tpu.memory_space<vmem>> -> memref<1x128xf32, #tpu.memory_space<vmem>>
      %82 = tpu.memref_slice %arg23[%c2_i32_53] : memref<8x!tpu.dma_semaphore, #tpu.memory_space<semaphore_mem>> -> memref<1x!tpu.dma_semaphore, #tpu.memory_space<semaphore_mem>>
      %83 = tpu.memref_squeeze %82 : memref<1x!tpu.dma_semaphore, #tpu.memory_space<semaphore_mem>> -> memref<!tpu.dma_semaphore, #tpu.memory_space<semaphore_mem>>
      tpu.wait_dma2 semaphore(%83 : memref<!tpu.dma_semaphore, #tpu.memory_space<semaphore_mem>>) src(%80 : memref<1x128xf32, #tpu.memory_space<any>>) dst(%81 : memref<1x128xf32, #tpu.memory_space<vmem>>)
      %c3_i32_57 = arith.constant 3 : i32
      %c0_i32_58 = arith.constant 0 : i32
      %84 = tpu.memref_slice %arg2[%35, %c0_i32_58] : memref<64x128xf32, #tpu.memory_space<any>> -> memref<1x128xf32, #tpu.memory_space<any>>
      %c3_i32_59 = arith.constant 3 : i32
      %c0_i32_60 = arith.constant 0 : i32
      %85 = tpu.memref_slice %arg19[%c3_i32_59, %c0_i32_60] : memref<8x128xf32, #tpu.memory_space<vmem>> -> memref<1x128xf32, #tpu.memory_space<vmem>>
      %86 = tpu.memref_slice %arg23[%c3_i32_57] : memref<8x!tpu.dma_semaphore, #tpu.memory_space<semaphore_mem>> -> memref<1x!tpu.dma_semaphore, #tpu.memory_space<semaphore_mem>>
      %87 = tpu.memref_squeeze %86 : memref<1x!tpu.dma_semaphore, #tpu.memory_space<semaphore_mem>> -> memref<!tpu.dma_semaphore, #tpu.memory_space<semaphore_mem>>
      tpu.wait_dma2 semaphore(%87 : memref<!tpu.dma_semaphore, #tpu.memory_space<semaphore_mem>>) src(%84 : memref<1x128xf32, #tpu.memory_space<any>>) dst(%85 : memref<1x128xf32, #tpu.memory_space<vmem>>)
      %c4_i32_61 = arith.constant 4 : i32
      %c0_i32_62 = arith.constant 0 : i32
      %88 = tpu.memref_slice %arg2[%36, %c0_i32_62] : memref<64x128xf32, #tpu.memory_space<any>> -> memref<1x128xf32, #tpu.memory_space<any>>
      %c4_i32_63 = arith.constant 4 : i32
      %c0_i32_64 = arith.constant 0 : i32
      %89 = tpu.memref_slice %arg19[%c4_i32_63, %c0_i32_64] : memref<8x128xf32, #tpu.memory_space<vmem>> -> memref<1x128xf32, #tpu.memory_space<vmem>>
      %90 = tpu.memref_slice %arg23[%c4_i32_61] : memref<8x!tpu.dma_semaphore, #tpu.memory_space<semaphore_mem>> -> memref<1x!tpu.dma_semaphore, #tpu.memory_space<semaphore_mem>>
      %91 = tpu.memref_squeeze %90 : memref<1x!tpu.dma_semaphore, #tpu.memory_space<semaphore_mem>> -> memref<!tpu.dma_semaphore, #tpu.memory_space<semaphore_mem>>
      tpu.wait_dma2 semaphore(%91 : memref<!tpu.dma_semaphore, #tpu.memory_space<semaphore_mem>>) src(%88 : memref<1x128xf32, #tpu.memory_space<any>>) dst(%89 : memref<1x128xf32, #tpu.memory_space<vmem>>)
      %c5_i32_65 = arith.constant 5 : i32
      %c0_i32_66 = arith.constant 0 : i32
      %92 = tpu.memref_slice %arg2[%37, %c0_i32_66] : memref<64x128xf32, #tpu.memory_space<any>> -> memref<1x128xf32, #tpu.memory_space<any>>
      %c5_i32_67 = arith.constant 5 : i32
      %c0_i32_68 = arith.constant 0 : i32
      %93 = tpu.memref_slice %arg19[%c5_i32_67, %c0_i32_68] : memref<8x128xf32, #tpu.memory_space<vmem>> -> memref<1x128xf32, #tpu.memory_space<vmem>>
      %94 = tpu.memref_slice %arg23[%c5_i32_65] : memref<8x!tpu.dma_semaphore, #tpu.memory_space<semaphore_mem>> -> memref<1x!tpu.dma_semaphore, #tpu.memory_space<semaphore_mem>>
      %95 = tpu.memref_squeeze %94 : memref<1x!tpu.dma_semaphore, #tpu.memory_space<semaphore_mem>> -> memref<!tpu.dma_semaphore, #tpu.memory_space<semaphore_mem>>
      tpu.wait_dma2 semaphore(%95 : memref<!tpu.dma_semaphore, #tpu.memory_space<semaphore_mem>>) src(%92 : memref<1x128xf32, #tpu.memory_space<any>>) dst(%93 : memref<1x128xf32, #tpu.memory_space<vmem>>)
      %c6_i32_69 = arith.constant 6 : i32
      %c0_i32_70 = arith.constant 0 : i32
      %96 = tpu.memref_slice %arg2[%38, %c0_i32_70] : memref<64x128xf32, #tpu.memory_space<any>> -> memref<1x128xf32, #tpu.memory_space<any>>
      %c6_i32_71 = arith.constant 6 : i32
      %c0_i32_72 = arith.constant 0 : i32
      %97 = tpu.memref_slice %arg19[%c6_i32_71, %c0_i32_72] : memref<8x128xf32, #tpu.memory_space<vmem>> -> memref<1x128xf32, #tpu.memory_space<vmem>>
      %98 = tpu.memref_slice %arg23[%c6_i32_69] : memref<8x!tpu.dma_semaphore, #tpu.memory_space<semaphore_mem>> -> memref<1x!tpu.dma_semaphore, #tpu.memory_space<semaphore_mem>>
      %99 = tpu.memref_squeeze %98 : memref<1x!tpu.dma_semaphore, #tpu.memory_space<semaphore_mem>> -> memref<!tpu.dma_semaphore, #tpu.memory_space<semaphore_mem>>
      tpu.wait_dma2 semaphore(%99 : memref<!tpu.dma_semaphore, #tpu.memory_space<semaphore_mem>>) src(%96 : memref<1x128xf32, #tpu.memory_space<any>>) dst(%97 : memref<1x128xf32, #tpu.memory_space<vmem>>)
      %c7_i32_73 = arith.constant 7 : i32
      %c0_i32_74 = arith.constant 0 : i32
      %100 = tpu.memref_slice %arg2[%39, %c0_i32_74] : memref<64x128xf32, #tpu.memory_space<any>> -> memref<1x128xf32, #tpu.memory_space<any>>
      %c7_i32_75 = arith.constant 7 : i32
      %c0_i32_76 = arith.constant 0 : i32
      %101 = tpu.memref_slice %arg19[%c7_i32_75, %c0_i32_76] : memref<8x128xf32, #tpu.memory_space<vmem>> -> memref<1x128xf32, #tpu.memory_space<vmem>>
      %102 = tpu.memref_slice %arg23[%c7_i32_73] : memref<8x!tpu.dma_semaphore, #tpu.memory_space<semaphore_mem>> -> memref<1x!tpu.dma_semaphore, #tpu.memory_space<semaphore_mem>>
      %103 = tpu.memref_squeeze %102 : memref<1x!tpu.dma_semaphore, #tpu.memory_space<semaphore_mem>> -> memref<!tpu.dma_semaphore, #tpu.memory_space<semaphore_mem>>
      tpu.wait_dma2 semaphore(%103 : memref<!tpu.dma_semaphore, #tpu.memory_space<semaphore_mem>>) src(%100 : memref<1x128xf32, #tpu.memory_space<any>>) dst(%101 : memref<1x128xf32, #tpu.memory_space<vmem>>)
      %c0_77 = arith.constant 0 : index
      %c0_78 = arith.constant 0 : index
      %104 = vector.load %arg3[%c0_77, %c0_78] : memref<8x128xf32, #tpu.memory_space<vmem>>, vector<8x128xf32>
      %c0_79 = arith.constant 0 : index
      %c0_80 = arith.constant 0 : index
      %c0_81 = arith.constant 0 : index
      %105 = vector.load %arg4[%c0_79, %c0_80, %c0_81] : memref<8x128x128xf32, #tpu.memory_space<vmem>>, vector<8x128x128xf32>
      %c0_82 = arith.constant 0 : index
      %c0_83 = arith.constant 0 : index
      %106 = vector.load %arg5[%c0_82, %c0_83] : memref<1x128xf32, #tpu.memory_space<vmem>>, vector<1x128xf32>
      %107 = vector.shape_cast %106 : vector<1x128xf32> to vector<1x1x128xf32>
      %108 = vector.shape_cast %107 : vector<1x1x128xf32> to vector<1x1x128xf32>
      %109 = vector.broadcast %108 : vector<1x1x128xf32> to vector<8x1x128xf32>
      "tpu.trace_start"() <{level = 10 : i32, message = "bqh,blh->bql"}> : () -> ()
      %cst_84 = arith.constant dense<0.000000e+00> : vector<8x1x128xf32>
      %110 = tpu.matmul %109, %105, %cst_84 {dimension_numbers = #tpu.dot_dimension_numbers<[2], [2], [1], [1], [0, 0, 0, 1, 1, 1], [0], [0]>} : vector<8x1x128xf32>, vector<8x128x128xf32>, vector<8x1x128xf32> -> vector<8x1x128xf32>
      "tpu.trace_stop"() : () -> ()
      %c0_85 = arith.constant 0 : index
      %c0_86 = arith.constant 0 : index
      %111 = vector.load %arg6[%c0_85, %c0_86] : memref<1x128xf32, #tpu.memory_space<vmem>>, vector<1x128xf32>
      %112 = vector.broadcast %111 : vector<1x128xf32> to vector<8x128xf32>
      %113 = arith.mulf %104, %112 : vector<8x128xf32>
      %cst_87 = arith.constant dense<0.000000e+00> : vector<8xf32>
      %114 = vector.multi_reduction <add>, %113, %cst_87 [1] : vector<8x128xf32> to vector<8xf32>
      %115 = vector.shape_cast %114 : vector<8xf32> to vector<8x1xf32>
      %116 = vector.shape_cast %115 : vector<8x1xf32> to vector<8x1x1xf32>
      %117 = vector.broadcast %116 : vector<8x1x1xf32> to vector<8x1x128xf32>
      %118 = arith.addf %110, %117 : vector<8x1x128xf32>
      %c0_88 = arith.constant 0 : index
      %c0_89 = arith.constant 0 : index
      %119 = vector.load %arg7[%c0_88, %c0_89] : memref<1x128xf32, #tpu.memory_space<vmem>>, vector<1x128xf32>
      %120 = vector.shape_cast %119 : vector<1x128xf32> to vector<1x1x128xf32>
      %121 = vector.broadcast %120 : vector<1x1x128xf32> to vector<8x1x128xf32>
      %122 = arith.addf %118, %121 : vector<8x1x128xf32>
      %cst_90 = arith.constant dense<0xFF800000> : vector<8x1xf32>
      %123 = vector.multi_reduction <maximumf>, %122, %cst_90 [2] : vector<8x1x128xf32> to vector<8x1xf32>
      %124 = vector.shape_cast %123 : vector<8x1xf32> to vector<8x1x1xf32>
      %125 = vector.broadcast %124 : vector<8x1x1xf32> to vector<8x1x128xf32>
      %126 = arith.subf %122, %125 : vector<8x1x128xf32>
      %127 = math.exp %126 : vector<8x1x128xf32>
      %cst_91 = arith.constant dense<0.000000e+00> : vector<8x1xf32>
      %128 = vector.multi_reduction <add>, %127, %cst_91 [2] : vector<8x1x128xf32> to vector<8x1xf32>
      %129 = vector.shape_cast %128 : vector<8x1xf32> to vector<8x1x1xf32>
      %130 = tpu.reciprocal %129 : vector<8x1x1xf32> -> vector<8x1x1xf32>
      %131 = vector.broadcast %130 : vector<8x1x1xf32> to vector<8x1x128xf32>
      %132 = arith.mulf %127, %131 : vector<8x1x128xf32>
      %c0_92 = arith.constant 0 : index
      %c0_93 = arith.constant 0 : index
      %c0_94 = arith.constant 0 : index
      %133 = vector.load %arg18[%c0_92, %c0_93, %c0_94] : memref<8x1x128xf32, #tpu.memory_space<vmem>>, vector<8x1x128xf32>
      tpu.vector_store %arg18[%c0_92, %c0_93, %c0_94], %132 {strides = array<i32>} : memref<8x1x128xf32, #tpu.memory_space<vmem>>, vector<8x1x128xf32>,
      "tpu.trace_start"() <{level = 10 : i32, message = "bql,blh->bqh"}> : () -> ()
      %cst_95 = arith.constant dense<0.000000e+00> : vector<8x1x128xf32>
      %134 = tpu.matmul %132, %105, %cst_95 {dimension_numbers = #tpu.dot_dimension_numbers<[2], [1], [1], [2], [0, 0, 0, 1, 1, 2], [0], [0]>} : vector<8x1x128xf32>, vector<8x128x128xf32>, vector<8x1x128xf32> -> vector<8x1x128xf32>
      "tpu.trace_stop"() : () -> ()
      %cst_96 = arith.constant dense<0.000000e+00> : vector<8x128xf32>
      %135 = vector.multi_reduction <add>, %134, %cst_96 [1] : vector<8x1x128xf32> to vector<8x128xf32>
      %c0_97 = arith.constant 0 : index
      %c0_98 = arith.constant 0 : index
      %136 = vector.load %arg19[%c0_97, %c0_98] : memref<8x128xf32, #tpu.memory_space<vmem>>, vector<8x128xf32>
      %137 = tpu.concatenate %136, %135 in 1 : vector<8x128xf32>, vector<8x128xf32> -> vector<8x256xf32>
      %c0_99 = arith.constant 0 : index
      %c0_100 = arith.constant 0 : index
      %138 = vector.load %arg8[%c0_99, %c0_100] : memref<256x128xf32, #tpu.memory_space<vmem>>, vector<256x128xf32>
      %cst_101 = arith.constant dense<0.000000e+00> : vector<8x128xf32>
      %139 = tpu.matmul %137, %138, %cst_101 {dimension_numbers = #tpu.dot_dimension_numbers<[1], [0], [0], [1], [0, 0, 1, 1], [], []>} : vector<8x256xf32>, vector<256x128xf32>, vector<8x128xf32> -> vector<8x128xf32>
      %c0_102 = arith.constant 0 : index
      %c0_103 = arith.constant 0 : index
      %140 = vector.load %arg9[%c0_102, %c0_103] : memref<1x128xf32, #tpu.memory_space<vmem>>, vector<1x128xf32>
      %141 = vector.broadcast %140 : vector<1x128xf32> to vector<8x128xf32>
      %142 = arith.addf %139, %141 : vector<8x128xf32>
      %cst_104 = arith.constant 0.000000e+00 : f32
      %143 = vector.broadcast %cst_104 : f32 to vector<8x128xf32>
      %144 = arith.maximumf %142, %143 : vector<8x128xf32>
      %c0_105 = arith.constant 0 : index
      %c0_106 = arith.constant 0 : index
      %145 = vector.load %arg10[%c0_105, %c0_106] : memref<128x384xf32, #tpu.memory_space<vmem>>, vector<128x384xf32>
      %cst_107 = arith.constant dense<0.000000e+00> : vector<8x384xf32>
      %146 = tpu.matmul %144, %145, %cst_107 {dimension_numbers = #tpu.dot_dimension_numbers<[1], [0], [0], [1], [0, 0, 1, 1], [], []>} : vector<8x128xf32>, vector<128x384xf32>, vector<8x384xf32> -> vector<8x384xf32>
      %c0_108 = arith.constant 0 : index
      %c0_109 = arith.constant 0 : index
      %147 = vector.load %arg12[%c0_108, %c0_109] : memref<1x384xf32, #tpu.memory_space<vmem>>, vector<1x384xf32>
      %148 = vector.broadcast %147 : vector<1x384xf32> to vector<8x384xf32>
      %149 = arith.addf %146, %148 : vector<8x384xf32>
      %c0_110 = arith.constant 0 : index
      %c0_111 = arith.constant 0 : index
      %150 = vector.load %arg11[%c0_110, %c0_111] : memref<128x384xf32, #tpu.memory_space<vmem>>, vector<128x384xf32>
      %cst_112 = arith.constant dense<0.000000e+00> : vector<8x384xf32>
      %151 = tpu.matmul %104, %150, %cst_112 {dimension_numbers = #tpu.dot_dimension_numbers<[1], [0], [0], [1], [0, 0, 1, 1], [], []>} : vector<8x128xf32>, vector<128x384xf32>, vector<8x384xf32> -> vector<8x384xf32>
      %c0_113 = arith.constant 0 : index
      %c0_114 = arith.constant 0 : index
      %152 = vector.load %arg13[%c0_113, %c0_114] : memref<1x384xf32, #tpu.memory_space<vmem>>, vector<1x384xf32>
      %153 = vector.broadcast %152 : vector<1x384xf32> to vector<8x384xf32>
      %154 = arith.addf %151, %153 : vector<8x384xf32>
      %155 = vector.extract_strided_slice %149 {offsets = [0, 0], sizes = [8, 128], strides = [1, 1]} : vector<8x384xf32> to vector<8x128xf32>
      %156 = vector.extract_strided_slice %154 {offsets = [0, 0], sizes = [8, 128], strides = [1, 1]} : vector<8x384xf32> to vector<8x128xf32>
      %157 = arith.addf %155, %156 : vector<8x128xf32>
      %158 = arith.negf %157 : vector<8x128xf32>
      %159 = math.exp %158 : vector<8x128xf32>
      %cst_115 = arith.constant 1.000000e+00 : f32
      %160 = vector.broadcast %cst_115 : f32 to vector<8x128xf32>
      %161 = arith.addf %160, %159 : vector<8x128xf32>
      %162 = arith.divf %160, %161 : vector<8x128xf32>
      %163 = vector.extract_strided_slice %149 {offsets = [0, 128], sizes = [8, 128], strides = [1, 1]} : vector<8x384xf32> to vector<8x128xf32>
      %164 = vector.extract_strided_slice %154 {offsets = [0, 128], sizes = [8, 128], strides = [1, 1]} : vector<8x384xf32> to vector<8x128xf32>
      %165 = arith.addf %163, %164 : vector<8x128xf32>
      %166 = arith.negf %165 : vector<8x128xf32>
      %167 = math.exp %166 : vector<8x128xf32>
      %cst_116 = arith.constant 1.000000e+00 : f32
      %168 = vector.broadcast %cst_116 : f32 to vector<8x128xf32>
      %169 = arith.addf %168, %167 : vector<8x128xf32>
      %170 = arith.divf %168, %169 : vector<8x128xf32>
      %171 = vector.extract_strided_slice %149 {offsets = [0, 256], sizes = [8, 128], strides = [1, 1]} : vector<8x384xf32> to vector<8x128xf32>
      %172 = vector.extract_strided_slice %154 {offsets = [0, 256], sizes = [8, 128], strides = [1, 1]} : vector<8x384xf32> to vector<8x128xf32>
      %173 = arith.mulf %162, %172 : vector<8x128xf32>
      %174 = arith.addf %171, %173 : vector<8x128xf32>
      %175 = math.tanh %174 : vector<8x128xf32>
      %cst_117 = arith.constant 1.000000e+00 : f32
      %176 = vector.broadcast %cst_117 : f32 to vector<8x128xf32>
      %177 = arith.subf %176, %170 : vector<8x128xf32>
      %178 = arith.mulf %177, %175 : vector<8x128xf32>
      %179 = arith.mulf %170, %104 : vector<8x128xf32>
      %180 = arith.addf %178, %179 : vector<8x128xf32>
      %c0_118 = arith.constant 0 : index
      %c0_119 = arith.constant 0 : index
      %181 = vector.load %arg20[%c0_118, %c0_119] : memref<8x128xf32, #tpu.memory_space<vmem>>, vector<8x128xf32>
      tpu.vector_store %arg20[%c0_118, %c0_119], %180 {strides = array<i32>} : memref<8x128xf32, #tpu.memory_space<vmem>>, vector<8x128xf32>,
      %c0_120 = arith.constant 0 : index
      %c0_121 = arith.constant 0 : index
      %182 = vector.load %arg17[%c0_120, %c0_121] : memref<8x128xf32, #tpu.memory_space<vmem>>, vector<8x128xf32>
      tpu.vector_store %arg17[%c0_120, %c0_121], %180 {strides = array<i32>} : memref<8x128xf32, #tpu.memory_space<vmem>>, vector<8x128xf32>,
      %cst_122 = arith.constant -1.000000e+30 : f32
      %183 = vector.broadcast %cst_122 : f32 to vector<8x1xf32>
      %c0_123 = arith.constant 0 : index
      %c0_124 = arith.constant 0 : index
      %184 = vector.load %arg21[%c0_123, %c0_124] : memref<8x1xf32, #tpu.memory_space<vmem>>, vector<8x1xf32>
      tpu.vector_store %arg21[%c0_123, %c0_124], %183 {strides = array<i32>} : memref<8x1xf32, #tpu.memory_space<vmem>>, vector<8x1xf32>,
      %cst_125 = arith.constant 0.000000e+00 : f32
      %185 = vector.broadcast %cst_125 : f32 to vector<8x1xf32>
      %c0_126 = arith.constant 0 : index
      %c0_127 = arith.constant 0 : index
      %186 = vector.load %arg22[%c0_126, %c0_127] : memref<8x1xf32, #tpu.memory_space<vmem>>, vector<8x1xf32>
      tpu.vector_store %arg22[%c0_126, %c0_127], %185 {strides = array<i32>} : memref<8x1xf32, #tpu.memory_space<vmem>>, vector<8x1xf32>,
    } else {
    }
    %c0 = arith.constant 0 : index
    %c0_1 = arith.constant 0 : index
    %3 = vector.load %arg20[%c0, %c0_1] : memref<8x128xf32, #tpu.memory_space<vmem>>, vector<8x128xf32>
    %c0_2 = arith.constant 0 : index
    %c0_3 = arith.constant 0 : index
    %4 = vector.load %arg14[%c0_2, %c0_3] : memref<128x128xf32, #tpu.memory_space<vmem>>, vector<128x128xf32>
    %cst = arith.constant dense<0.000000e+00> : vector<8x128xf32>
    %5 = tpu.matmul %3, %4, %cst {dimension_numbers = #tpu.dot_dimension_numbers<[1], [0], [0], [1], [0, 0, 1, 1], [], []>} : vector<8x128xf32>, vector<128x128xf32>, vector<8x128xf32> -> vector<8x128xf32>
    %c0_4 = arith.constant 0 : index
    %c0_5 = arith.constant 0 : index
    %6 = vector.load %arg15[%c0_4, %c0_5] : memref<1x128xf32, #tpu.memory_space<vmem>>, vector<1x128xf32>
    %7 = vector.broadcast %6 : vector<1x128xf32> to vector<8x128xf32>
    %8 = arith.addf %5, %7 : vector<8x128xf32>
    %c0_6 = arith.constant 0 : index
    %c0_7 = arith.constant 0 : index
    %9 = vector.load %arg21[%c0_6, %c0_7] : memref<8x1xf32, #tpu.memory_space<vmem>>, vector<8x1xf32>
    %cst_8 = arith.constant dense<0xFF800000> : vector<8xf32>
    %10 = vector.multi_reduction <maximumf>, %8, %cst_8 [1] : vector<8x128xf32> to vector<8xf32>
    %11 = vector.shape_cast %10 : vector<8xf32> to vector<8x1xf32>
    %12 = arith.maximumf %9, %11 : vector<8x1xf32>
    %c0_9 = arith.constant 0 : index
    %c0_10 = arith.constant 0 : index
    %13 = vector.load %arg22[%c0_9, %c0_10] : memref<8x1xf32, #tpu.memory_space<vmem>>, vector<8x1xf32>
    %14 = arith.subf %9, %12 : vector<8x1xf32>
    %15 = math.exp %14 : vector<8x1xf32>
    %16 = arith.mulf %13, %15 : vector<8x1xf32>
    %17 = vector.broadcast %12 : vector<8x1xf32> to vector<8x128xf32>
    %18 = arith.subf %8, %17 : vector<8x128xf32>
    %19 = math.exp %18 : vector<8x128xf32>
    %cst_11 = arith.constant dense<0.000000e+00> : vector<8xf32>
    %20 = vector.multi_reduction <add>, %19, %cst_11 [1] : vector<8x128xf32> to vector<8xf32>
    %21 = vector.shape_cast %20 : vector<8xf32> to vector<8x1xf32>
    %22 = arith.addf %16, %21 : vector<8x1xf32>
    %c0_12 = arith.constant 0 : index
    %c0_13 = arith.constant 0 : index
    %23 = vector.load %arg22[%c0_12, %c0_13] : memref<8x1xf32, #tpu.memory_space<vmem>>, vector<8x1xf32>
    tpu.vector_store %arg22[%c0_12, %c0_13], %22 {strides = array<i32>} : memref<8x1xf32, #tpu.memory_space<vmem>>, vector<8x1xf32>,
    %c0_14 = arith.constant 0 : index
    %c0_15 = arith.constant 0 : index
    %24 = vector.load %arg21[%c0_14, %c0_15] : memref<8x1xf32, #tpu.memory_space<vmem>>, vector<8x1xf32>
    tpu.vector_store %arg21[%c0_14, %c0_15], %12 {strides = array<i32>} : memref<8x1xf32, #tpu.memory_space<vmem>>, vector<8x1xf32>,
    %c128_i32 = arith.constant 128 : i32
    %25 = arith.muli %arg0, %c128_i32 : i32
    %26 = tpu.assume_multiple %25, 128 : i32
    %c0_16 = arith.constant 0 : index
    %27 = arith.index_cast %26 : i32 to index
    %28 = vector.load %arg16[%c0_16, %27] : memref<8x128xf32, #tpu.memory_space<vmem>>, vector<8x128xf32>
    tpu.vector_store %arg16[%c0_16, %27], %8 {strides = array<i32>} : memref<8x128xf32, #tpu.memory_space<vmem>>, vector<8x128xf32>,
    %c0_i32_17 = arith.constant 0 : i32
    %29 = arith.cmpi eq, %arg0, %c0_i32_17 : i32
    %30 = arith.extui %29 : i1 to i32
    %c0_i32_18 = arith.constant 0 : i32
    %31 = arith.cmpi ne, %30, %c0_i32_18 : i32
    scf.if %31 {
      %c0_19 = arith.constant 0 : index
      %c0_20 = arith.constant 0 : index
      %32 = vector.load %arg16[%c0_19, %c0_20] : memref<8x128xf32, #tpu.memory_space<vmem>>, vector<8x128xf32>
      %c0_21 = arith.constant 0 : index
      %c0_22 = arith.constant 0 : index
      %33 = vector.load %arg21[%c0_21, %c0_22] : memref<8x1xf32, #tpu.memory_space<vmem>>, vector<8x1xf32>
      %c0_23 = arith.constant 0 : index
      %c0_24 = arith.constant 0 : index
      %34 = vector.load %arg22[%c0_23, %c0_24] : memref<8x1xf32, #tpu.memory_space<vmem>>, vector<8x1xf32>
      %35 = math.log %34 : vector<8x1xf32>
      %36 = arith.addf %33, %35 : vector<8x1xf32>
      %37 = vector.broadcast %36 : vector<8x1xf32> to vector<8x128xf32>
      %38 = arith.subf %32, %37 : vector<8x128xf32>
      %c0_25 = arith.constant 0 : index
      %c0_26 = arith.constant 0 : index
      %39 = vector.load %arg16[%c0_25, %c0_26] : memref<8x128xf32, #tpu.memory_space<vmem>>, vector<8x128xf32>
      tpu.vector_store %arg16[%c0_25, %c0_26], %38 {strides = array<i32>} : memref<8x128xf32, #tpu.memory_space<vmem>>, vector<8x128xf32>,
    } else {
    }
    return
  }
  func.func @transform_1(%arg0: i32, %arg1: memref<8xi32, #tpu.memory_space<smem>>) -> (i32, i32) {
    %c0_i32 = arith.constant 0 : i32
    %c0_i32_0 = arith.constant 0 : i32
    %c0_i32_1 = arith.constant 0 : i32
    return %c0_i32, %c0_i32_0 : i32, i32
  }
  func.func @transform_2(%arg0: i32, %arg1: memref<8xi32, #tpu.memory_space<smem>>) -> (i32, i32, i32) {
    %c0_i32 = arith.constant 0 : i32
    %c0_i32_0 = arith.constant 0 : i32
    %c0_i32_1 = arith.constant 0 : i32
    %c0_i32_2 = arith.constant 0 : i32
    return %c0_i32, %c0_i32_0, %c0_i32_1 : i32, i32, i32
  }
  func.func @transform_3(%arg0: i32, %arg1: memref<8xi32, #tpu.memory_space<smem>>) -> (i32, i32) {
    %c0_i32 = arith.constant 0 : i32
    %c0_i32_0 = arith.constant 0 : i32
    %c0_i32_1 = arith.constant 0 : i32
    return %c0_i32, %c0_i32_0 : i32, i32
  }
  func.func @transform_4(%arg0: i32, %arg1: memref<8xi32, #tpu.memory_space<smem>>) -> (i32, i32) {
    %c0_i32 = arith.constant 0 : i32
    %c0_i32_0 = arith.constant 0 : i32
    %c0_i32_1 = arith.constant 0 : i32
    return %c0_i32, %c0_i32_0 : i32, i32
  }
  func.func @transform_5(%arg0: i32, %arg1: memref<8xi32, #tpu.memory_space<smem>>) -> (i32, i32) {
    %c0_i32 = arith.constant 0 : i32
    %c0_i32_0 = arith.constant 0 : i32
    %c0_i32_1 = arith.constant 0 : i32
    return %c0_i32, %c0_i32_0 : i32, i32
  }
  func.func @transform_6(%arg0: i32, %arg1: memref<8xi32, #tpu.memory_space<smem>>) -> (i32, i32) {
    %c0_i32 = arith.constant 0 : i32
    %c0_i32_0 = arith.constant 0 : i32
    %c0_i32_1 = arith.constant 0 : i32
    return %c0_i32, %c0_i32_0 : i32, i32
  }
  func.func @transform_7(%arg0: i32, %arg1: memref<8xi32, #tpu.memory_space<smem>>) -> (i32, i32) {
    %c0_i32 = arith.constant 0 : i32
    %c0_i32_0 = arith.constant 0 : i32
    %c0_i32_1 = arith.constant 0 : i32
    return %c0_i32, %c0_i32_0 : i32, i32
  }
  func.func @transform_8(%arg0: i32, %arg1: memref<8xi32, #tpu.memory_space<smem>>) -> (i32, i32) {
    %c0_i32 = arith.constant 0 : i32
    %c0_i32_0 = arith.constant 0 : i32
    %c0_i32_1 = arith.constant 0 : i32
    return %c0_i32, %c0_i32_0 : i32, i32
  }
  func.func @transform_9(%arg0: i32, %arg1: memref<8xi32, #tpu.memory_space<smem>>) -> (i32, i32) {
    %c0_i32 = arith.constant 0 : i32
    %c0_i32_0 = arith.constant 0 : i32
    %c0_i32_1 = arith.constant 0 : i32
    return %c0_i32, %c0_i32_0 : i32, i32
  }
  func.func @transform_10(%arg0: i32, %arg1: memref<8xi32, #tpu.memory_space<smem>>) -> (i32, i32) {
    %c0_i32 = arith.constant 0 : i32
    %c0_i32_0 = arith.constant 0 : i32
    %c0_i32_1 = arith.constant 0 : i32
    return %c0_i32, %c0_i32_0 : i32, i32
  }
  func.func @transform_11(%arg0: i32, %arg1: memref<8xi32, #tpu.memory_space<smem>>) -> (i32, i32) {
    %c0_i32 = arith.constant 0 : i32
    %c0_i32_0 = arith.constant 0 : i32
    %c0_i32_1 = arith.constant 0 : i32
    return %c0_i32, %c0_i32_0 : i32, i32
  }
  func.func @transform_12(%arg0: i32, %arg1: memref<8xi32, #tpu.memory_space<smem>>) -> (i32, i32) {
    %c0_i32 = arith.constant 0 : i32
    %c0_i32_0 = arith.constant 0 : i32
    return %c0_i32, %arg0 : i32, i32
  }
  func.func @transform_13(%arg0: i32, %arg1: memref<8xi32, #tpu.memory_space<smem>>) -> (i32, i32) {
    %c0_i32 = arith.constant 0 : i32
    %c0_i32_0 = arith.constant 0 : i32
    return %c0_i32, %arg0 : i32, i32
  }
  func.func @transform_14(%arg0: i32, %arg1: memref<8xi32, #tpu.memory_space<smem>>) -> (i32, i32) {
    %c0_i32 = arith.constant 0 : i32
    %c0_i32_0 = arith.constant 0 : i32
    %c0_i32_1 = arith.constant 0 : i32
    return %c0_i32, %c0_i32_0 : i32, i32
  }
  func.func @transform_15(%arg0: i32, %arg1: memref<8xi32, #tpu.memory_space<smem>>) -> (i32, i32) {
    %c0_i32 = arith.constant 0 : i32
    %c0_i32_0 = arith.constant 0 : i32
    %c0_i32_1 = arith.constant 0 : i32
    return %c0_i32, %c0_i32_0 : i32, i32
  }
  func.func @transform_16(%arg0: i32, %arg1: memref<8xi32, #tpu.memory_space<smem>>) -> (i32, i32, i32) {
    %c0_i32 = arith.constant 0 : i32
    %c0_i32_0 = arith.constant 0 : i32
    %c0_i32_1 = arith.constant 0 : i32
    %c0_i32_2 = arith.constant 0 : i32
    return %c0_i32, %c0_i32_0, %c0_i32_1 : i32, i32, i32
  }
}

</mosaic_0001>

<llo_original>
// kernel: tpu_custom_call.1
$region0: #{tpu_custom_call.1}
  #allocation0 [shape = 'u32[]', space=smem, size = 0x4, offset = 0x4, fixed_abs, tag = 'smem constant byte address 0x4 - core index']
  #allocation1 [shape = 'u32[144,128]{1,0:T(1,128)}', space=vmem, size = 0x12000, scoped, tag = 'internal scratch']
  #allocation2 [shape = 'f32[8,128]{1,0:T(8,128)}', space=vmem, size = 0x1000, scoped, tag = 'scratch operand']
  #allocation3 [shape = 'f32[8,128]{1,0:T(8,128)}', space=vmem, size = 0x1000, scoped, tag = 'scratch operand']
  #allocation4 [shape = 'f32[8,1]{1,0:T(8,128)}', space=vmem, size = 0x1000, scoped, tag = 'scratch operand']
  #allocation5 [shape = 'f32[8,1]{1,0:T(8,128)}', space=vmem, size = 0x1000, scoped, tag = 'scratch operand']
  #allocation6 [shape = 's32[8]{0}', space=sflag, size = 0x20, scoped, tag = 'scratch operand']
  #allocation7 [shape = 's32[1]{0}', space=sflag, size = 0x4, scoped, tag = 'scoped memory for tpu_custom_call.1']
  #allocation8 [shape = 'u8[512]{0}', space=smem, size = 0x200, scoped, tag = 'prefetched SMEM operand 0']
  #allocation24 [shape = 's32[]', space=sflag, size = 0x4, offset = 0, fixed_abs, tag = 'sflag constant byte address 0x0 - dummy sync flag']
  #allocation25 [shape = 's32[]', space=sflag, size = 0x4, offset = 0, fixed_abs, tag = 'sflag constant byte address 0x0 - dummy sync flag']
  #allocation26 [shape = 'u32[]', space=smem, size = 0x4, offset = 0x44, fixed_abs, tag = 'smem constant byte address 0x44 - assertion arg 0']
  #allocation27 [shape = 'u32[]', space=smem, size = 0x4, offset = 0x48, fixed_abs, tag = 'smem constant byte address 0x48 - assertion arg 1']
  #allocation28 [shape = 's32[]', space=sflag, size = 0x4, offset = 0, fixed_abs, tag = 'sflag constant byte address 0x0 - dummy sync flag']
  #allocation29 [shape = 's32[]', space=sflag, size = 0x4, offset = 0, fixed_abs, tag = 'sflag constant byte address 0x0 - dummy sync flag']
  #allocation30 [shape = 's32[]', space=sflag, size = 0x4, offset = 0, fixed_abs, tag = 'sflag constant byte address 0x0 - dummy sync flag']
  #allocation31 [shape = 's32[]', space=sflag, size = 0x4, offset = 0, fixed_abs, tag = 'sflag constant byte address 0x0 - dummy sync flag']
  #allocation32 [shape = 's32[]', space=sflag, size = 0x4, offset = 0, fixed_abs, tag = 'sflag constant byte address 0x0 - dummy sync flag']
  #allocation33 [shape = 's32[]', space=sflag, size = 0x4, offset = 0, fixed_abs, tag = 'sflag constant byte address 0x0 - dummy sync flag']
  #allocation34 [shape = 's32[]', space=sflag, size = 0x4, offset = 0, fixed_abs, tag = 'sflag constant byte address 0x0 - dummy sync flag']
  #allocation35 [shape = 's32[]', space=sflag, size = 0x4, offset = 0, fixed_abs, tag = 'sflag constant byte address 0x0 - dummy sync flag']
  #allocation36 [shape = 's32[]', space=sflag, size = 0x4, offset = 0, fixed_abs, tag = 'sflag constant byte address 0x0 - dummy sync flag']
  #allocation37 [shape = 's32[]', space=sflag, size = 0x4, offset = 0, fixed_abs, tag = 'sflag constant byte address 0x0 - dummy sync flag']
  #allocation38 [shape = 's32[]', space=sflag, size = 0x4, offset = 0, fixed_abs, tag = 'sflag constant byte address 0x0 - dummy sync flag']
  #allocation39 [shape = 's32[]', space=sflag, size = 0x4, offset = 0, fixed_abs, tag = 'sflag constant byte address 0x0 - dummy sync flag']
  #allocation40 [shape = 's32[]', space=sflag, size = 0x4, offset = 0, fixed_abs, tag = 'sflag constant byte address 0x0 - dummy sync flag']
  #allocation41 [shape = 's32[]', space=sflag, size = 0x4, offset = 0, fixed_abs, tag = 'sflag constant byte address 0x0 - dummy sync flag']
  %s0 = inlined_call_operand.vmem [shape: s32[8], index: 0, kind: input, shape index: {}]
  %s1 = inlined_call_operand.hbm [shape: f32[64,128], index: 1, kind: input, shape index: {}]
  %s2 = inlined_call_operand.hbm [shape: f32[8,128], index: 2, kind: input, shape index: {}, may-alias: {2,16}]
  %s3 = inlined_call_operand.hbm [shape: f32[8,128,128], index: 3, kind: input, shape index: {}]
  %s4 = inlined_call_operand.vmem [shape: f32[1,128], index: 4, kind: input, shape index: {}]
  %s5 = inlined_call_operand.vmem [shape: f32[1,128], index: 5, kind: input, shape index: {}]
  %s6 = inlined_call_operand.vmem [shape: f32[1,128], index: 6, kind: input, shape index: {}]
  %s7 = inlined_call_operand.hbm [shape: f32[256,128], index: 7, kind: input, shape index: {}]
  %s8 = inlined_call_operand.vmem [shape: f32[1,128], index: 8, kind: input, shape index: {}]
  %s9 = inlined_call_operand.hbm [shape: f32[128,384], index: 9, kind: input, shape index: {}]
  %s10 = inlined_call_operand.hbm [shape: f32[128,384], index: 10, kind: input, shape index: {}]
  %s11 = inlined_call_operand.vmem [shape: f32[1,384], index: 11, kind: input, shape index: {}]
  %s12 = inlined_call_operand.vmem [shape: f32[1,384], index: 12, kind: input, shape index: {}]
  %s13 = inlined_call_operand.hbm [shape: f32[128,128], index: 13, kind: input, shape index: {}]
  %s14 = inlined_call_operand.vmem [shape: f32[1,128], index: 14, kind: input, shape index: {}]
  %s15 = inlined_call_operand.hbm [shape: f32[8,128], index: 15, kind: output, shape index: {0}]
  %s16 = inlined_call_operand.hbm [shape: f32[8,128], index: 16, kind: output, shape index: {1}, may-alias: {2,16}]
  %s17 = inlined_call_operand.hbm [shape: f32[8,1,128], index: 17, kind: output, shape index: {2}]
  %18 = xla_tuple %s15, %s16, %s17
  %s19 = sld [smem:[#allocation0]]
  $region142: #{tpu_custom_call.1} parent=0
    _
  %s21 = ssub.s32 1, %s19
  %s22 = scalar_select 0, %s21, %s19
  %s23 = sshll.u32 %s0, 4
  %s24 = int_to_ptr.vmem [resolvable:$true] %s23
  %26 = dma.vmem_to_smem %s24, 16, [#allocation8], [#allocation7]
  %27 = dma.done [#allocation7], 16
  %28 = sfence
  $region1: #{tpu_custom_call.1} parent=0
    #allocation9 [shape = 'u8[4096]{0}', space=vmem, size = 0x1000, scoped, tag = 'input window, operand 2, single buffered']
    #allocation10 [shape = 's32[1]{0}', space=sflag, size = 0x4, scoped, tag = 'scoped memory for tpu_custom_call.1']
    #allocation11 [shape = 's32[1]{0}', space=sflag, size = 0x4, scoped, tag = 'scoped memory for tpu_custom_call.1']
    #allocation12 [shape = 'u8[524288]{0}', space=vmem, size = 0x80000, scoped, tag = 'input window, operand 3, single buffered']
    #allocation13 [shape = 's32[1]{0}', space=sflag, size = 0x4, scoped, tag = 'scoped memory for tpu_custom_call.1']
    #allocation14 [shape = 'u8[131072]{0}', space=vmem, size = 0x20000, scoped, tag = 'input window, operand 7, single buffered']
    #allocation15 [shape = 'u8[196608]{0}', space=vmem, size = 0x30000, scoped, tag = 'input window, operand 9, single buffered']
    #allocation16 [shape = 's32[1]{0}', space=sflag, size = 0x4, scoped, tag = 'scoped memory for tpu_custom_call.1']
    #allocation17 [shape = 'u8[196608]{0}', space=vmem, size = 0x30000, scoped, tag = 'input window, operand 10, single buffered']
    #allocation18 [shape = 'u8[65536]{0}', space=vmem, size = 0x10000, scoped, tag = 'input window, operand 13, single buffered']
    #allocation19 [shape = 's32[1]{0}', space=sflag, size = 0x4, scoped, tag = 'scoped memory for tpu_custom_call.1']
    #allocation20 [shape = 'u8[4096]{0}', space=vmem, size = 0x1000, scoped, tag = 'output window, operand 0, single buffered']
    #allocation21 [shape = 'u8[4096]{0}', space=vmem, size = 0x1000, scoped, tag = 'output window, operand 1, single buffered']
    #allocation22 [shape = 's32[1]{0}', space=sflag, size = 0x4, scoped, tag = 'scoped memory for tpu_custom_call.1']
    #allocation23 [shape = 'u8[4096]{0}', space=vmem, size = 0x1000, scoped, tag = 'output window, operand 2, single buffered']
    %29 = vsyncpa [#allocation10], 0
    %30 = vsyncpa [#allocation13], 0
    %31 = vsyncpa [#allocation16], 0
    %32 = vsyncpa [#allocation19], 0
    %33 = vsyncpa [#allocation11], 0
    %34 = vsyncpa [#allocation22], 0
    // Predicated region
    $region2: #{tpu_custom_call.1} parent=1 // pred_check
      _
    $region3: #{tpu_custom_call.1} parent=1 // pred_check_branch
      %36 = sbr.rel (0) target = $region5
    $region4: #{tpu_custom_call.1} parent=1 // pred_region
      %s38 = ssub.s32 128, 128
      %39 = vsyncadd [#allocation10], %s38
      %s41 = sshll.u32 [#allocation9], 4
      %s42 = int_to_ptr.vmem [resolvable:$true] %s41
      %44 = dma.hbm_to_vmem [thread:$0]  %s2, 128, %s42, [#allocation10]
    $region5: #{tpu_custom_call.1} parent=1 // pred_fallthru
      _
    // Predicated region
    $region6: #{tpu_custom_call.1} parent=1 // pred_check
      _
    $region7: #{tpu_custom_call.1} parent=1 // pred_check_branch
      %46 = sbr.rel (0) target = $region9
    $region8: #{tpu_custom_call.1} parent=1 // pred_region
      %s48 = ssub.s32 16384, 16384
      %49 = vsyncadd [#allocation13], %s48
      %s50 = sshll.u32 [#allocation12], 4
      %s51 = int_to_ptr.vmem [resolvable:$true] %s50
      %56 = dma.hbm_to_vmem [thread:$0]  %s3, 16384, %s51, [#allocation13], 128, 128, 8
    $region9: #{tpu_custom_call.1} parent=1 // pred_fallthru
      _
    // Predicated region
    $region10: #{tpu_custom_call.1} parent=1 // pred_check
      _
    $region11: #{tpu_custom_call.1} parent=1 // pred_check_branch
      %58 = sbr.rel (0) target = $region13
    $region12: #{tpu_custom_call.1} parent=1 // pred_region
      _
    $region13: #{tpu_custom_call.1} parent=1 // pred_fallthru
      _
    // Predicated region
    $region14: #{tpu_custom_call.1} parent=1 // pred_check
      _
    $region15: #{tpu_custom_call.1} parent=1 // pred_check_branch
      %60 = sbr.rel (0) target = $region17
    $region16: #{tpu_custom_call.1} parent=1 // pred_region
      _
    $region17: #{tpu_custom_call.1} parent=1 // pred_fallthru
      _
    // Predicated region
    $region18: #{tpu_custom_call.1} parent=1 // pred_check
      _
    $region19: #{tpu_custom_call.1} parent=1 // pred_check_branch
      %62 = sbr.rel (0) target = $region21
    $region20: #{tpu_custom_call.1} parent=1 // pred_region
      _
    $region21: #{tpu_custom_call.1} parent=1 // pred_fallthru
      _
    // Predicated region
    $region22: #{tpu_custom_call.1} parent=1 // pred_check
      _
    $region23: #{tpu_custom_call.1} parent=1 // pred_check_branch
      %64 = sbr.rel (0) target = $region25
    $region24: #{tpu_custom_call.1} parent=1 // pred_region
      %s66 = ssub.s32 4096, 4096
      %67 = vsyncadd [#allocation13], %s66
      %s68 = sshll.u32 [#allocation14], 4
      %s69 = int_to_ptr.vmem [resolvable:$true] %s68
      %74 = dma.hbm_to_vmem [thread:$0]  %s7, 4096, %s69, [#allocation13], 128, 128, 8
    $region25: #{tpu_custom_call.1} parent=1 // pred_fallthru
      _
    // Predicated region
    $region26: #{tpu_custom_call.1} parent=1 // pred_check
      _
    $region27: #{tpu_custom_call.1} parent=1 // pred_check_branch
      %76 = sbr.rel (0) target = $region29
    $region28: #{tpu_custom_call.1} parent=1 // pred_region
      _
    $region29: #{tpu_custom_call.1} parent=1 // pred_fallthru
      _
    // Predicated region
    $region30: #{tpu_custom_call.1} parent=1 // pred_check
      _
    $region31: #{tpu_custom_call.1} parent=1 // pred_check_branch
      %78 = sbr.rel (0) target = $region33
    $region32: #{tpu_custom_call.1} parent=1 // pred_region
      %s80 = ssub.s32 6144, 6144
      %81 = vsyncadd [#allocation16], %s80
      %s82 = sshll.u32 [#allocation15], 4
      %s83 = int_to_ptr.vmem [resolvable:$true] %s82
      %88 = dma.hbm_to_vmem [thread:$0]  %s9, 6144, %s83, [#allocation16], 384, 384, 24
    $region33: #{tpu_custom_call.1} parent=1 // pred_fallthru
      _
    // Predicated region
    $region34: #{tpu_custom_call.1} parent=1 // pred_check
      _
    $region35: #{tpu_custom_call.1} parent=1 // pred_check_branch
      %90 = sbr.rel (0) target = $region37
    $region36: #{tpu_custom_call.1} parent=1 // pred_region
      %s92 = ssub.s32 6144, 6144
      %93 = vsyncadd [#allocation16], %s92
      %s94 = sshll.u32 [#allocation17], 4
      %s95 = int_to_ptr.vmem [resolvable:$true] %s94
      %100 = dma.hbm_to_vmem [thread:$0]  %s10, 6144, %s95, [#allocation16], 384, 384, 24
    $region37: #{tpu_custom_call.1} parent=1 // pred_fallthru
      _
    // Predicated region
    $region38: #{tpu_custom_call.1} parent=1 // pred_check
      _
    $region39: #{tpu_custom_call.1} parent=1 // pred_check_branch
      %102 = sbr.rel (0) target = $region41
    $region40: #{tpu_custom_call.1} parent=1 // pred_region
      _
    $region41: #{tpu_custom_call.1} parent=1 // pred_fallthru
      _
    // Predicated region
    $region42: #{tpu_custom_call.1} parent=1 // pred_check
      _
    $region43: #{tpu_custom_call.1} parent=1 // pred_check_branch
      %104 = sbr.rel (0) target = $region45
    $region44: #{tpu_custom_call.1} parent=1 // pred_region
      _
    $region45: #{tpu_custom_call.1} parent=1 // pred_fallthru
      _
    // Predicated region
    $region46: #{tpu_custom_call.1} parent=1 // pred_check
      _
    $region47: #{tpu_custom_call.1} parent=1 // pred_check_branch
      %106 = sbr.rel (0) target = $region49
    $region48: #{tpu_custom_call.1} parent=1 // pred_region
      %s108 = ssub.s32 2048, 2048
      %109 = vsyncadd [#allocation19], %s108
      %s110 = sshll.u32 [#allocation18], 4
      %s111 = int_to_ptr.vmem [resolvable:$true] %s110
      %116 = dma.hbm_to_vmem [thread:$0]  %s13, 2048, %s111, [#allocation19], 128, 128, 8
    $region49: #{tpu_custom_call.1} parent=1 // pred_fallthru
      _
    // Predicated region
    $region50: #{tpu_custom_call.1} parent=1 // pred_check
      _
    $region51: #{tpu_custom_call.1} parent=1 // pred_check_branch
      %118 = sbr.rel (0) target = $region53
    $region52: #{tpu_custom_call.1} parent=1 // pred_region
      _
    $region53: #{tpu_custom_call.1} parent=1 // pred_fallthru
      _
    // Predicated region
    $region54: #{tpu_custom_call.1} parent=1 // pred_check
      _
    $region55: #{tpu_custom_call.1} parent=1 // pred_check_branch
      %120 = sbr.rel (0) target = $region57
    $region56: #{tpu_custom_call.1} parent=1 // pred_region
      %121 = dma.done [#allocation10], 128
    $region57: #{tpu_custom_call.1} parent=1 // pred_fallthru
      _
    // Predicated region
    $region58: #{tpu_custom_call.1} parent=1 // pred_check
      _
    $region59: #{tpu_custom_call.1} parent=1 // pred_check_branch
      %123 = sbr.rel (0) target = $region61
    $region60: #{tpu_custom_call.1} parent=1 // pred_region
      %124 = dma.done [#allocation13], 16384
    $region61: #{tpu_custom_call.1} parent=1 // pred_fallthru
      _
    // Predicated region
    $region62: #{tpu_custom_call.1} parent=1 // pred_check
      _
    $region63: #{tpu_custom_call.1} parent=1 // pred_check_branch
      %126 = sbr.rel (0) target = $region65
    $region64: #{tpu_custom_call.1} parent=1 // pred_region
      %127 = dma.done [#allocation13], 4096
    $region65: #{tpu_custom_call.1} parent=1 // pred_fallthru
      _
    // Predicated region
    $region66: #{tpu_custom_call.1} parent=1 // pred_check
      _
    $region67: #{tpu_custom_call.1} parent=1 // pred_check_branch
      %129 = sbr.rel (0) target = $region69
    $region68: #{tpu_custom_call.1} parent=1 // pred_region
      %130 = dma.done [#allocation16], 6144
    $region69: #{tpu_custom_call.1} parent=1 // pred_fallthru
      _
    // Predicated region
    $region70: #{tpu_custom_call.1} parent=1 // pred_check
      _
    $region71: #{tpu_custom_call.1} parent=1 // pred_check_branch
      %132 = sbr.rel (0) target = $region73
    $region72: #{tpu_custom_call.1} parent=1 // pred_region
      %133 = dma.done [#allocation16], 6144
    $region73: #{tpu_custom_call.1} parent=1 // pred_fallthru
      _
    // Predicated region
    $region74: #{tpu_custom_call.1} parent=1 // pred_check
      _
    $region75: #{tpu_custom_call.1} parent=1 // pred_check_branch
      %135 = sbr.rel (0) target = $region77
    $region76: #{tpu_custom_call.1} parent=1 // pred_region
      %136 = dma.done [#allocation19], 2048
    $region77: #{tpu_custom_call.1} parent=1 // pred_fallthru
      _
    %p137 = scmp.eq.s32.totalorder 0, 0
    // Predicated region
    $region78: #{tpu_custom_call.1} parent=1 // pred_check
      %p138 = pneg %p137
    $region79: #{tpu_custom_call.1} parent=1 // pred_check_branch
      %140 = sbr.rel (%p138) target = $region81
    $region80: #{tpu_custom_call.1} parent=1 // pred_region
      %s141 = sld [smem:[#allocation8]]
      %s142 = sld [smem:[#allocation8 + $0x1]]
      %s143 = sld [smem:[#allocation8 + $0x2]]
      %s144 = sld [smem:[#allocation8 + $0x3]]
      %s145 = sld [smem:[#allocation8 + $0x4]]
      %s146 = sld [smem:[#allocation8 + $0x5]]
      %s147 = sld [smem:[#allocation8 + $0x6]]
      %s148 = sld [smem:[#allocation8 + $0x7]]
      %s149 = smul.addr %s141, 16
      %s150 = scalar_lea.hbm %s1, %s149
      // Predicated region
      $region82: #{tpu_custom_call.1} parent=80 // pred_check
        _
      $region83: #{tpu_custom_call.1} parent=80 // pred_check_branch
        %152 = sbr.rel target = $region85
      $region84: #{tpu_custom_call.1} parent=80 // pred_region
        %153 = sst [smem:[#allocation26]] [#allocation25]
        %154 = sst [smem:[#allocation27]] [#allocation24]
      $region85: #{tpu_custom_call.1} parent=80 // pred_fallthru
        _
      %156 = shalt.err (0)
      %s158 = sshll.u32 [#allocation2], 4
      %s159 = int_to_ptr.vmem [resolvable:$true] %s158
      %161 = dma.hbm_to_vmem [thread:$0]  %s150, 16, %s159, [#allocation6]
      %s162 = smul.addr %s142, 16
      %s163 = scalar_lea.hbm %s1, %s162
      %s164 = scalar_lea.vmem [#allocation2], 1
      %s165 = scalar_lea.sflag [#allocation6], 1
      // Predicated region
      $region86: #{tpu_custom_call.1} parent=80 // pred_check
        _
      $region87: #{tpu_custom_call.1} parent=80 // pred_check_branch
        %167 = sbr.rel target = $region89
      $region88: #{tpu_custom_call.1} parent=80 // pred_region
        %168 = sst [smem:[#allocation26]] [#allocation29]
        %169 = sst [smem:[#allocation27]] [#allocation28]
      $region89: #{tpu_custom_call.1} parent=80 // pred_fallthru
        _
      %171 = shalt.err (0)
      %s173 = sshll.u32 %s164, 4
      %s174 = int_to_ptr.vmem [resolvable:$true] %s173
      %176 = dma.hbm_to_vmem [thread:$0]  %s163, 16, %s174, %s165
      %s177 = smul.addr %s143, 16
      %s178 = scalar_lea.hbm %s1, %s177
      %s179 = scalar_lea.vmem [#allocation2], 2
      %s180 = scalar_lea.sflag [#allocation6], 2
      // Predicated region
      $region90: #{tpu_custom_call.1} parent=80 // pred_check
        _
      $region91: #{tpu_custom_call.1} parent=80 // pred_check_branch
        %182 = sbr.rel target = $region93
      $region92: #{tpu_custom_call.1} parent=80 // pred_region
        %183 = sst [smem:[#allocation26]] [#allocation31]
        %184 = sst [smem:[#allocation27]] [#allocation30]
      $region93: #{tpu_custom_call.1} parent=80 // pred_fallthru
        _
      %186 = shalt.err (0)
      %s188 = sshll.u32 %s179, 4
      %s189 = int_to_ptr.vmem [resolvable:$true] %s188
      %191 = dma.hbm_to_vmem [thread:$0]  %s178, 16, %s189, %s180
      %s192 = smul.addr %s144, 16
      %s193 = scalar_lea.hbm %s1, %s192
      %s194 = scalar_lea.vmem [#allocation2], 3
      %s195 = scalar_lea.sflag [#allocation6], 3
      // Predicated region
      $region94: #{tpu_custom_call.1} parent=80 // pred_check
        _
      $region95: #{tpu_custom_call.1} parent=80 // pred_check_branch
        %197 = sbr.rel target = $region97
      $region96: #{tpu_custom_call.1} parent=80 // pred_region
        %198 = sst [smem:[#allocation26]] [#allocation33]
        %199 = sst [smem:[#allocation27]] [#allocation32]
      $region97: #{tpu_custom_call.1} parent=80 // pred_fallthru
        _
      %201 = shalt.err (0)
      %s203 = sshll.u32 %s194, 4
      %s204 = int_to_ptr.vmem [resolvable:$true] %s203
      %206 = dma.hbm_to_vmem [thread:$0]  %s193, 16, %s204, %s195
      %s207 = smul.addr %s145, 16
      %s208 = scalar_lea.hbm %s1, %s207
      %s209 = scalar_lea.vmem [#allocation2], 4
      %s210 = scalar_lea.sflag [#allocation6], 4
      // Predicated region
      $region98: #{tpu_custom_call.1} parent=80 // pred_check
        _
      $region99: #{tpu_custom_call.1} parent=80 // pred_check_branch
        %212 = sbr.rel target = $region101
      $region100: #{tpu_custom_call.1} parent=80 // pred_region
        %213 = sst [smem:[#allocation26]] [#allocation35]
        %214 = sst [smem:[#allocation27]] [#allocation34]
      $region101: #{tpu_custom_call.1} parent=80 // pred_fallthru
        _
      %216 = shalt.err (0)
      %s218 = sshll.u32 %s209, 4
      %s219 = int_to_ptr.vmem [resolvable:$true] %s218
      %221 = dma.hbm_to_vmem [thread:$0]  %s208, 16, %s219, %s210
      %s222 = smul.addr %s146, 16
      %s223 = scalar_lea.hbm %s1, %s222
      %s224 = scalar_lea.vmem [#allocation2], 5
      %s225 = scalar_lea.sflag [#allocation6], 5
      // Predicated region
      $region102: #{tpu_custom_call.1} parent=80 // pred_check
        _
      $region103: #{tpu_custom_call.1} parent=80 // pred_check_branch
        %227 = sbr.rel target = $region105
      $region104: #{tpu_custom_call.1} parent=80 // pred_region
        %228 = sst [smem:[#allocation26]] [#allocation37]
        %229 = sst [smem:[#allocation27]] [#allocation36]
      $region105: #{tpu_custom_call.1} parent=80 // pred_fallthru
        _
      %231 = shalt.err (0)
      %s233 = sshll.u32 %s224, 4
      %s234 = int_to_ptr.vmem [resolvable:$true] %s233
      %236 = dma.hbm_to_vmem [thread:$0]  %s223, 16, %s234, %s225
      %s237 = smul.addr %s147, 16
      %s238 = scalar_lea.hbm %s1, %s237
      %s239 = scalar_lea.vmem [#allocation2], 6
      %s240 = scalar_lea.sflag [#allocation6], 6
      // Predicated region
      $region106: #{tpu_custom_call.1} parent=80 // pred_check
        _
      $region107: #{tpu_custom_call.1} parent=80 // pred_check_branch
        %242 = sbr.rel target = $region109
      $region108: #{tpu_custom_call.1} parent=80 // pred_region
        %243 = sst [smem:[#allocation26]] [#allocation39]
        %244 = sst [smem:[#allocation27]] [#allocation38]
      $region109: #{tpu_custom_call.1} parent=80 // pred_fallthru
        _
      %246 = shalt.err (0)
      %s248 = sshll.u32 %s239, 4
      %s249 = int_to_ptr.vmem [resolvable:$true] %s248
      %251 = dma.hbm_to_vmem [thread:$0]  %s238, 16, %s249, %s240
      %s252 = smul.addr %s148, 16
      %s253 = scalar_lea.hbm %s1, %s252
      %s254 = scalar_lea.vmem [#allocation2], 7
      %s255 = scalar_lea.sflag [#allocation6], 7
      // Predicated region
      $region110: #{tpu_custom_call.1} parent=80 // pred_check
        _
      $region111: #{tpu_custom_call.1} parent=80 // pred_check_branch
        %257 = sbr.rel target = $region113
      $region112: #{tpu_custom_call.1} parent=80 // pred_region
        %258 = sst [smem:[#allocation26]] [#allocation41]
        %259 = sst [smem:[#allocation27]] [#allocation40]
      $region113: #{tpu_custom_call.1} parent=80 // pred_fallthru
        _
      %261 = shalt.err (0)
      %s263 = sshll.u32 %s254, 4
      %s264 = int_to_ptr.vmem [resolvable:$true] %s263
      %266 = dma.hbm_to_vmem [thread:$0]  %s253, 16, %s264, %s255
      %s267 = smul.u32 1, 1
      %s268 = sshll.u32 %s267, 4
      %269 = dma.done [#allocation6], %s268
      %s270 = sshll.u32 %s267, 4
      %271 = dma.done %s165, %s270
      %s272 = sshll.u32 %s267, 4
      %273 = dma.done %s180, %s272
      %s274 = sshll.u32 %s267, 4
      %275 = dma.done %s195, %s274
      %s276 = sshll.u32 %s267, 4
      %277 = dma.done %s210, %s276
      %s278 = sshll.u32 %s267, 4
      %279 = dma.done %s225, %s278
      %s280 = sshll.u32 %s267, 4
      %281 = dma.done %s240, %s280
      %s282 = sshll.u32 %s267, 4
      %283 = dma.done %s255, %s282
      %v284 = vld [vmem:[#allocation9] sm:$0xff]
      %v285 = vld [vmem:[#allocation12] sm:$0xff]
      %v286 = vld [vmem:[#allocation12 + $0x8] sm:$0xff]
      %v287 = vld [vmem:[#allocation12 + $0x10] sm:$0xff]
      %v288 = vld [vmem:[#allocation12 + $0x18] sm:$0xff]
      %v289 = vld [vmem:[#allocation12 + $0x20] sm:$0xff]
      %v290 = vld [vmem:[#allocation12 + $0x28] sm:$0xff]
      %v291 = vld [vmem:[#allocation12 + $0x30] sm:$0xff]
      %v292 = vld [vmem:[#allocation12 + $0x38] sm:$0xff]
      %v293 = vld [vmem:[#allocation12 + $0x40] sm:$0xff]
      %v294 = vld [vmem:[#allocation12 + $0x48] sm:$0xff]
      %v295 = vld [vmem:[#allocation12 + $0x50] sm:$0xff]
      %v296 = vld [vmem:[#allocation12 + $0x58] sm:$0xff]
      %v297 = vld [vmem:[#allocation12 + $0x60] sm:$0xff]
      %v298 = vld [vmem:[#allocation12 + $0x68] sm:$0xff]
      %v299 = vld [vmem:[#allocation12 + $0x70] sm:$0xff]
      %v300 = vld [vmem:[#allocation12 + $0x78] sm:$0xff]
      %v301 = vld [vmem:[#allocation12 + $0x80] sm:$0xff]
      %v302 = vld [vmem:[#allocation12 + $0x88] sm:$0xff]
      %v303 = vld [vmem:[#allocation12 + $0x90] sm:$0xff]
      %v304 = vld [vmem:[#allocation12 + $0x98] sm:$0xff]
      %v305 = vld [vmem:[#allocation12 + $0xa0] sm:$0xff]
      %v306 = vld [vmem:[#allocation12 + $0xa8] sm:$0xff]
      %v307 = vld [vmem:[#allocation12 + $0xb0] sm:$0xff]
      %v308 = vld [vmem:[#allocation12 + $0xb8] sm:$0xff]
      %v309 = vld [vmem:[#allocation12 + $0xc0] sm:$0xff]
      %v310 = vld [vmem:[#allocation12 + $0xc8] sm:$0xff]
      %v311 = vld [vmem:[#allocation12 + $0xd0] sm:$0xff]
      %v312 = vld [vmem:[#allocation12 + $0xd8] sm:$0xff]
      %v313 = vld [vmem:[#allocation12 + $0xe0] sm:$0xff]
      %v314 = vld [vmem:[#allocation12 + $0xe8] sm:$0xff]
      %v315 = vld [vmem:[#allocation12 + $0xf0] sm:$0xff]
      %v316 = vld [vmem:[#allocation12 + $0xf8] sm:$0xff]
      %v317 = vld [vmem:[#allocation12 + $0x100] sm:$0xff]
      %v318 = vld [vmem:[#allocation12 + $0x108] sm:$0xff]
      %v319 = vld [vmem:[#allocation12 + $0x110] sm:$0xff]
      %v320 = vld [vmem:[#allocation12 + $0x118] sm:$0xff]
      %v321 = vld [vmem:[#allocation12 + $0x120] sm:$0xff]
      %v322 = vld [vmem:[#allocation12 + $0x128] sm:$0xff]
      %v323 = vld [vmem:[#allocation12 + $0x130] sm:$0xff]
      %v324 = vld [vmem:[#allocation12 + $0x138] sm:$0xff]
      %v325 = vld [vmem:[#allocation12 + $0x140] sm:$0xff]
      %v326 = vld [vmem:[#allocation12 + $0x148] sm:$0xff]
      %v327 = vld [vmem:[#allocation12 + $0x150] sm:$0xff]
      %v328 = vld [vmem:[#allocation12 + $0x158] sm:$0xff]
      %v329 = vld [vmem:[#allocation12 + $0x160] sm:$0xff]
      %v330 = vld [vmem:[#allocation12 + $0x168] sm:$0xff]
      %v331 = vld [vmem:[#allocation12 + $0x170] sm:$0xff]
      %v332 = vld [vmem:[#allocation12 + $0x178] sm:$0xff]
      %v333 = vld [vmem:[#allocation12 + $0x180] sm:$0xff]
      %v334 = vld [vmem:[#allocation12 + $0x188] sm:$0xff]
      %v335 = vld [vmem:[#allocation12 + $0x190] sm:$0xff]
      %v336 = vld [vmem:[#allocation12 + $0x198] sm:$0xff]
      %v337 = vld [vmem:[#allocation12 + $0x1a0] sm:$0xff]
      %v338 = vld [vmem:[#allocation12 + $0x1a8] sm:$0xff]
      %v339 = vld [vmem:[#allocation12 + $0x1b0] sm:$0xff]
      %v340 = vld [vmem:[#allocation12 + $0x1b8] sm:$0xff]
      %v341 = vld [vmem:[#allocation12 + $0x1c0] sm:$0xff]
      %v342 = vld [vmem:[#allocation12 + $0x1c8] sm:$0xff]
      %v343 = vld [vmem:[#allocation12 + $0x1d0] sm:$0xff]
      %v344 = vld [vmem:[#allocation12 + $0x1d8] sm:$0xff]
      %v345 = vld [vmem:[#allocation12 + $0x1e0] sm:$0xff]
      %v346 = vld [vmem:[#allocation12 + $0x1e8] sm:$0xff]
      %v347 = vld [vmem:[#allocation12 + $0x1f0] sm:$0xff]
      %v348 = vld [vmem:[#allocation12 + $0x1f8] sm:$0xff]
      %v349 = vld [vmem:[#allocation12 + $0x200] sm:$0xff]
      %v350 = vld [vmem:[#allocation12 + $0x208] sm:$0xff]
      %v351 = vld [vmem:[#allocation12 + $0x210] sm:$0xff]
      %v352 = vld [vmem:[#allocation12 + $0x218] sm:$0xff]
      %v353 = vld [vmem:[#allocation12 + $0x220] sm:$0xff]
      %v354 = vld [vmem:[#allocation12 + $0x228] sm:$0xff]
      %v355 = vld [vmem:[#allocation12 + $0x230] sm:$0xff]
      %v356 = vld [vmem:[#allocation12 + $0x238] sm:$0xff]
      %v357 = vld [vmem:[#allocation12 + $0x240] sm:$0xff]
      %v358 = vld [vmem:[#allocation12 + $0x248] sm:$0xff]
      %v359 = vld [vmem:[#allocation12 + $0x250] sm:$0xff]
      %v360 = vld [vmem:[#allocation12 + $0x258] sm:$0xff]
      %v361 = vld [vmem:[#allocation12 + $0x260] sm:$0xff]
      %v362 = vld [vmem:[#allocation12 + $0x268] sm:$0xff]
      %v363 = vld [vmem:[#allocation12 + $0x270] sm:$0xff]
      %v364 = vld [vmem:[#allocation12 + $0x278] sm:$0xff]
      %v365 = vld [vmem:[#allocation12 + $0x280] sm:$0xff]
      %v366 = vld [vmem:[#allocation12 + $0x288] sm:$0xff]
      %v367 = vld [vmem:[#allocation12 + $0x290] sm:$0xff]
      %v368 = vld [vmem:[#allocation12 + $0x298] sm:$0xff]
      %v369 = vld [vmem:[#allocation12 + $0x2a0] sm:$0xff]
      %v370 = vld [vmem:[#allocation12 + $0x2a8] sm:$0xff]
      %v371 = vld [vmem:[#allocation12 + $0x2b0] sm:$0xff]
      %v372 = vld [vmem:[#allocation12 + $0x2b8] sm:$0xff]
      %v373 = vld [vmem:[#allocation12 + $0x2c0] sm:$0xff]
      %v374 = vld [vmem:[#allocation12 + $0x2c8] sm:$0xff]
      %v375 = vld [vmem:[#allocation12 + $0x2d0] sm:$0xff]
      %v376 = vld [vmem:[#allocation12 + $0x2d8] sm:$0xff]
      %v377 = vld [vmem:[#allocation12 + $0x2e0] sm:$0xff]
      %v378 = vld [vmem:[#allocation12 + $0x2e8] sm:$0xff]
      %v379 = vld [vmem:[#allocation12 + $0x2f0] sm:$0xff]
      %v380 = vld [vmem:[#allocation12 + $0x2f8] sm:$0xff]
      %v381 = vld [vmem:[#allocation12 + $0x300] sm:$0xff]
      %v382 = vld [vmem:[#allocation12 + $0x308] sm:$0xff]
      %v383 = vld [vmem:[#allocation12 + $0x310] sm:$0xff]
      %v384 = vld [vmem:[#allocation12 + $0x318] sm:$0xff]
      %v385 = vld [vmem:[#allocation12 + $0x320] sm:$0xff]
      %v386 = vld [vmem:[#allocation12 + $0x328] sm:$0xff]
      %v387 = vld [vmem:[#allocation12 + $0x330] sm:$0xff]
      %v388 = vld [vmem:[#allocation12 + $0x338] sm:$0xff]
      %v389 = vld [vmem:[#allocation12 + $0x340] sm:$0xff]
      %v390 = vld [vmem:[#allocation12 + $0x348] sm:$0xff]
      %v391 = vld [vmem:[#allocation12 + $0x350] sm:$0xff]
      %v392 = vld [vmem:[#allocation12 + $0x358] sm:$0xff]
      %v393 = vld [vmem:[#allocation12 + $0x360] sm:$0xff]
      %v394 = vld [vmem:[#allocation12 + $0x368] sm:$0xff]
      %v395 = vld [vmem:[#allocation12 + $0x370] sm:$0xff]
      %v396 = vld [vmem:[#allocation12 + $0x378] sm:$0xff]
      %v397 = vld [vmem:[#allocation12 + $0x380] sm:$0xff]
      %v398 = vld [vmem:[#allocation12 + $0x388] sm:$0xff]
      %v399 = vld [vmem:[#allocation12 + $0x390] sm:$0xff]
      %v400 = vld [vmem:[#allocation12 + $0x398] sm:$0xff]
      %v401 = vld [vmem:[#allocation12 + $0x3a0] sm:$0xff]
      %v402 = vld [vmem:[#allocation12 + $0x3a8] sm:$0xff]
      %v403 = vld [vmem:[#allocation12 + $0x3b0] sm:$0xff]
      %v404 = vld [vmem:[#allocation12 + $0x3b8] sm:$0xff]
      %v405 = vld [vmem:[#allocation12 + $0x3c0] sm:$0xff]
      %v406 = vld [vmem:[#allocation12 + $0x3c8] sm:$0xff]
      %v407 = vld [vmem:[#allocation12 + $0x3d0] sm:$0xff]
      %v408 = vld [vmem:[#allocation12 + $0x3d8] sm:$0xff]
      %v409 = vld [vmem:[#allocation12 + $0x3e0] sm:$0xff]
      %v410 = vld [vmem:[#allocation12 + $0x3e8] sm:$0xff]
      %v411 = vld [vmem:[#allocation12 + $0x3f0] sm:$0xff]
      %v412 = vld [vmem:[#allocation12 + $0x3f8] sm:$0xff]
      %v413 = vld [vmem:[%s4] sm:$0x1]
      %v414 = vld [vmem:[%s5] sm:$0x1]
      %v416 = vlaneseq
      %v417 = vshrl.u32 %v416, 7
      %v418 = vsub.s32 0, %v417
      %v419 = vrot.slane %v414, %v418
      %v421 = vmul.f32 %v284, %v419
      %422 = vadd.xlane.f32.xlu0 %v421
      %v423 = vpop.xlane.xlu0 %422
      %v425 = vlaneseq
      %v426 = vshrl.u32 %v425, 7
      %v427 = vsub.s32 0, %v426
      %v428 = vrot.slane %v423, %v427
      %v429 = vlaneseq
      %v430 = vshrl.u32 %v429, 7
      %v431 = vsub.s32 1, %v430
      %v432 = vrot.slane %v423, %v431
      %v433 = vlaneseq
      %v434 = vshrl.u32 %v433, 7
      %v435 = vsub.s32 2, %v434
      %v436 = vrot.slane %v423, %v435
      %v437 = vlaneseq
      %v438 = vshrl.u32 %v437, 7
      %v439 = vsub.s32 3, %v438
      %v440 = vrot.slane %v423, %v439
      %v441 = vlaneseq
      %v442 = vshrl.u32 %v441, 7
      %v443 = vsub.s32 4, %v442
      %v444 = vrot.slane %v423, %v443
      %v445 = vlaneseq
      %v446 = vshrl.u32 %v445, 7
      %v447 = vsub.s32 5, %v446
      %v448 = vrot.slane %v423, %v447
      %v449 = vlaneseq
      %v450 = vshrl.u32 %v449, 7
      %v451 = vsub.s32 6, %v450
      %v452 = vrot.slane %v423, %v451
      %v453 = vlaneseq
      %v454 = vshrl.u32 %v453, 7
      %v455 = vsub.s32 7, %v454
      %v456 = vrot.slane %v423, %v455
      %465 = vmatprep.subr.mxu0 0.0
      %466 = vmatpush1.xpose.msra.mxu0 %v300
      %467 = vmatprep.subr.mxu0 0.0
      %468 = vmatpush1.xpose.msra.mxu0 %v299
      %469 = vmatprep.subr.mxu0 0.0
      %470 = vmatpush1.xpose.msra.mxu0 %v298
      %471 = vmatprep.subr.mxu0 0.0
      %472 = vmatpush1.xpose.msra.mxu0 %v297
      %473 = vmatprep.subr.mxu0 0.0
      %474 = vmatpush1.xpose.msra.mxu0 %v296
      %475 = vmatprep.subr.mxu0 0.0
      %476 = vmatpush1.xpose.msra.mxu0 %v295
      %477 = vmatprep.subr.mxu0 0.0
      %478 = vmatpush1.xpose.msra.mxu0 %v294
      %479 = vmatprep.subr.mxu0 0.0
      %480 = vmatpush1.xpose.msra.mxu0 %v293
      %481 = vmatprep.subr.mxu0 0.0
      %482 = vmatpush1.xpose.msra.mxu0 %v292
      %483 = vmatprep.subr.mxu0 0.0
      %484 = vmatpush1.xpose.msra.mxu0 %v291
      %485 = vmatprep.subr.mxu0 0.0
      %486 = vmatpush1.xpose.msra.mxu0 %v290
      %487 = vmatprep.subr.mxu0 0.0
      %488 = vmatpush1.xpose.msra.mxu0 %v289
      %489 = vmatprep.subr.mxu0 0.0
      %490 = vmatpush1.xpose.msra.mxu0 %v288
      %491 = vmatprep.subr.mxu0 0.0
      %492 = vmatpush1.xpose.msra.mxu0 %v287
      %493 = vmatprep.subr.mxu0 0.0
      %494 = vmatpush1.xpose.msra.mxu0 %v286
      %495 = vmatprep.subr.mxu0 0.0
      %496 = vmatpush1.xpose.msra.mxu0 %v285
      %497 = vmatprep.subr.mxu0 0.0
      %498 = vmatpush2.xpose.msra.mxu0 0.0
      %499 = vmatprep.subr.mxu0 0.0
      %500 = vmatpush2.xpose.msra.mxu0 0.0
      %501 = vmatprep.subr.mxu0 0.0
      %502 = vmatpush2.xpose.msra.mxu0 0.0
      %503 = vmatprep.subr.mxu0 0.0
      %504 = vmatpush2.xpose.msra.mxu0 0.0
      %505 = vmatprep.subr.mxu0 0.0
      %506 = vmatpush2.xpose.msra.mxu0 0.0
      %507 = vmatprep.subr.mxu0 0.0
      %508 = vmatpush2.xpose.msra.mxu0 0.0
      %509 = vmatprep.subr.mxu0 0.0
      %510 = vmatpush2.xpose.msra.mxu0 0.0
      %511 = vmatprep.subr.mxu0 0.0
      %512 = vmatpush2.xpose.msra.mxu0 0.0
      %513 = vmatprep.subr.mxu0 0.0
      %514 = vmatpush2.xpose.msra.mxu0 0.0
      %515 = vmatprep.subr.mxu0 0.0
      %516 = vmatpush2.xpose.msra.mxu0 0.0
      %517 = vmatprep.subr.mxu0 0.0
      %518 = vmatpush2.xpose.msra.mxu0 0.0
      %519 = vmatprep.subr.mxu0 0.0
      %520 = vmatpush2.xpose.msra.mxu0 0.0
      %521 = vmatprep.subr.mxu0 0.0
      %522 = vmatpush2.xpose.msra.mxu0 0.0
      %523 = vmatprep.subr.mxu0 0.0
      %524 = vmatpush2.xpose.msra.mxu0 0.0
      %525 = vmatprep.subr.mxu0 0.0
      %526 = vmatpush2.xpose.msra.mxu0 0.0
      %527 = vmatprep.subr.mxu0 0.0
      %528 = vmatpush2.xpose.msra.mxu0 0.0
      %529 = vmatprep.mubr.f32.mxu0 0.0
      %530 = vmatmul.mubr.f32.gmra.mxu0 %v413
      %v531 = vpop.f32.mrf.mxu0
      %v532 = vadd.f32 %v428, %v531
      %v533 = vpop.f32.mrf.mxu0
      %534 = vdwg.mxu0
      %535 = vmatprep.subr.mxu0 0.0
      %536 = vmatpush1.xpose.msra.mxu0 %v316
      %537 = vmatprep.subr.mxu0 0.0
      %538 = vmatpush1.xpose.msra.mxu0 %v315
      %539 = vmatprep.subr.mxu0 0.0
      %540 = vmatpush1.xpose.msra.mxu0 %v314
      %541 = vmatprep.subr.mxu0 0.0
      %542 = vmatpush1.xpose.msra.mxu0 %v313
      %543 = vmatprep.subr.mxu0 0.0
      %544 = vmatpush1.xpose.msra.mxu0 %v312
      %545 = vmatprep.subr.mxu0 0.0
      %546 = vmatpush1.xpose.msra.mxu0 %v311
      %547 = vmatprep.subr.mxu0 0.0
      %548 = vmatpush1.xpose.msra.mxu0 %v310
      %549 = vmatprep.subr.mxu0 0.0
      %550 = vmatpush1.xpose.msra.mxu0 %v309
      %551 = vmatprep.subr.mxu0 0.0
      %552 = vmatpush1.xpose.msra.mxu0 %v308
      %553 = vmatprep.subr.mxu0 0.0
      %554 = vmatpush1.xpose.msra.mxu0 %v307
      %555 = vmatprep.subr.mxu0 0.0
      %556 = vmatpush1.xpose.msra.mxu0 %v306
      %557 = vmatprep.subr.mxu0 0.0
      %558 = vmatpush1.xpose.msra.mxu0 %v305
      %559 = vmatprep.subr.mxu0 0.0
      %560 = vmatpush1.xpose.msra.mxu0 %v304
      %561 = vmatprep.subr.mxu0 0.0
      %562 = vmatpush1.xpose.msra.mxu0 %v303
      %563 = vmatprep.subr.mxu0 0.0
      %564 = vmatpush1.xpose.msra.mxu0 %v302
      %565 = vmatprep.subr.mxu0 0.0
      %566 = vmatpush1.xpose.msra.mxu0 %v301
      %567 = vmatprep.subr.mxu0 0.0
      %568 = vmatpush2.xpose.msra.mxu0 0.0
      %569 = vmatprep.subr.mxu0 0.0
      %570 = vmatpush2.xpose.msra.mxu0 0.0
      %571 = vmatprep.subr.mxu0 0.0
      %572 = vmatpush2.xpose.msra.mxu0 0.0
      %573 = vmatprep.subr.mxu0 0.0
      %574 = vmatpush2.xpose.msra.mxu0 0.0
      %575 = vmatprep.subr.mxu0 0.0
      %576 = vmatpush2.xpose.msra.mxu0 0.0
      %577 = vmatprep.subr.mxu0 0.0
      %578 = vmatpush2.xpose.msra.mxu0 0.0
      %579 = vmatprep.subr.mxu0 0.0
      %580 = vmatpush2.xpose.msra.mxu0 0.0
      %581 = vmatprep.subr.mxu0 0.0
      %582 = vmatpush2.xpose.msra.mxu0 0.0
      %583 = vmatprep.subr.mxu0 0.0
      %584 = vmatpush2.xpose.msra.mxu0 0.0
      %585 = vmatprep.subr.mxu0 0.0
      %586 = vmatpush2.xpose.msra.mxu0 0.0
      %587 = vmatprep.subr.mxu0 0.0
      %588 = vmatpush2.xpose.msra.mxu0 0.0
      %589 = vmatprep.subr.mxu0 0.0
      %590 = vmatpush2.xpose.msra.mxu0 0.0
      %591 = vmatprep.subr.mxu0 0.0
      %592 = vmatpush2.xpose.msra.mxu0 0.0
      %593 = vmatprep.subr.mxu0 0.0
      %594 = vmatpush2.xpose.msra.mxu0 0.0
      %595 = vmatprep.subr.mxu0 0.0
      %596 = vmatpush2.xpose.msra.mxu0 0.0
      %597 = vmatprep.subr.mxu0 0.0
      %598 = vmatpush2.xpose.msra.mxu0 0.0
      %599 = vmatprep.mubr.f32.mxu0 0.0
      %600 = vmatmul.mubr.f32.gmra.mxu0 %v413
      %v601 = vpop.f32.mrf.mxu0
      %v602 = vadd.f32 %v432, %v601
      %v603 = vpop.f32.mrf.mxu0
      %604 = vdwg.mxu0
      %605 = vmatprep.subr.mxu0 0.0
      %606 = vmatpush1.xpose.msra.mxu0 %v332
      %607 = vmatprep.subr.mxu0 0.0
      %608 = vmatpush1.xpose.msra.mxu0 %v331
      %609 = vmatprep.subr.mxu0 0.0
      %610 = vmatpush1.xpose.msra.mxu0 %v330
      %611 = vmatprep.subr.mxu0 0.0
      %612 = vmatpush1.xpose.msra.mxu0 %v329
      %613 = vmatprep.subr.mxu0 0.0
      %614 = vmatpush1.xpose.msra.mxu0 %v328
      %615 = vmatprep.subr.mxu0 0.0
      %616 = vmatpush1.xpose.msra.mxu0 %v327
      %617 = vmatprep.subr.mxu0 0.0
      %618 = vmatpush1.xpose.msra.mxu0 %v326
      %619 = vmatprep.subr.mxu0 0.0
      %620 = vmatpush1.xpose.msra.mxu0 %v325
      %621 = vmatprep.subr.mxu0 0.0
      %622 = vmatpush1.xpose.msra.mxu0 %v324
      %623 = vmatprep.subr.mxu0 0.0
      %624 = vmatpush1.xpose.msra.mxu0 %v323
      %625 = vmatprep.subr.mxu0 0.0
      %626 = vmatpush1.xpose.msra.mxu0 %v322
      %627 = vmatprep.subr.mxu0 0.0
      %628 = vmatpush1.xpose.msra.mxu0 %v321
      %629 = vmatprep.subr.mxu0 0.0
      %630 = vmatpush1.xpose.msra.mxu0 %v320
      %631 = vmatprep.subr.mxu0 0.0
      %632 = vmatpush1.xpose.msra.mxu0 %v319
      %633 = vmatprep.subr.mxu0 0.0
      %634 = vmatpush1.xpose.msra.mxu0 %v318
      %635 = vmatprep.subr.mxu0 0.0
      %636 = vmatpush1.xpose.msra.mxu0 %v317
      %637 = vmatprep.subr.mxu0 0.0
      %638 = vmatpush2.xpose.msra.mxu0 0.0
      %639 = vmatprep.subr.mxu0 0.0
      %640 = vmatpush2.xpose.msra.mxu0 0.0
      %641 = vmatprep.subr.mxu0 0.0
      %642 = vmatpush2.xpose.msra.mxu0 0.0
      %643 = vmatprep.subr.mxu0 0.0
      %644 = vmatpush2.xpose.msra.mxu0 0.0
      %645 = vmatprep.subr.mxu0 0.0
      %646 = vmatpush2.xpose.msra.mxu0 0.0
      %647 = vmatprep.subr.mxu0 0.0
      %648 = vmatpush2.xpose.msra.mxu0 0.0
      %649 = vmatprep.subr.mxu0 0.0
      %650 = vmatpush2.xpose.msra.mxu0 0.0
      %651 = vmatprep.subr.mxu0 0.0
      %652 = vmatpush2.xpose.msra.mxu0 0.0
      %653 = vmatprep.subr.mxu0 0.0
      %654 = vmatpush2.xpose.msra.mxu0 0.0
      %655 = vmatprep.subr.mxu0 0.0
      %656 = vmatpush2.xpose.msra.mxu0 0.0
      %657 = vmatprep.subr.mxu0 0.0
      %658 = vmatpush2.xpose.msra.mxu0 0.0
      %659 = vmatprep.subr.mxu0 0.0
      %660 = vmatpush2.xpose.msra.mxu0 0.0
      %661 = vmatprep.subr.mxu0 0.0
      %662 = vmatpush2.xpose.msra.mxu0 0.0
      %663 = vmatprep.subr.mxu0 0.0
      %664 = vmatpush2.xpose.msra.mxu0 0.0
      %665 = vmatprep.subr.mxu0 0.0
      %666 = vmatpush2.xpose.msra.mxu0 0.0
      %667 = vmatprep.subr.mxu0 0.0
      %668 = vmatpush2.xpose.msra.mxu0 0.0
      %669 = vmatprep.mubr.f32.mxu0 0.0
      %670 = vmatmul.mubr.f32.gmra.mxu0 %v413
      %v671 = vpop.f32.mrf.mxu0
      %v672 = vadd.f32 %v436, %v671
      %v673 = vpop.f32.mrf.mxu0
      %674 = vdwg.mxu0
      %675 = vmatprep.subr.mxu0 0.0
      %676 = vmatpush1.xpose.msra.mxu0 %v348
      %677 = vmatprep.subr.mxu0 0.0
      %678 = vmatpush1.xpose.msra.mxu0 %v347
      %679 = vmatprep.subr.mxu0 0.0
      %680 = vmatpush1.xpose.msra.mxu0 %v346
      %681 = vmatprep.subr.mxu0 0.0
      %682 = vmatpush1.xpose.msra.mxu0 %v345
      %683 = vmatprep.subr.mxu0 0.0
      %684 = vmatpush1.xpose.msra.mxu0 %v344
      %685 = vmatprep.subr.mxu0 0.0
      %686 = vmatpush1.xpose.msra.mxu0 %v343
      %687 = vmatprep.subr.mxu0 0.0
      %688 = vmatpush1.xpose.msra.mxu0 %v342
      %689 = vmatprep.subr.mxu0 0.0
      %690 = vmatpush1.xpose.msra.mxu0 %v341
      %691 = vmatprep.subr.mxu0 0.0
      %692 = vmatpush1.xpose.msra.mxu0 %v340
      %693 = vmatprep.subr.mxu0 0.0
      %694 = vmatpush1.xpose.msra.mxu0 %v339
      %695 = vmatprep.subr.mxu0 0.0
      %696 = vmatpush1.xpose.msra.mxu0 %v338
      %697 = vmatprep.subr.mxu0 0.0
      %698 = vmatpush1.xpose.msra.mxu0 %v337
      %699 = vmatprep.subr.mxu0 0.0
      %700 = vmatpush1.xpose.msra.mxu0 %v336
      %701 = vmatprep.subr.mxu0 0.0
      %702 = vmatpush1.xpose.msra.mxu0 %v335
      %703 = vmatprep.subr.mxu0 0.0
      %704 = vmatpush1.xpose.msra.mxu0 %v334
      %705 = vmatprep.subr.mxu0 0.0
      %706 = vmatpush1.xpose.msra.mxu0 %v333
      %707 = vmatprep.subr.mxu0 0.0
      %708 = vmatpush2.xpose.msra.mxu0 0.0
      %709 = vmatprep.subr.mxu0 0.0
      %710 = vmatpush2.xpose.msra.mxu0 0.0
      %711 = vmatprep.subr.mxu0 0.0
      %712 = vmatpush2.xpose.msra.mxu0 0.0
      %713 = vmatprep.subr.mxu0 0.0
      %714 = vmatpush2.xpose.msra.mxu0 0.0
      %715 = vmatprep.subr.mxu0 0.0
      %716 = vmatpush2.xpose.msra.mxu0 0.0
      %717 = vmatprep.subr.mxu0 0.0
      %718 = vmatpush2.xpose.msra.mxu0 0.0
      %719 = vmatprep.subr.mxu0 0.0
      %720 = vmatpush2.xpose.msra.mxu0 0.0
      %721 = vmatprep.subr.mxu0 0.0
      %722 = vmatpush2.xpose.msra.mxu0 0.0
      %723 = vmatprep.subr.mxu0 0.0
      %724 = vmatpush2.xpose.msra.mxu0 0.0
      %725 = vmatprep.subr.mxu0 0.0
      %726 = vmatpush2.xpose.msra.mxu0 0.0
      %727 = vmatprep.subr.mxu0 0.0
      %728 = vmatpush2.xpose.msra.mxu0 0.0
      %729 = vmatprep.subr.mxu0 0.0
      %730 = vmatpush2.xpose.msra.mxu0 0.0
      %731 = vmatprep.subr.mxu0 0.0
      %732 = vmatpush2.xpose.msra.mxu0 0.0
      %733 = vmatprep.subr.mxu0 0.0
      %734 = vmatpush2.xpose.msra.mxu0 0.0
      %735 = vmatprep.subr.mxu0 0.0
      %736 = vmatpush2.xpose.msra.mxu0 0.0
      %737 = vmatprep.subr.mxu0 0.0
      %738 = vmatpush2.xpose.msra.mxu0 0.0
      %739 = vmatprep.mubr.f32.mxu0 0.0
      %740 = vmatmul.mubr.f32.gmra.mxu0 %v413
      %v741 = vpop.f32.mrf.mxu0
      %v742 = vadd.f32 %v440, %v741
      %v743 = vpop.f32.mrf.mxu0
      %744 = vdwg.mxu0
      %745 = vmatprep.subr.mxu0 0.0
      %746 = vmatpush1.xpose.msra.mxu0 %v364
      %747 = vmatprep.subr.mxu0 0.0
      %748 = vmatpush1.xpose.msra.mxu0 %v363
      %749 = vmatprep.subr.mxu0 0.0
      %750 = vmatpush1.xpose.msra.mxu0 %v362
      %751 = vmatprep.subr.mxu0 0.0
      %752 = vmatpush1.xpose.msra.mxu0 %v361
      %753 = vmatprep.subr.mxu0 0.0
      %754 = vmatpush1.xpose.msra.mxu0 %v360
      %755 = vmatprep.subr.mxu0 0.0
      %756 = vmatpush1.xpose.msra.mxu0 %v359
      %757 = vmatprep.subr.mxu0 0.0
      %758 = vmatpush1.xpose.msra.mxu0 %v358
      %759 = vmatprep.subr.mxu0 0.0
      %760 = vmatpush1.xpose.msra.mxu0 %v357
      %761 = vmatprep.subr.mxu0 0.0
      %762 = vmatpush1.xpose.msra.mxu0 %v356
      %763 = vmatprep.subr.mxu0 0.0
      %764 = vmatpush1.xpose.msra.mxu0 %v355
      %765 = vmatprep.subr.mxu0 0.0
      %766 = vmatpush1.xpose.msra.mxu0 %v354
      %767 = vmatprep.subr.mxu0 0.0
      %768 = vmatpush1.xpose.msra.mxu0 %v353
      %769 = vmatprep.subr.mxu0 0.0
      %770 = vmatpush1.xpose.msra.mxu0 %v352
      %771 = vmatprep.subr.mxu0 0.0
      %772 = vmatpush1.xpose.msra.mxu0 %v351
      %773 = vmatprep.subr.mxu0 0.0
      %774 = vmatpush1.xpose.msra.mxu0 %v350
      %775 = vmatprep.subr.mxu0 0.0
      %776 = vmatpush1.xpose.msra.mxu0 %v349
      %777 = vmatprep.subr.mxu0 0.0
      %778 = vmatpush2.xpose.msra.mxu0 0.0
      %779 = vmatprep.subr.mxu0 0.0
      %780 = vmatpush2.xpose.msra.mxu0 0.0
      %781 = vmatprep.subr.mxu0 0.0
      %782 = vmatpush2.xpose.msra.mxu0 0.0
      %783 = vmatprep.subr.mxu0 0.0
      %784 = vmatpush2.xpose.msra.mxu0 0.0
      %785 = vmatprep.subr.mxu0 0.0
      %786 = vmatpush2.xpose.msra.mxu0 0.0
      %787 = vmatprep.subr.mxu0 0.0
      %788 = vmatpush2.xpose.msra.mxu0 0.0
      %789 = vmatprep.subr.mxu0 0.0
      %790 = vmatpush2.xpose.msra.mxu0 0.0
      %791 = vmatprep.subr.mxu0 0.0
      %792 = vmatpush2.xpose.msra.mxu0 0.0
      %793 = vmatprep.subr.mxu0 0.0
      %794 = vmatpush2.xpose.msra.mxu0 0.0
      %795 = vmatprep.subr.mxu0 0.0
      %796 = vmatpush2.xpose.msra.mxu0 0.0
      %797 = vmatprep.subr.mxu0 0.0
      %798 = vmatpush2.xpose.msra.mxu0 0.0
      %799 = vmatprep.subr.mxu0 0.0
      %800 = vmatpush2.xpose.msra.mxu0 0.0
      %801 = vmatprep.subr.mxu0 0.0
      %802 = vmatpush2.xpose.msra.mxu0 0.0
      %803 = vmatprep.subr.mxu0 0.0
      %804 = vmatpush2.xpose.msra.mxu0 0.0
      %805 = vmatprep.subr.mxu0 0.0
      %806 = vmatpush2.xpose.msra.mxu0 0.0
      %807 = vmatprep.subr.mxu0 0.0
      %808 = vmatpush2.xpose.msra.mxu0 0.0
      %809 = vmatprep.mubr.f32.mxu0 0.0
      %810 = vmatmul.mubr.f32.gmra.mxu0 %v413
      %v811 = vpop.f32.mrf.mxu0
      %v812 = vadd.f32 %v444, %v811
      %v813 = vpop.f32.mrf.mxu0
      %814 = vdwg.mxu0
      %815 = vmatprep.subr.mxu0 0.0
      %816 = vmatpush1.xpose.msra.mxu0 %v380
      %817 = vmatprep.subr.mxu0 0.0
      %818 = vmatpush1.xpose.msra.mxu0 %v379
      %819 = vmatprep.subr.mxu0 0.0
      %820 = vmatpush1.xpose.msra.mxu0 %v378
      %821 = vmatprep.subr.mxu0 0.0
      %822 = vmatpush1.xpose.msra.mxu0 %v377
      %823 = vmatprep.subr.mxu0 0.0
      %824 = vmatpush1.xpose.msra.mxu0 %v376
      %825 = vmatprep.subr.mxu0 0.0
      %826 = vmatpush1.xpose.msra.mxu0 %v375
      %827 = vmatprep.subr.mxu0 0.0
      %828 = vmatpush1.xpose.msra.mxu0 %v374
      %829 = vmatprep.subr.mxu0 0.0
      %830 = vmatpush1.xpose.msra.mxu0 %v373
      %831 = vmatprep.subr.mxu0 0.0
      %832 = vmatpush1.xpose.msra.mxu0 %v372
      %833 = vmatprep.subr.mxu0 0.0
      %834 = vmatpush1.xpose.msra.mxu0 %v371
      %835 = vmatprep.subr.mxu0 0.0
      %836 = vmatpush1.xpose.msra.mxu0 %v370
      %837 = vmatprep.subr.mxu0 0.0
      %838 = vmatpush1.xpose.msra.mxu0 %v369
      %839 = vmatprep.subr.mxu0 0.0
      %840 = vmatpush1.xpose.msra.mxu0 %v368
      %841 = vmatprep.subr.mxu0 0.0
      %842 = vmatpush1.xpose.msra.mxu0 %v367
      %843 = vmatprep.subr.mxu0 0.0
      %844 = vmatpush1.xpose.msra.mxu0 %v366
      %845 = vmatprep.subr.mxu0 0.0
      %846 = vmatpush1.xpose.msra.mxu0 %v365
      %847 = vmatprep.subr.mxu0 0.0
      %848 = vmatpush2.xpose.msra.mxu0 0.0
      %849 = vmatprep.subr.mxu0 0.0
      %850 = vmatpush2.xpose.msra.mxu0 0.0
      %851 = vmatprep.subr.mxu0 0.0
      %852 = vmatpush2.xpose.msra.mxu0 0.0
      %853 = vmatprep.subr.mxu0 0.0
      %854 = vmatpush2.xpose.msra.mxu0 0.0
      %855 = vmatprep.subr.mxu0 0.0
      %856 = vmatpush2.xpose.msra.mxu0 0.0
      %857 = vmatprep.subr.mxu0 0.0
      %858 = vmatpush2.xpose.msra.mxu0 0.0
      %859 = vmatprep.subr.mxu0 0.0
      %860 = vmatpush2.xpose.msra.mxu0 0.0
      %861 = vmatprep.subr.mxu0 0.0
      %862 = vmatpush2.xpose.msra.mxu0 0.0
      %863 = vmatprep.subr.mxu0 0.0
      %864 = vmatpush2.xpose.msra.mxu0 0.0
      %865 = vmatprep.subr.mxu0 0.0
      %866 = vmatpush2.xpose.msra.mxu0 0.0
      %867 = vmatprep.subr.mxu0 0.0
      %868 = vmatpush2.xpose.msra.mxu0 0.0
      %869 = vmatprep.subr.mxu0 0.0
      %870 = vmatpush2.xpose.msra.mxu0 0.0
      %871 = vmatprep.subr.mxu0 0.0
      %872 = vmatpush2.xpose.msra.mxu0 0.0
      %873 = vmatprep.subr.mxu0 0.0
      %874 = vmatpush2.xpose.msra.mxu0 0.0
      %875 = vmatprep.subr.mxu0 0.0
      %876 = vmatpush2.xpose.msra.mxu0 0.0
      %877 = vmatprep.subr.mxu0 0.0
      %878 = vmatpush2.xpose.msra.mxu0 0.0
      %879 = vmatprep.mubr.f32.mxu0 0.0
      %880 = vmatmul.mubr.f32.gmra.mxu0 %v413
      %v881 = vpop.f32.mrf.mxu0
      %v882 = vadd.f32 %v448, %v881
      %v883 = vpop.f32.mrf.mxu0
      %884 = vdwg.mxu0
      %885 = vmatprep.subr.mxu0 0.0
      %886 = vmatpush1.xpose.msra.mxu0 %v396
      %887 = vmatprep.subr.mxu0 0.0
      %888 = vmatpush1.xpose.msra.mxu0 %v395
      %889 = vmatprep.subr.mxu0 0.0
      %890 = vmatpush1.xpose.msra.mxu0 %v394
      %891 = vmatprep.subr.mxu0 0.0
      %892 = vmatpush1.xpose.msra.mxu0 %v393
      %893 = vmatprep.subr.mxu0 0.0
      %894 = vmatpush1.xpose.msra.mxu0 %v392
      %895 = vmatprep.subr.mxu0 0.0
      %896 = vmatpush1.xpose.msra.mxu0 %v391
      %897 = vmatprep.subr.mxu0 0.0
      %898 = vmatpush1.xpose.msra.mxu0 %v390
      %899 = vmatprep.subr.mxu0 0.0
      %900 = vmatpush1.xpose.msra.mxu0 %v389
      %901 = vmatprep.subr.mxu0 0.0
      %902 = vmatpush1.xpose.msra.mxu0 %v388
      %903 = vmatprep.subr.mxu0 0.0
      %904 = vmatpush1.xpose.msra.mxu0 %v387
      %905 = vmatprep.subr.mxu0 0.0
      %906 = vmatpush1.xpose.msra.mxu0 %v386
      %907 = vmatprep.subr.mxu0 0.0
      %908 = vmatpush1.xpose.msra.mxu0 %v385
      %909 = vmatprep.subr.mxu0 0.0
      %910 = vmatpush1.xpose.msra.mxu0 %v384
      %911 = vmatprep.subr.mxu0 0.0
      %912 = vmatpush1.xpose.msra.mxu0 %v383
      %913 = vmatprep.subr.mxu0 0.0
      %914 = vmatpush1.xpose.msra.mxu0 %v382
      %915 = vmatprep.subr.mxu0 0.0
      %916 = vmatpush1.xpose.msra.mxu0 %v381
      %917 = vmatprep.subr.mxu0 0.0
      %918 = vmatpush2.xpose.msra.mxu0 0.0
      %919 = vmatprep.subr.mxu0 0.0
      %920 = vmatpush2.xpose.msra.mxu0 0.0
      %921 = vmatprep.subr.mxu0 0.0
      %922 = vmatpush2.xpose.msra.mxu0 0.0
      %923 = vmatprep.subr.mxu0 0.0
      %924 = vmatpush2.xpose.msra.mxu0 0.0
      %925 = vmatprep.subr.mxu0 0.0
      %926 = vmatpush2.xpose.msra.mxu0 0.0
      %927 = vmatprep.subr.mxu0 0.0
      %928 = vmatpush2.xpose.msra.mxu0 0.0
      %929 = vmatprep.subr.mxu0 0.0
      %930 = vmatpush2.xpose.msra.mxu0 0.0
      %931 = vmatprep.subr.mxu0 0.0
      %932 = vmatpush2.xpose.msra.mxu0 0.0
      %933 = vmatprep.subr.mxu0 0.0
      %934 = vmatpush2.xpose.msra.mxu0 0.0
      %935 = vmatprep.subr.mxu0 0.0
      %936 = vmatpush2.xpose.msra.mxu0 0.0
      %937 = vmatprep.subr.mxu0 0.0
      %938 = vmatpush2.xpose.msra.mxu0 0.0
      %939 = vmatprep.subr.mxu0 0.0
      %940 = vmatpush2.xpose.msra.mxu0 0.0
      %941 = vmatprep.subr.mxu0 0.0
      %942 = vmatpush2.xpose.msra.mxu0 0.0
      %943 = vmatprep.subr.mxu0 0.0
      %944 = vmatpush2.xpose.msra.mxu0 0.0
      %945 = vmatprep.subr.mxu0 0.0
      %946 = vmatpush2.xpose.msra.mxu0 0.0
      %947 = vmatprep.subr.mxu0 0.0
      %948 = vmatpush2.xpose.msra.mxu0 0.0
      %949 = vmatprep.mubr.f32.mxu0 0.0
      %950 = vmatmul.mubr.f32.gmra.mxu0 %v413
      %v951 = vpop.f32.mrf.mxu0
      %v952 = vadd.f32 %v452, %v951
      %v953 = vpop.f32.mrf.mxu0
      %954 = vdwg.mxu0
      %955 = vmatprep.subr.mxu0 0.0
      %956 = vmatpush1.xpose.msra.mxu0 %v412
      %957 = vmatprep.subr.mxu0 0.0
      %958 = vmatpush1.xpose.msra.mxu0 %v411
      %959 = vmatprep.subr.mxu0 0.0
      %960 = vmatpush1.xpose.msra.mxu0 %v410
      %961 = vmatprep.subr.mxu0 0.0
      %962 = vmatpush1.xpose.msra.mxu0 %v409
      %963 = vmatprep.subr.mxu0 0.0
      %964 = vmatpush1.xpose.msra.mxu0 %v408
      %965 = vmatprep.subr.mxu0 0.0
      %966 = vmatpush1.xpose.msra.mxu0 %v407
      %967 = vmatprep.subr.mxu0 0.0
      %968 = vmatpush1.xpose.msra.mxu0 %v406
      %969 = vmatprep.subr.mxu0 0.0
      %970 = vmatpush1.xpose.msra.mxu0 %v405
      %971 = vmatprep.subr.mxu0 0.0
      %972 = vmatpush1.xpose.msra.mxu0 %v404
      %973 = vmatprep.subr.mxu0 0.0
      %974 = vmatpush1.xpose.msra.mxu0 %v403
      %975 = vmatprep.subr.mxu0 0.0
      %976 = vmatpush1.xpose.msra.mxu0 %v402
      %977 = vmatprep.subr.mxu0 0.0
      %978 = vmatpush1.xpose.msra.mxu0 %v401
      %979 = vmatprep.subr.mxu0 0.0
      %980 = vmatpush1.xpose.msra.mxu0 %v400
      %981 = vmatprep.subr.mxu0 0.0
      %982 = vmatpush1.xpose.msra.mxu0 %v399
      %983 = vmatprep.subr.mxu0 0.0
      %984 = vmatpush1.xpose.msra.mxu0 %v398
      %985 = vmatprep.subr.mxu0 0.0
      %986 = vmatpush1.xpose.msra.mxu0 %v397
      %987 = vmatprep.subr.mxu0 0.0
      %988 = vmatpush2.xpose.msra.mxu0 0.0
      %989 = vmatprep.subr.mxu0 0.0
      %990 = vmatpush2.xpose.msra.mxu0 0.0
      %991 = vmatprep.subr.mxu0 0.0
      %992 = vmatpush2.xpose.msra.mxu0 0.0
      %993 = vmatprep.subr.mxu0 0.0
      %994 = vmatpush2.xpose.msra.mxu0 0.0
      %995 = vmatprep.subr.mxu0 0.0
      %996 = vmatpush2.xpose.msra.mxu0 0.0
      %997 = vmatprep.subr.mxu0 0.0
      %998 = vmatpush2.xpose.msra.mxu0 0.0
      %999 = vmatprep.subr.mxu0 0.0
      %1000 = vmatpush2.xpose.msra.mxu0 0.0
      %1001 = vmatprep.subr.mxu0 0.0
      %1002 = vmatpush2.xpose.msra.mxu0 0.0
      %1003 = vmatprep.subr.mxu0 0.0
      %1004 = vmatpush2.xpose.msra.mxu0 0.0
      %1005 = vmatprep.subr.mxu0 0.0
      %1006 = vmatpush2.xpose.msra.mxu0 0.0
      %1007 = vmatprep.subr.mxu0 0.0
      %1008 = vmatpush2.xpose.msra.mxu0 0.0
      %1009 = vmatprep.subr.mxu0 0.0
      %1010 = vmatpush2.xpose.msra.mxu0 0.0
      %1011 = vmatprep.subr.mxu0 0.0
      %1012 = vmatpush2.xpose.msra.mxu0 0.0
      %1013 = vmatprep.subr.mxu0 0.0
      %1014 = vmatpush2.xpose.msra.mxu0 0.0
      %1015 = vmatprep.subr.mxu0 0.0
      %1016 = vmatpush2.xpose.msra.mxu0 0.0
      %1017 = vmatprep.subr.mxu0 0.0
      %1018 = vmatpush2.xpose.msra.mxu0 0.0
      %1019 = vmatprep.mubr.f32.mxu0 0.0
      %1020 = vmatmul.mubr.f32.gmra.mxu0 %v413
      %v1021 = vpop.f32.mrf.mxu0
      %v1022 = vadd.f32 %v456, %v1021
      %v1023 = vpop.f32.mrf.mxu0
      %1024 = vdwg.mxu0
      %v1025 = vld [vmem:[%s6] sm:$0x1]
      %v1026 = vadd.f32 %v532, %v1025
      %v1027 = vadd.f32 %v602, %v1025
      %v1028 = vadd.f32 %v672, %v1025
      %v1029 = vadd.f32 %v742, %v1025
      %v1030 = vadd.f32 %v812, %v1025
      %v1031 = vadd.f32 %v882, %v1025
      %v1032 = vadd.f32 %v952, %v1025
      %v1033 = vadd.f32 %v1022, %v1025
      %vm1034 = vcmask 1040384
      %v1035 = vsel %vm1034, %v1026, -inf
      %1036 = vmax.xlane.f32.xlu0 %v1035
      %v1037 = vpop.xlane.xlu0 %1036
      %v1038 = vsel %vm1034, %v1027, -inf
      %1039 = vmax.xlane.f32.xlu0 %v1038
      %v1040 = vpop.xlane.xlu0 %1039
      %v1041 = vsel %vm1034, %v1028, -inf
      %1042 = vmax.xlane.f32.xlu0 %v1041
      %v1043 = vpop.xlane.xlu0 %1042
      %v1044 = vsel %vm1034, %v1029, -inf
      %1045 = vmax.xlane.f32.xlu0 %v1044
      %v1046 = vpop.xlane.xlu0 %1045
      %v1047 = vsel %vm1034, %v1030, -inf
      %1048 = vmax.xlane.f32.xlu0 %v1047
      %v1049 = vpop.xlane.xlu0 %1048
      %v1050 = vsel %vm1034, %v1031, -inf
      %1051 = vmax.xlane.f32.xlu0 %v1050
      %v1052 = vpop.xlane.xlu0 %1051
      %v1053 = vsel %vm1034, %v1032, -inf
      %1054 = vmax.xlane.f32.xlu0 %v1053
      %v1055 = vpop.xlane.xlu0 %1054
      %v1056 = vsel %vm1034, %v1033, -inf
      %1057 = vmax.xlane.f32.xlu0 %v1056
      %v1058 = vpop.xlane.xlu0 %1057
      %v1059 = vsub.f32 %v1026, %v1037
      %v1060 = vsub.f32 %v1027, %v1040
      %v1061 = vsub.f32 %v1028, %v1043
      %v1062 = vsub.f32 %v1029, %v1046
      %v1063 = vsub.f32 %v1030, %v1049
      %v1064 = vsub.f32 %v1031, %v1052
      %v1065 = vsub.f32 %v1032, %v1055
      %v1066 = vsub.f32 %v1033, %v1058
      %v1067 = vmul.f32 %v1059, 1.442695
      %v1068 = vpow.pop %v1067
      %v1069 = vmul.f32 %v1060, 1.442695
      %v1070 = vpow.pop %v1069
      %v1071 = vmul.f32 %v1061, 1.442695
      %v1072 = vpow.pop %v1071
      %v1073 = vmul.f32 %v1062, 1.442695
      %v1074 = vpow.pop %v1073
      %v1075 = vmul.f32 %v1063, 1.442695
      %v1076 = vpow.pop %v1075
      %v1077 = vmul.f32 %v1064, 1.442695
      %v1078 = vpow.pop %v1077
      %v1079 = vmul.f32 %v1065, 1.442695
      %v1080 = vpow.pop %v1079
      %v1081 = vmul.f32 %v1066, 1.442695
      %v1082 = vpow.pop %v1081
      %v1083 = vsel %vm1034, %v1068, 0.0
      %1084 = vadd.xlane.f32.xlu0 %v1083
      %v1085 = vpop.xlane.xlu0 %1084
      %v1086 = vsel %vm1034, %v1070, 0.0
      %1087 = vadd.xlane.f32.xlu0 %v1086
      %v1088 = vpop.xlane.xlu0 %1087
      %v1089 = vsel %vm1034, %v1072, 0.0
      %1090 = vadd.xlane.f32.xlu0 %v1089
      %v1091 = vpop.xlane.xlu0 %1090
      %v1092 = vsel %vm1034, %v1074, 0.0
      %1093 = vadd.xlane.f32.xlu0 %v1092
      %v1094 = vpop.xlane.xlu0 %1093
      %v1095 = vsel %vm1034, %v1076, 0.0
      %1096 = vadd.xlane.f32.xlu0 %v1095
      %v1097 = vpop.xlane.xlu0 %1096
      %v1098 = vsel %vm1034, %v1078, 0.0
      %1099 = vadd.xlane.f32.xlu0 %v1098
      %v1100 = vpop.xlane.xlu0 %1099
      %v1101 = vsel %vm1034, %v1080, 0.0
      %1102 = vadd.xlane.f32.xlu0 %v1101
      %v1103 = vpop.xlane.xlu0 %1102
      %v1104 = vsel %vm1034, %v1082, 0.0
      %1105 = vadd.xlane.f32.xlu0 %v1104
      %v1106 = vpop.xlane.xlu0 %1105
      %v1107 = vrcp.pop %v1085
      %v1108 = vrcp.pop %v1088
      %v1109 = vrcp.pop %v1091
      %v1110 = vrcp.pop %v1094
      %v1111 = vrcp.pop %v1097
      %v1112 = vrcp.pop %v1100
      %v1113 = vrcp.pop %v1103
      %v1114 = vrcp.pop %v1106
      %v1115 = vmul.f32 %v1068, %v1107
      %v1116 = vmul.f32 %v1070, %v1108
      %v1117 = vmul.f32 %v1072, %v1109
      %v1118 = vmul.f32 %v1074, %v1110
      %v1119 = vmul.f32 %v1076, %v1111
      %v1120 = vmul.f32 %v1078, %v1112
      %v1121 = vmul.f32 %v1080, %v1113
      %v1122 = vmul.f32 %v1082, %v1114
      %1123 = vst [vmem:[#allocation23] sm:$0x1] %v1115
      %1124 = vst [vmem:[#allocation23 + $0x1] sm:$0x1] %v1116
      %1125 = vst [vmem:[#allocation23 + $0x2] sm:$0x1] %v1117
      %1126 = vst [vmem:[#allocation23 + $0x3] sm:$0x1] %v1118
      %1127 = vst [vmem:[#allocation23 + $0x4] sm:$0x1] %v1119
      %1128 = vst [vmem:[#allocation23 + $0x5] sm:$0x1] %v1120
      %1129 = vst [vmem:[#allocation23 + $0x6] sm:$0x1] %v1121
      %1130 = vst [vmem:[#allocation23 + $0x7] sm:$0x1] %v1122
      %1131 = vmatprep.subr.mxu0 0.0
      %1132 = vmatpush1.msra.mxu0 %v300
      %1133 = vmatprep.subr.mxu0 0.0
      %1134 = vmatpush1.msra.mxu0 %v299
      %1135 = vmatprep.subr.mxu0 0.0
      %1136 = vmatpush1.msra.mxu0 %v298
      %1137 = vmatprep.subr.mxu0 0.0
      %1138 = vmatpush1.msra.mxu0 %v297
      %1139 = vmatprep.subr.mxu0 0.0
      %1140 = vmatpush1.msra.mxu0 %v296
      %1141 = vmatprep.subr.mxu0 0.0
      %1142 = vmatpush1.msra.mxu0 %v295
      %1143 = vmatprep.subr.mxu0 0.0
      %1144 = vmatpush1.msra.mxu0 %v294
      %1145 = vmatprep.subr.mxu0 0.0
      %1146 = vmatpush1.msra.mxu0 %v293
      %1147 = vmatprep.subr.mxu0 0.0
      %1148 = vmatpush1.msra.mxu0 %v292
      %1149 = vmatprep.subr.mxu0 0.0
      %1150 = vmatpush1.msra.mxu0 %v291
      %1151 = vmatprep.subr.mxu0 0.0
      %1152 = vmatpush1.msra.mxu0 %v290
      %1153 = vmatprep.subr.mxu0 0.0
      %1154 = vmatpush1.msra.mxu0 %v289
      %1155 = vmatprep.subr.mxu0 0.0
      %1156 = vmatpush1.msra.mxu0 %v288
      %1157 = vmatprep.subr.mxu0 0.0
      %1158 = vmatpush1.msra.mxu0 %v287
      %1159 = vmatprep.subr.mxu0 0.0
      %1160 = vmatpush1.msra.mxu0 %v286
      %1161 = vmatprep.subr.mxu0 0.0
      %1162 = vmatpush1.msra.mxu0 %v285
      %1163 = vmatprep.subr.mxu0 0.0
      %1164 = vmatpush2.msra.mxu0 0.0
      %1165 = vmatprep.subr.mxu0 0.0
      %1166 = vmatpush2.msra.mxu0 0.0
      %1167 = vmatprep.subr.mxu0 0.0
      %1168 = vmatpush2.msra.mxu0 0.0
      %1169 = vmatprep.subr.mxu0 0.0
      %1170 = vmatpush2.msra.mxu0 0.0
      %1171 = vmatprep.subr.mxu0 0.0
      %1172 = vmatpush2.msra.mxu0 0.0
      %1173 = vmatprep.subr.mxu0 0.0
      %1174 = vmatpush2.msra.mxu0 0.0
      %1175 = vmatprep.subr.mxu0 0.0
      %1176 = vmatpush2.msra.mxu0 0.0
      %1177 = vmatprep.subr.mxu0 0.0
      %1178 = vmatpush2.msra.mxu0 0.0
      %1179 = vmatprep.subr.mxu0 0.0
      %1180 = vmatpush2.msra.mxu0 0.0
      %1181 = vmatprep.subr.mxu0 0.0
      %1182 = vmatpush2.msra.mxu0 0.0
      %1183 = vmatprep.subr.mxu0 0.0
      %1184 = vmatpush2.msra.mxu0 0.0
      %1185 = vmatprep.subr.mxu0 0.0
      %1186 = vmatpush2.msra.mxu0 0.0
      %1187 = vmatprep.subr.mxu0 0.0
      %1188 = vmatpush2.msra.mxu0 0.0
      %1189 = vmatprep.subr.mxu0 0.0
      %1190 = vmatpush2.msra.mxu0 0.0
      %1191 = vmatprep.subr.mxu0 0.0
      %1192 = vmatpush2.msra.mxu0 0.0
      %1193 = vmatprep.subr.mxu0 0.0
      %1194 = vmatpush2.msra.mxu0 0.0
      %1195 = vmatprep.mubr.f32.mxu0 0.0
      %1196 = vmatmul.mubr.f32.gmra.mxu0 %v1115
      %v1197 = vpop.f32.mrf.mxu0
      %v1198 = vadd.f32 0.0, %v1197
      %v1199 = vpop.f32.mrf.mxu0
      %1200 = vdwg.mxu0
      %1201 = vmatprep.subr.mxu0 0.0
      %1202 = vmatpush1.msra.mxu0 %v316
      %1203 = vmatprep.subr.mxu0 0.0
      %1204 = vmatpush1.msra.mxu0 %v315
      %1205 = vmatprep.subr.mxu0 0.0
      %1206 = vmatpush1.msra.mxu0 %v314
      %1207 = vmatprep.subr.mxu0 0.0
      %1208 = vmatpush1.msra.mxu0 %v313
      %1209 = vmatprep.subr.mxu0 0.0
      %1210 = vmatpush1.msra.mxu0 %v312
      %1211 = vmatprep.subr.mxu0 0.0
      %1212 = vmatpush1.msra.mxu0 %v311
      %1213 = vmatprep.subr.mxu0 0.0
      %1214 = vmatpush1.msra.mxu0 %v310
      %1215 = vmatprep.subr.mxu0 0.0
      %1216 = vmatpush1.msra.mxu0 %v309
      %1217 = vmatprep.subr.mxu0 0.0
      %1218 = vmatpush1.msra.mxu0 %v308
      %1219 = vmatprep.subr.mxu0 0.0
      %1220 = vmatpush1.msra.mxu0 %v307
      %1221 = vmatprep.subr.mxu0 0.0
      %1222 = vmatpush1.msra.mxu0 %v306
      %1223 = vmatprep.subr.mxu0 0.0
      %1224 = vmatpush1.msra.mxu0 %v305
      %1225 = vmatprep.subr.mxu0 0.0
      %1226 = vmatpush1.msra.mxu0 %v304
      %1227 = vmatprep.subr.mxu0 0.0
      %1228 = vmatpush1.msra.mxu0 %v303
      %1229 = vmatprep.subr.mxu0 0.0
      %1230 = vmatpush1.msra.mxu0 %v302
      %1231 = vmatprep.subr.mxu0 0.0
      %1232 = vmatpush1.msra.mxu0 %v301
      %1233 = vmatprep.subr.mxu0 0.0
      %1234 = vmatpush2.msra.mxu0 0.0
      %1235 = vmatprep.subr.mxu0 0.0
      %1236 = vmatpush2.msra.mxu0 0.0
      %1237 = vmatprep.subr.mxu0 0.0
      %1238 = vmatpush2.msra.mxu0 0.0
      %1239 = vmatprep.subr.mxu0 0.0
      %1240 = vmatpush2.msra.mxu0 0.0
      %1241 = vmatprep.subr.mxu0 0.0
      %1242 = vmatpush2.msra.mxu0 0.0
      %1243 = vmatprep.subr.mxu0 0.0
      %1244 = vmatpush2.msra.mxu0 0.0
      %1245 = vmatprep.subr.mxu0 0.0
      %1246 = vmatpush2.msra.mxu0 0.0
      %1247 = vmatprep.subr.mxu0 0.0
      %1248 = vmatpush2.msra.mxu0 0.0
      %1249 = vmatprep.subr.mxu0 0.0
      %1250 = vmatpush2.msra.mxu0 0.0
      %1251 = vmatprep.subr.mxu0 0.0
      %1252 = vmatpush2.msra.mxu0 0.0
      %1253 = vmatprep.subr.mxu0 0.0
      %1254 = vmatpush2.msra.mxu0 0.0
      %1255 = vmatprep.subr.mxu0 0.0
      %1256 = vmatpush2.msra.mxu0 0.0
      %1257 = vmatprep.subr.mxu0 0.0
      %1258 = vmatpush2.msra.mxu0 0.0
      %1259 = vmatprep.subr.mxu0 0.0
      %1260 = vmatpush2.msra.mxu0 0.0
      %1261 = vmatprep.subr.mxu0 0.0
      %1262 = vmatpush2.msra.mxu0 0.0
      %1263 = vmatprep.subr.mxu0 0.0
      %1264 = vmatpush2.msra.mxu0 0.0
      %1265 = vmatprep.mubr.f32.mxu0 0.0
      %1266 = vmatmul.mubr.f32.gmra.mxu0 %v1116
      %v1267 = vpop.f32.mrf.mxu0
      %v1268 = vadd.f32 0.0, %v1267
      %v1269 = vpop.f32.mrf.mxu0
      %1270 = vdwg.mxu0
      %1271 = vmatprep.subr.mxu0 0.0
      %1272 = vmatpush1.msra.mxu0 %v332
      %1273 = vmatprep.subr.mxu0 0.0
      %1274 = vmatpush1.msra.mxu0 %v331
      %1275 = vmatprep.subr.mxu0 0.0
      %1276 = vmatpush1.msra.mxu0 %v330
      %1277 = vmatprep.subr.mxu0 0.0
      %1278 = vmatpush1.msra.mxu0 %v329
      %1279 = vmatprep.subr.mxu0 0.0
      %1280 = vmatpush1.msra.mxu0 %v328
      %1281 = vmatprep.subr.mxu0 0.0
      %1282 = vmatpush1.msra.mxu0 %v327
      %1283 = vmatprep.subr.mxu0 0.0
      %1284 = vmatpush1.msra.mxu0 %v326
      %1285 = vmatprep.subr.mxu0 0.0
      %1286 = vmatpush1.msra.mxu0 %v325
      %1287 = vmatprep.subr.mxu0 0.0
      %1288 = vmatpush1.msra.mxu0 %v324
      %1289 = vmatprep.subr.mxu0 0.0
      %1290 = vmatpush1.msra.mxu0 %v323
      %1291 = vmatprep.subr.mxu0 0.0
      %1292 = vmatpush1.msra.mxu0 %v322
      %1293 = vmatprep.subr.mxu0 0.0
      %1294 = vmatpush1.msra.mxu0 %v321
      %1295 = vmatprep.subr.mxu0 0.0
      %1296 = vmatpush1.msra.mxu0 %v320
      %1297 = vmatprep.subr.mxu0 0.0
      %1298 = vmatpush1.msra.mxu0 %v319
      %1299 = vmatprep.subr.mxu0 0.0
      %1300 = vmatpush1.msra.mxu0 %v318
      %1301 = vmatprep.subr.mxu0 0.0
      %1302 = vmatpush1.msra.mxu0 %v317
      %1303 = vmatprep.subr.mxu0 0.0
      %1304 = vmatpush2.msra.mxu0 0.0
      %1305 = vmatprep.subr.mxu0 0.0
      %1306 = vmatpush2.msra.mxu0 0.0
      %1307 = vmatprep.subr.mxu0 0.0
      %1308 = vmatpush2.msra.mxu0 0.0
      %1309 = vmatprep.subr.mxu0 0.0
      %1310 = vmatpush2.msra.mxu0 0.0
      %1311 = vmatprep.subr.mxu0 0.0
      %1312 = vmatpush2.msra.mxu0 0.0
      %1313 = vmatprep.subr.mxu0 0.0
      %1314 = vmatpush2.msra.mxu0 0.0
      %1315 = vmatprep.subr.mxu0 0.0
      %1316 = vmatpush2.msra.mxu0 0.0
      %1317 = vmatprep.subr.mxu0 0.0
      %1318 = vmatpush2.msra.mxu0 0.0
      %1319 = vmatprep.subr.mxu0 0.0
      %1320 = vmatpush2.msra.mxu0 0.0
      %1321 = vmatprep.subr.mxu0 0.0
      %1322 = vmatpush2.msra.mxu0 0.0
      %1323 = vmatprep.subr.mxu0 0.0
      %1324 = vmatpush2.msra.mxu0 0.0
      %1325 = vmatprep.subr.mxu0 0.0
      %1326 = vmatpush2.msra.mxu0 0.0
      %1327 = vmatprep.subr.mxu0 0.0
      %1328 = vmatpush2.msra.mxu0 0.0
      %1329 = vmatprep.subr.mxu0 0.0
      %1330 = vmatpush2.msra.mxu0 0.0
      %1331 = vmatprep.subr.mxu0 0.0
      %1332 = vmatpush2.msra.mxu0 0.0
      %1333 = vmatprep.subr.mxu0 0.0
      %1334 = vmatpush2.msra.mxu0 0.0
      %1335 = vmatprep.mubr.f32.mxu0 0.0
      %1336 = vmatmul.mubr.f32.gmra.mxu0 %v1117
      %v1337 = vpop.f32.mrf.mxu0
      %v1338 = vadd.f32 0.0, %v1337
      %v1339 = vpop.f32.mrf.mxu0
      %1340 = vdwg.mxu0
      %1341 = vmatprep.subr.mxu0 0.0
      %1342 = vmatpush1.msra.mxu0 %v348
      %1343 = vmatprep.subr.mxu0 0.0
      %1344 = vmatpush1.msra.mxu0 %v347
      %1345 = vmatprep.subr.mxu0 0.0
      %1346 = vmatpush1.msra.mxu0 %v346
      %1347 = vmatprep.subr.mxu0 0.0
      %1348 = vmatpush1.msra.mxu0 %v345
      %1349 = vmatprep.subr.mxu0 0.0
      %1350 = vmatpush1.msra.mxu0 %v344
      %1351 = vmatprep.subr.mxu0 0.0
      %1352 = vmatpush1.msra.mxu0 %v343
      %1353 = vmatprep.subr.mxu0 0.0
      %1354 = vmatpush1.msra.mxu0 %v342
      %1355 = vmatprep.subr.mxu0 0.0
      %1356 = vmatpush1.msra.mxu0 %v341
      %1357 = vmatprep.subr.mxu0 0.0
      %1358 = vmatpush1.msra.mxu0 %v340
      %1359 = vmatprep.subr.mxu0 0.0
      %1360 = vmatpush1.msra.mxu0 %v339
      %1361 = vmatprep.subr.mxu0 0.0
      %1362 = vmatpush1.msra.mxu0 %v338
      %1363 = vmatprep.subr.mxu0 0.0
      %1364 = vmatpush1.msra.mxu0 %v337
      %1365 = vmatprep.subr.mxu0 0.0
      %1366 = vmatpush1.msra.mxu0 %v336
      %1367 = vmatprep.subr.mxu0 0.0
      %1368 = vmatpush1.msra.mxu0 %v335
      %1369 = vmatprep.subr.mxu0 0.0
      %1370 = vmatpush1.msra.mxu0 %v334
      %1371 = vmatprep.subr.mxu0 0.0
      %1372 = vmatpush1.msra.mxu0 %v333
      %1373 = vmatprep.subr.mxu0 0.0
      %1374 = vmatpush2.msra.mxu0 0.0
      %1375 = vmatprep.subr.mxu0 0.0
      %1376 = vmatpush2.msra.mxu0 0.0
      %1377 = vmatprep.subr.mxu0 0.0
      %1378 = vmatpush2.msra.mxu0 0.0
      %1379 = vmatprep.subr.mxu0 0.0
      %1380 = vmatpush2.msra.mxu0 0.0
      %1381 = vmatprep.subr.mxu0 0.0
      %1382 = vmatpush2.msra.mxu0 0.0
      %1383 = vmatprep.subr.mxu0 0.0
      %1384 = vmatpush2.msra.mxu0 0.0
      %1385 = vmatprep.subr.mxu0 0.0
      %1386 = vmatpush2.msra.mxu0 0.0
      %1387 = vmatprep.subr.mxu0 0.0
      %1388 = vmatpush2.msra.mxu0 0.0
      %1389 = vmatprep.subr.mxu0 0.0
      %1390 = vmatpush2.msra.mxu0 0.0
      %1391 = vmatprep.subr.mxu0 0.0
      %1392 = vmatpush2.msra.mxu0 0.0
      %1393 = vmatprep.subr.mxu0 0.0
      %1394 = vmatpush2.msra.mxu0 0.0
      %1395 = vmatprep.subr.mxu0 0.0
      %1396 = vmatpush2.msra.mxu0 0.0
      %1397 = vmatprep.subr.mxu0 0.0
      %1398 = vmatpush2.msra.mxu0 0.0
      %1399 = vmatprep.subr.mxu0 0.0
      %1400 = vmatpush2.msra.mxu0 0.0
      %1401 = vmatprep.subr.mxu0 0.0
      %1402 = vmatpush2.msra.mxu0 0.0
      %1403 = vmatprep.subr.mxu0 0.0
      %1404 = vmatpush2.msra.mxu0 0.0
      %1405 = vmatprep.mubr.f32.mxu0 0.0
      %1406 = vmatmul.mubr.f32.gmra.mxu0 %v1118
      %v1407 = vpop.f32.mrf.mxu0
      %v1408 = vadd.f32 0.0, %v1407
      %v1409 = vpop.f32.mrf.mxu0
      %1410 = vdwg.mxu0
      %1411 = vmatprep.subr.mxu0 0.0
      %1412 = vmatpush1.msra.mxu0 %v364
      %1413 = vmatprep.subr.mxu0 0.0
      %1414 = vmatpush1.msra.mxu0 %v363
      %1415 = vmatprep.subr.mxu0 0.0
      %1416 = vmatpush1.msra.mxu0 %v362
      %1417 = vmatprep.subr.mxu0 0.0
      %1418 = vmatpush1.msra.mxu0 %v361
      %1419 = vmatprep.subr.mxu0 0.0
      %1420 = vmatpush1.msra.mxu0 %v360
      %1421 = vmatprep.subr.mxu0 0.0
      %1422 = vmatpush1.msra.mxu0 %v359
      %1423 = vmatprep.subr.mxu0 0.0
      %1424 = vmatpush1.msra.mxu0 %v358
      %1425 = vmatprep.subr.mxu0 0.0
      %1426 = vmatpush1.msra.mxu0 %v357
      %1427 = vmatprep.subr.mxu0 0.0
      %1428 = vmatpush1.msra.mxu0 %v356
      %1429 = vmatprep.subr.mxu0 0.0
      %1430 = vmatpush1.msra.mxu0 %v355
      %1431 = vmatprep.subr.mxu0 0.0
      %1432 = vmatpush1.msra.mxu0 %v354
      %1433 = vmatprep.subr.mxu0 0.0
      %1434 = vmatpush1.msra.mxu0 %v353
      %1435 = vmatprep.subr.mxu0 0.0
      %1436 = vmatpush1.msra.mxu0 %v352
      %1437 = vmatprep.subr.mxu0 0.0
      %1438 = vmatpush1.msra.mxu0 %v351
      %1439 = vmatprep.subr.mxu0 0.0
      %1440 = vmatpush1.msra.mxu0 %v350
      %1441 = vmatprep.subr.mxu0 0.0
      %1442 = vmatpush1.msra.mxu0 %v349
      %1443 = vmatprep.subr.mxu0 0.0
      %1444 = vmatpush2.msra.mxu0 0.0
      %1445 = vmatprep.subr.mxu0 0.0
      %1446 = vmatpush2.msra.mxu0 0.0
      %1447 = vmatprep.subr.mxu0 0.0
      %1448 = vmatpush2.msra.mxu0 0.0
      %1449 = vmatprep.subr.mxu0 0.0
      %1450 = vmatpush2.msra.mxu0 0.0
      %1451 = vmatprep.subr.mxu0 0.0
      %1452 = vmatpush2.msra.mxu0 0.0
      %1453 = vmatprep.subr.mxu0 0.0
      %1454 = vmatpush2.msra.mxu0 0.0
      %1455 = vmatprep.subr.mxu0 0.0
      %1456 = vmatpush2.msra.mxu0 0.0
      %1457 = vmatprep.subr.mxu0 0.0
      %1458 = vmatpush2.msra.mxu0 0.0
      %1459 = vmatprep.subr.mxu0 0.0
      %1460 = vmatpush2.msra.mxu0 0.0
      %1461 = vmatprep.subr.mxu0 0.0
      %1462 = vmatpush2.msra.mxu0 0.0
      %1463 = vmatprep.subr.mxu0 0.0
      %1464 = vmatpush2.msra.mxu0 0.0
      %1465 = vmatprep.subr.mxu0 0.0
      %1466 = vmatpush2.msra.mxu0 0.0
      %1467 = vmatprep.subr.mxu0 0.0
      %1468 = vmatpush2.msra.mxu0 0.0
      %1469 = vmatprep.subr.mxu0 0.0
      %1470 = vmatpush2.msra.mxu0 0.0
      %1471 = vmatprep.subr.mxu0 0.0
      %1472 = vmatpush2.msra.mxu0 0.0
      %1473 = vmatprep.subr.mxu0 0.0
      %1474 = vmatpush2.msra.mxu0 0.0
      %1475 = vmatprep.mubr.f32.mxu0 0.0
      %1476 = vmatmul.mubr.f32.gmra.mxu0 %v1119
      %v1477 = vpop.f32.mrf.mxu0
      %v1478 = vadd.f32 0.0, %v1477
      %v1479 = vpop.f32.mrf.mxu0
      %1480 = vdwg.mxu0
      %1481 = vmatprep.subr.mxu0 0.0
      %1482 = vmatpush1.msra.mxu0 %v380
      %1483 = vmatprep.subr.mxu0 0.0
      %1484 = vmatpush1.msra.mxu0 %v379
      %1485 = vmatprep.subr.mxu0 0.0
      %1486 = vmatpush1.msra.mxu0 %v378
      %1487 = vmatprep.subr.mxu0 0.0
      %1488 = vmatpush1.msra.mxu0 %v377
      %1489 = vmatprep.subr.mxu0 0.0
      %1490 = vmatpush1.msra.mxu0 %v376
      %1491 = vmatprep.subr.mxu0 0.0
      %1492 = vmatpush1.msra.mxu0 %v375
      %1493 = vmatprep.subr.mxu0 0.0
      %1494 = vmatpush1.msra.mxu0 %v374
      %1495 = vmatprep.subr.mxu0 0.0
      %1496 = vmatpush1.msra.mxu0 %v373
      %1497 = vmatprep.subr.mxu0 0.0
      %1498 = vmatpush1.msra.mxu0 %v372
      %1499 = vmatprep.subr.mxu0 0.0
      %1500 = vmatpush1.msra.mxu0 %v371
      %1501 = vmatprep.subr.mxu0 0.0
      %1502 = vmatpush1.msra.mxu0 %v370
      %1503 = vmatprep.subr.mxu0 0.0
      %1504 = vmatpush1.msra.mxu0 %v369
      %1505 = vmatprep.subr.mxu0 0.0
      %1506 = vmatpush1.msra.mxu0 %v368
      %1507 = vmatprep.subr.mxu0 0.0
      %1508 = vmatpush1.msra.mxu0 %v367
      %1509 = vmatprep.subr.mxu0 0.0
      %1510 = vmatpush1.msra.mxu0 %v366
      %1511 = vmatprep.subr.mxu0 0.0
      %1512 = vmatpush1.msra.mxu0 %v365
      %1513 = vmatprep.subr.mxu0 0.0
      %1514 = vmatpush2.msra.mxu0 0.0
      %1515 = vmatprep.subr.mxu0 0.0
      %1516 = vmatpush2.msra.mxu0 0.0
      %1517 = vmatprep.subr.mxu0 0.0
      %1518 = vmatpush2.msra.mxu0 0.0
      %1519 = vmatprep.subr.mxu0 0.0
      %1520 = vmatpush2.msra.mxu0 0.0
      %1521 = vmatprep.subr.mxu0 0.0
      %1522 = vmatpush2.msra.mxu0 0.0
      %1523 = vmatprep.subr.mxu0 0.0
      %1524 = vmatpush2.msra.mxu0 0.0
      %1525 = vmatprep.subr.mxu0 0.0
      %1526 = vmatpush2.msra.mxu0 0.0
      %1527 = vmatprep.subr.mxu0 0.0
      %1528 = vmatpush2.msra.mxu0 0.0
      %1529 = vmatprep.subr.mxu0 0.0
      %1530 = vmatpush2.msra.mxu0 0.0
      %1531 = vmatprep.subr.mxu0 0.0
      %1532 = vmatpush2.msra.mxu0 0.0
      %1533 = vmatprep.subr.mxu0 0.0
      %1534 = vmatpush2.msra.mxu0 0.0
      %1535 = vmatprep.subr.mxu0 0.0
      %1536 = vmatpush2.msra.mxu0 0.0
      %1537 = vmatprep.subr.mxu0 0.0
      %1538 = vmatpush2.msra.mxu0 0.0
      %1539 = vmatprep.subr.mxu0 0.0
      %1540 = vmatpush2.msra.mxu0 0.0
      %1541 = vmatprep.subr.mxu0 0.0
      %1542 = vmatpush2.msra.mxu0 0.0
      %1543 = vmatprep.subr.mxu0 0.0
      %1544 = vmatpush2.msra.mxu0 0.0
      %1545 = vmatprep.mubr.f32.mxu0 0.0
      %1546 = vmatmul.mubr.f32.gmra.mxu0 %v1120
      %v1547 = vpop.f32.mrf.mxu0
      %v1548 = vadd.f32 0.0, %v1547
      %v1549 = vpop.f32.mrf.mxu0
      %1550 = vdwg.mxu0
      %1551 = vmatprep.subr.mxu0 0.0
      %1552 = vmatpush1.msra.mxu0 %v396
      %1553 = vmatprep.subr.mxu0 0.0
      %1554 = vmatpush1.msra.mxu0 %v395
      %1555 = vmatprep.subr.mxu0 0.0
      %1556 = vmatpush1.msra.mxu0 %v394
      %1557 = vmatprep.subr.mxu0 0.0
      %1558 = vmatpush1.msra.mxu0 %v393
      %1559 = vmatprep.subr.mxu0 0.0
      %1560 = vmatpush1.msra.mxu0 %v392
      %1561 = vmatprep.subr.mxu0 0.0
      %1562 = vmatpush1.msra.mxu0 %v391
      %1563 = vmatprep.subr.mxu0 0.0
      %1564 = vmatpush1.msra.mxu0 %v390
      %1565 = vmatprep.subr.mxu0 0.0
      %1566 = vmatpush1.msra.mxu0 %v389
      %1567 = vmatprep.subr.mxu0 0.0
      %1568 = vmatpush1.msra.mxu0 %v388
      %1569 = vmatprep.subr.mxu0 0.0
      %1570 = vmatpush1.msra.mxu0 %v387
      %1571 = vmatprep.subr.mxu0 0.0
      %1572 = vmatpush1.msra.mxu0 %v386
      %1573 = vmatprep.subr.mxu0 0.0
      %1574 = vmatpush1.msra.mxu0 %v385
      %1575 = vmatprep.subr.mxu0 0.0
      %1576 = vmatpush1.msra.mxu0 %v384
      %1577 = vmatprep.subr.mxu0 0.0
      %1578 = vmatpush1.msra.mxu0 %v383
      %1579 = vmatprep.subr.mxu0 0.0
      %1580 = vmatpush1.msra.mxu0 %v382
      %1581 = vmatprep.subr.mxu0 0.0
      %1582 = vmatpush1.msra.mxu0 %v381
      %1583 = vmatprep.subr.mxu0 0.0
      %1584 = vmatpush2.msra.mxu0 0.0
      %1585 = vmatprep.subr.mxu0 0.0
      %1586 = vmatpush2.msra.mxu0 0.0
      %1587 = vmatprep.subr.mxu0 0.0
      %1588 = vmatpush2.msra.mxu0 0.0
      %1589 = vmatprep.subr.mxu0 0.0
      %1590 = vmatpush2.msra.mxu0 0.0
      %1591 = vmatprep.subr.mxu0 0.0
      %1592 = vmatpush2.msra.mxu0 0.0
      %1593 = vmatprep.subr.mxu0 0.0
      %1594 = vmatpush2.msra.mxu0 0.0
      %1595 = vmatprep.subr.mxu0 0.0
      %1596 = vmatpush2.msra.mxu0 0.0
      %1597 = vmatprep.subr.mxu0 0.0
      %1598 = vmatpush2.msra.mxu0 0.0
      %1599 = vmatprep.subr.mxu0 0.0
      %1600 = vmatpush2.msra.mxu0 0.0
      %1601 = vmatprep.subr.mxu0 0.0
      %1602 = vmatpush2.msra.mxu0 0.0
      %1603 = vmatprep.subr.mxu0 0.0
      %1604 = vmatpush2.msra.mxu0 0.0
      %1605 = vmatprep.subr.mxu0 0.0
      %1606 = vmatpush2.msra.mxu0 0.0
      %1607 = vmatprep.subr.mxu0 0.0
      %1608 = vmatpush2.msra.mxu0 0.0
      %1609 = vmatprep.subr.mxu0 0.0
      %1610 = vmatpush2.msra.mxu0 0.0
      %1611 = vmatprep.subr.mxu0 0.0
      %1612 = vmatpush2.msra.mxu0 0.0
      %1613 = vmatprep.subr.mxu0 0.0
      %1614 = vmatpush2.msra.mxu0 0.0
      %1615 = vmatprep.mubr.f32.mxu0 0.0
      %1616 = vmatmul.mubr.f32.gmra.mxu0 %v1121
      %v1617 = vpop.f32.mrf.mxu0
      %v1618 = vadd.f32 0.0, %v1617
      %v1619 = vpop.f32.mrf.mxu0
      %1620 = vdwg.mxu0
      %1621 = vmatprep.subr.mxu0 0.0
      %1622 = vmatpush1.msra.mxu0 %v412
      %1623 = vmatprep.subr.mxu0 0.0
      %1624 = vmatpush1.msra.mxu0 %v411
      %1625 = vmatprep.subr.mxu0 0.0
      %1626 = vmatpush1.msra.mxu0 %v410
      %1627 = vmatprep.subr.mxu0 0.0
      %1628 = vmatpush1.msra.mxu0 %v409
      %1629 = vmatprep.subr.mxu0 0.0
      %1630 = vmatpush1.msra.mxu0 %v408
      %1631 = vmatprep.subr.mxu0 0.0
      %1632 = vmatpush1.msra.mxu0 %v407
      %1633 = vmatprep.subr.mxu0 0.0
      %1634 = vmatpush1.msra.mxu0 %v406
      %1635 = vmatprep.subr.mxu0 0.0
      %1636 = vmatpush1.msra.mxu0 %v405
      %1637 = vmatprep.subr.mxu0 0.0
      %1638 = vmatpush1.msra.mxu0 %v404
      %1639 = vmatprep.subr.mxu0 0.0
      %1640 = vmatpush1.msra.mxu0 %v403
      %1641 = vmatprep.subr.mxu0 0.0
      %1642 = vmatpush1.msra.mxu0 %v402
      %1643 = vmatprep.subr.mxu0 0.0
      %1644 = vmatpush1.msra.mxu0 %v401
      %1645 = vmatprep.subr.mxu0 0.0
      %1646 = vmatpush1.msra.mxu0 %v400
      %1647 = vmatprep.subr.mxu0 0.0
      %1648 = vmatpush1.msra.mxu0 %v399
      %1649 = vmatprep.subr.mxu0 0.0
      %1650 = vmatpush1.msra.mxu0 %v398
      %1651 = vmatprep.subr.mxu0 0.0
      %1652 = vmatpush1.msra.mxu0 %v397
      %1653 = vmatprep.subr.mxu0 0.0
      %1654 = vmatpush2.msra.mxu0 0.0
      %1655 = vmatprep.subr.mxu0 0.0
      %1656 = vmatpush2.msra.mxu0 0.0
      %1657 = vmatprep.subr.mxu0 0.0
      %1658 = vmatpush2.msra.mxu0 0.0
      %1659 = vmatprep.subr.mxu0 0.0
      %1660 = vmatpush2.msra.mxu0 0.0
      %1661 = vmatprep.subr.mxu0 0.0
      %1662 = vmatpush2.msra.mxu0 0.0
      %1663 = vmatprep.subr.mxu0 0.0
      %1664 = vmatpush2.msra.mxu0 0.0
      %1665 = vmatprep.subr.mxu0 0.0
      %1666 = vmatpush2.msra.mxu0 0.0
      %1667 = vmatprep.subr.mxu0 0.0
      %1668 = vmatpush2.msra.mxu0 0.0
      %1669 = vmatprep.subr.mxu0 0.0
      %1670 = vmatpush2.msra.mxu0 0.0
      %1671 = vmatprep.subr.mxu0 0.0
      %1672 = vmatpush2.msra.mxu0 0.0
      %1673 = vmatprep.subr.mxu0 0.0
      %1674 = vmatpush2.msra.mxu0 0.0
      %1675 = vmatprep.subr.mxu0 0.0
      %1676 = vmatpush2.msra.mxu0 0.0
      %1677 = vmatprep.subr.mxu0 0.0
      %1678 = vmatpush2.msra.mxu0 0.0
      %1679 = vmatprep.subr.mxu0 0.0
      %1680 = vmatpush2.msra.mxu0 0.0
      %1681 = vmatprep.subr.mxu0 0.0
      %1682 = vmatpush2.msra.mxu0 0.0
      %1683 = vmatprep.subr.mxu0 0.0
      %1684 = vmatpush2.msra.mxu0 0.0
      %1685 = vmatprep.mubr.f32.mxu0 0.0
      %1686 = vmatmul.mubr.f32.gmra.mxu0 %v1122
      %v1687 = vpop.f32.mrf.mxu0
      %v1688 = vadd.f32 0.0, %v1687
      %v1689 = vpop.f32.mrf.mxu0
      %1690 = vdwg.mxu0
      %v1691 = vadd.f32 %v1198, 0.0
      %v1692 = vadd.f32 %v1268, 0.0
      %v1693 = vadd.f32 %v1338, 0.0
      %v1694 = vadd.f32 %v1408, 0.0
      %v1695 = vadd.f32 %v1478, 0.0
      %v1696 = vadd.f32 %v1548, 0.0
      %v1697 = vadd.f32 %v1618, 0.0
      %v1698 = vadd.f32 %v1688, 0.0
      %v1699 = vld [vmem:[#allocation2] sm:$0xff]
      %v1708 = vrot.slane %v1692, 7
      %vm1709 = vcmask 1041409
      %v1710 = vsel %vm1709, %v1708, %v1691
      %v1711 = vrot.slane %v1693, 6
      %vm1712 = vcmask 1042434
      %v1713 = vsel %vm1712, %v1711, %v1710
      %v1714 = vrot.slane %v1694, 5
      %vm1715 = vcmask 1043459
      %v1716 = vsel %vm1715, %v1714, %v1713
      %v1717 = vrot.slane %v1695, 4
      %vm1718 = vcmask 1044484
      %v1719 = vsel %vm1718, %v1717, %v1716
      %v1720 = vrot.slane %v1696, 3
      %vm1721 = vcmask 1045509
      %v1722 = vsel %vm1721, %v1720, %v1719
      %v1723 = vrot.slane %v1697, 2
      %vm1724 = vcmask 1046534
      %v1725 = vsel %vm1724, %v1723, %v1722
      %v1726 = vrot.slane %v1698, 1
      %vm1727 = vcmask 1047559
      %v1728 = vsel %vm1727, %v1726, %v1725
      %v1730 = vld [vmem:[#allocation14] sm:$0xff]
      %v1731 = vld [vmem:[#allocation14 + $0x8] sm:$0xff]
      %v1732 = vld [vmem:[#allocation14 + $0x10] sm:$0xff]
      %v1733 = vld [vmem:[#allocation14 + $0x18] sm:$0xff]
      %v1734 = vld [vmem:[#allocation14 + $0x20] sm:$0xff]
      %v1735 = vld [vmem:[#allocation14 + $0x28] sm:$0xff]
      %v1736 = vld [vmem:[#allocation14 + $0x30] sm:$0xff]
      %v1737 = vld [vmem:[#allocation14 + $0x38] sm:$0xff]
      %v1738 = vld [vmem:[#allocation14 + $0x40] sm:$0xff]
      %v1739 = vld [vmem:[#allocation14 + $0x48] sm:$0xff]
      %v1740 = vld [vmem:[#allocation14 + $0x50] sm:$0xff]
      %v1741 = vld [vmem:[#allocation14 + $0x58] sm:$0xff]
      %v1742 = vld [vmem:[#allocation14 + $0x60] sm:$0xff]
      %v1743 = vld [vmem:[#allocation14 + $0x68] sm:$0xff]
      %v1744 = vld [vmem:[#allocation14 + $0x70] sm:$0xff]
      %v1745 = vld [vmem:[#allocation14 + $0x78] sm:$0xff]
      %v1746 = vld [vmem:[#allocation14 + $0x80] sm:$0xff]
      %v1747 = vld [vmem:[#allocation14 + $0x88] sm:$0xff]
      %v1748 = vld [vmem:[#allocation14 + $0x90] sm:$0xff]
      %v1749 = vld [vmem:[#allocation14 + $0x98] sm:$0xff]
      %v1750 = vld [vmem:[#allocation14 + $0xa0] sm:$0xff]
      %v1751 = vld [vmem:[#allocation14 + $0xa8] sm:$0xff]
      %v1752 = vld [vmem:[#allocation14 + $0xb0] sm:$0xff]
      %v1753 = vld [vmem:[#allocation14 + $0xb8] sm:$0xff]
      %v1754 = vld [vmem:[#allocation14 + $0xc0] sm:$0xff]
      %v1755 = vld [vmem:[#allocation14 + $0xc8] sm:$0xff]
      %v1756 = vld [vmem:[#allocation14 + $0xd0] sm:$0xff]
      %v1757 = vld [vmem:[#allocation14 + $0xd8] sm:$0xff]
      %v1758 = vld [vmem:[#allocation14 + $0xe0] sm:$0xff]
      %v1759 = vld [vmem:[#allocation14 + $0xe8] sm:$0xff]
      %v1760 = vld [vmem:[#allocation14 + $0xf0] sm:$0xff]
      %v1761 = vld [vmem:[#allocation14 + $0xf8] sm:$0xff]
      %v1762 = vld [vmem:[%s8] sm:$0x1]
      %v1764 = vlaneseq
      %v1765 = vshrl.u32 %v1764, 7
      %v1766 = vsub.s32 0, %v1765
      %v1767 = vrot.slane %v1762, %v1766
      %1769 = vmatprep.subr.mxu0 0.0
      %1770 = vmatpush1.msra.mxu0 %v1745
      %1771 = vmatprep.subr.mxu0 0.0
      %1772 = vmatpush1.msra.mxu0 %v1744
      %1773 = vmatprep.subr.mxu0 0.0
      %1774 = vmatpush1.msra.mxu0 %v1743
      %1775 = vmatprep.subr.mxu0 0.0
      %1776 = vmatpush1.msra.mxu0 %v1742
      %1777 = vmatprep.subr.mxu0 0.0
      %1778 = vmatpush1.msra.mxu0 %v1741
      %1779 = vmatprep.subr.mxu0 0.0
      %1780 = vmatpush1.msra.mxu0 %v1740
      %1781 = vmatprep.subr.mxu0 0.0
      %1782 = vmatpush1.msra.mxu0 %v1739
      %1783 = vmatprep.subr.mxu0 0.0
      %1784 = vmatpush1.msra.mxu0 %v1738
      %1785 = vmatprep.subr.mxu0 0.0
      %1786 = vmatpush1.msra.mxu0 %v1737
      %1787 = vmatprep.subr.mxu0 0.0
      %1788 = vmatpush1.msra.mxu0 %v1736
      %1789 = vmatprep.subr.mxu0 0.0
      %1790 = vmatpush1.msra.mxu0 %v1735
      %1791 = vmatprep.subr.mxu0 0.0
      %1792 = vmatpush1.msra.mxu0 %v1734
      %1793 = vmatprep.subr.mxu0 0.0
      %1794 = vmatpush1.msra.mxu0 %v1733
      %1795 = vmatprep.subr.mxu0 0.0
      %1796 = vmatpush1.msra.mxu0 %v1732
      %1797 = vmatprep.subr.mxu0 0.0
      %1798 = vmatpush1.msra.mxu0 %v1731
      %1799 = vmatprep.subr.mxu0 0.0
      %1800 = vmatpush1.msra.mxu0 %v1730
      %1801 = vmatprep.subr.mxu0 0.0
      %1802 = vmatpush2.msra.mxu0 %v1761
      %1803 = vmatprep.subr.mxu0 0.0
      %1804 = vmatpush2.msra.mxu0 %v1760
      %1805 = vmatprep.subr.mxu0 0.0
      %1806 = vmatpush2.msra.mxu0 %v1759
      %1807 = vmatprep.subr.mxu0 0.0
      %1808 = vmatpush2.msra.mxu0 %v1758
      %1809 = vmatprep.subr.mxu0 0.0
      %1810 = vmatpush2.msra.mxu0 %v1757
      %1811 = vmatprep.subr.mxu0 0.0
      %1812 = vmatpush2.msra.mxu0 %v1756
      %1813 = vmatprep.subr.mxu0 0.0
      %1814 = vmatpush2.msra.mxu0 %v1755
      %1815 = vmatprep.subr.mxu0 0.0
      %1816 = vmatpush2.msra.mxu0 %v1754
      %1817 = vmatprep.subr.mxu0 0.0
      %1818 = vmatpush2.msra.mxu0 %v1753
      %1819 = vmatprep.subr.mxu0 0.0
      %1820 = vmatpush2.msra.mxu0 %v1752
      %1821 = vmatprep.subr.mxu0 0.0
      %1822 = vmatpush2.msra.mxu0 %v1751
      %1823 = vmatprep.subr.mxu0 0.0
      %1824 = vmatpush2.msra.mxu0 %v1750
      %1825 = vmatprep.subr.mxu0 0.0
      %1826 = vmatpush2.msra.mxu0 %v1749
      %1827 = vmatprep.subr.mxu0 0.0
      %1828 = vmatpush2.msra.mxu0 %v1748
      %1829 = vmatprep.subr.mxu0 0.0
      %1830 = vmatpush2.msra.mxu0 %v1747
      %1831 = vmatprep.subr.mxu0 0.0
      %1832 = vmatpush2.msra.mxu0 %v1746
      %1833 = vmatprep.mubr.f32.mxu0 %v1728
      %1834 = vmatmul.mubr.f32.gmra.mxu0 %v1699
      %v1835 = vpop.f32.mrf.mxu0
      %v1836 = vadd.f32 %v1767, %v1835
      %v1837 = vpop.f32.mrf.mxu0
      %1838 = vdwg.mxu0
      %v1839 = vmax.f32 %v1836, 0.0
      %v1840 = vld [vmem:[#allocation15] sm:$0xff]
      %v1841 = vld [vmem:[#allocation15 + $0x8] sm:$0xff]
      %v1842 = vld [vmem:[#allocation15 + $0x10] sm:$0xff]
      %v1843 = vld [vmem:[#allocation15 + $0x18] sm:$0xff]
      %v1844 = vld [vmem:[#allocation15 + $0x20] sm:$0xff]
      %v1845 = vld [vmem:[#allocation15 + $0x28] sm:$0xff]
      %v1846 = vld [vmem:[#allocation15 + $0x30] sm:$0xff]
      %v1847 = vld [vmem:[#allocation15 + $0x38] sm:$0xff]
      %v1848 = vld [vmem:[#allocation15 + $0x40] sm:$0xff]
      %v1849 = vld [vmem:[#allocation15 + $0x48] sm:$0xff]
      %v1850 = vld [vmem:[#allocation15 + $0x50] sm:$0xff]
      %v1851 = vld [vmem:[#allocation15 + $0x58] sm:$0xff]
      %v1852 = vld [vmem:[#allocation15 + $0x60] sm:$0xff]
      %v1853 = vld [vmem:[#allocation15 + $0x68] sm:$0xff]
      %v1854 = vld [vmem:[#allocation15 + $0x70] sm:$0xff]
      %v1855 = vld [vmem:[#allocation15 + $0x78] sm:$0xff]
      %v1856 = vld [vmem:[#allocation15 + $0x80] sm:$0xff]
      %v1857 = vld [vmem:[#allocation15 + $0x88] sm:$0xff]
      %v1858 = vld [vmem:[#allocation15 + $0x90] sm:$0xff]
      %v1859 = vld [vmem:[#allocation15 + $0x98] sm:$0xff]
      %v1860 = vld [vmem:[#allocation15 + $0xa0] sm:$0xff]
      %v1861 = vld [vmem:[#allocation15 + $0xa8] sm:$0xff]
      %v1862 = vld [vmem:[#allocation15 + $0xb0] sm:$0xff]
      %v1863 = vld [vmem:[#allocation15 + $0xb8] sm:$0xff]
      %v1864 = vld [vmem:[#allocation15 + $0xc0] sm:$0xff]
      %v1865 = vld [vmem:[#allocation15 + $0xc8] sm:$0xff]
      %v1866 = vld [vmem:[#allocation15 + $0xd0] sm:$0xff]
      %v1867 = vld [vmem:[#allocation15 + $0xd8] sm:$0xff]
      %v1868 = vld [vmem:[#allocation15 + $0xe0] sm:$0xff]
      %v1869 = vld [vmem:[#allocation15 + $0xe8] sm:$0xff]
      %v1870 = vld [vmem:[#allocation15 + $0xf0] sm:$0xff]
      %v1871 = vld [vmem:[#allocation15 + $0xf8] sm:$0xff]
      %v1872 = vld [vmem:[#allocation15 + $0x100] sm:$0xff]
      %v1873 = vld [vmem:[#allocation15 + $0x108] sm:$0xff]
      %v1874 = vld [vmem:[#allocation15 + $0x110] sm:$0xff]
      %v1875 = vld [vmem:[#allocation15 + $0x118] sm:$0xff]
      %v1876 = vld [vmem:[#allocation15 + $0x120] sm:$0xff]
      %v1877 = vld [vmem:[#allocation15 + $0x128] sm:$0xff]
      %v1878 = vld [vmem:[#allocation15 + $0x130] sm:$0xff]
      %v1879 = vld [vmem:[#allocation15 + $0x138] sm:$0xff]
      %v1880 = vld [vmem:[#allocation15 + $0x140] sm:$0xff]
      %v1881 = vld [vmem:[#allocation15 + $0x148] sm:$0xff]
      %v1882 = vld [vmem:[#allocation15 + $0x150] sm:$0xff]
      %v1883 = vld [vmem:[#allocation15 + $0x158] sm:$0xff]
      %v1884 = vld [vmem:[#allocation15 + $0x160] sm:$0xff]
      %v1885 = vld [vmem:[#allocation15 + $0x168] sm:$0xff]
      %v1886 = vld [vmem:[#allocation15 + $0x170] sm:$0xff]
      %v1887 = vld [vmem:[#allocation15 + $0x178] sm:$0xff]
      %v1888 = vld [vmem:[%s11] sm:$0x7]
      %v1890 = vlaneseq
      %v1891 = vshrl.u32 %v1890, 7
      %v1892 = vsub.s32 0, %v1891
      %v1893 = vrot.slane %v1888, %v1892
      %v1894 = vlaneseq
      %v1895 = vshrl.u32 %v1894, 7
      %v1896 = vsub.s32 1, %v1895
      %v1897 = vrot.slane %v1888, %v1896
      %v1898 = vlaneseq
      %v1899 = vshrl.u32 %v1898, 7
      %v1900 = vsub.s32 2, %v1899
      %v1901 = vrot.slane %v1888, %v1900
      %1905 = vmatprep.subr.mxu0 %v1886
      %1906 = vmatpush1.msra.mxu0 %v1885
      %1907 = vmatprep.subr.mxu0 %v1883
      %1908 = vmatpush1.msra.mxu0 %v1882
      %1909 = vmatprep.subr.mxu0 %v1880
      %1910 = vmatpush1.msra.mxu0 %v1879
      %1911 = vmatprep.subr.mxu0 %v1877
      %1912 = vmatpush1.msra.mxu0 %v1876
      %1913 = vmatprep.subr.mxu0 %v1874
      %1914 = vmatpush1.msra.mxu0 %v1873
      %1915 = vmatprep.subr.mxu0 %v1871
      %1916 = vmatpush1.msra.mxu0 %v1870
      %1917 = vmatprep.subr.mxu0 %v1868
      %1918 = vmatpush1.msra.mxu0 %v1867
      %1919 = vmatprep.subr.mxu0 %v1865
      %1920 = vmatpush1.msra.mxu0 %v1864
      %1921 = vmatprep.subr.mxu0 %v1862
      %1922 = vmatpush1.msra.mxu0 %v1861
      %1923 = vmatprep.subr.mxu0 %v1859
      %1924 = vmatpush1.msra.mxu0 %v1858
      %1925 = vmatprep.subr.mxu0 %v1856
      %1926 = vmatpush1.msra.mxu0 %v1855
      %1927 = vmatprep.subr.mxu0 %v1853
      %1928 = vmatpush1.msra.mxu0 %v1852
      %1929 = vmatprep.subr.mxu0 %v1850
      %1930 = vmatpush1.msra.mxu0 %v1849
      %1931 = vmatprep.subr.mxu0 %v1847
      %1932 = vmatpush1.msra.mxu0 %v1846
      %1933 = vmatprep.subr.mxu0 %v1844
      %1934 = vmatpush1.msra.mxu0 %v1843
      %1935 = vmatprep.subr.mxu0 %v1841
      %1936 = vmatpush1.msra.mxu0 %v1840
      %1937 = vmatprep.subr.mxu0 0.0
      %1938 = vmatpush2.msra.mxu0 0.0
      %1939 = vmatprep.subr.mxu0 0.0
      %1940 = vmatpush2.msra.mxu0 0.0
      %1941 = vmatprep.subr.mxu0 0.0
      %1942 = vmatpush2.msra.mxu0 0.0
      %1943 = vmatprep.subr.mxu0 0.0
      %1944 = vmatpush2.msra.mxu0 0.0
      %1945 = vmatprep.subr.mxu0 0.0
      %1946 = vmatpush2.msra.mxu0 0.0
      %1947 = vmatprep.subr.mxu0 0.0
      %1948 = vmatpush2.msra.mxu0 0.0
      %1949 = vmatprep.subr.mxu0 0.0
      %1950 = vmatpush2.msra.mxu0 0.0
      %1951 = vmatprep.subr.mxu0 0.0
      %1952 = vmatpush2.msra.mxu0 0.0
      %1953 = vmatprep.subr.mxu0 0.0
      %1954 = vmatpush2.msra.mxu0 0.0
      %1955 = vmatprep.subr.mxu0 0.0
      %1956 = vmatpush2.msra.mxu0 0.0
      %1957 = vmatprep.subr.mxu0 0.0
      %1958 = vmatpush2.msra.mxu0 0.0
      %1959 = vmatprep.subr.mxu0 0.0
      %1960 = vmatpush2.msra.mxu0 0.0
      %1961 = vmatprep.subr.mxu0 0.0
      %1962 = vmatpush2.msra.mxu0 0.0
      %1963 = vmatprep.subr.mxu0 0.0
      %1964 = vmatpush2.msra.mxu0 0.0
      %1965 = vmatprep.subr.mxu0 0.0
      %1966 = vmatpush2.msra.mxu0 0.0
      %1967 = vmatprep.subr.mxu0 0.0
      %1968 = vmatpush2.msra.mxu0 0.0
      %1969 = vmatprep.mubr.f32.mxu0 0.0
      %1970 = vmatmul.mubr.f32.gmra.mxu0 %v1839
      %v1971 = vpop.f32.mrf.mxu0
      %v1972 = vadd.f32 %v1893, %v1971
      %v1973 = vpop.f32.mrf.mxu0
      %v1974 = vadd.f32 %v1897, %v1973
      %1975 = vdwg.mxu0
      %1976 = vmatprep.subr.mxu0 0.0
      %1977 = vmatpush1.msra.mxu0 %v1887
      %1978 = vmatprep.subr.mxu0 0.0
      %1979 = vmatpush1.msra.mxu0 %v1884
      %1980 = vmatprep.subr.mxu0 0.0
      %1981 = vmatpush1.msra.mxu0 %v1881
      %1982 = vmatprep.subr.mxu0 0.0
      %1983 = vmatpush1.msra.mxu0 %v1878
      %1984 = vmatprep.subr.mxu0 0.0
      %1985 = vmatpush1.msra.mxu0 %v1875
      %1986 = vmatprep.subr.mxu0 0.0
      %1987 = vmatpush1.msra.mxu0 %v1872
      %1988 = vmatprep.subr.mxu0 0.0
      %1989 = vmatpush1.msra.mxu0 %v1869
      %1990 = vmatprep.subr.mxu0 0.0
      %1991 = vmatpush1.msra.mxu0 %v1866
      %1992 = vmatprep.subr.mxu0 0.0
      %1993 = vmatpush1.msra.mxu0 %v1863
      %1994 = vmatprep.subr.mxu0 0.0
      %1995 = vmatpush1.msra.mxu0 %v1860
      %1996 = vmatprep.subr.mxu0 0.0
      %1997 = vmatpush1.msra.mxu0 %v1857
      %1998 = vmatprep.subr.mxu0 0.0
      %1999 = vmatpush1.msra.mxu0 %v1854
      %2000 = vmatprep.subr.mxu0 0.0
      %2001 = vmatpush1.msra.mxu0 %v1851
      %2002 = vmatprep.subr.mxu0 0.0
      %2003 = vmatpush1.msra.mxu0 %v1848
      %2004 = vmatprep.subr.mxu0 0.0
      %2005 = vmatpush1.msra.mxu0 %v1845
      %2006 = vmatprep.subr.mxu0 0.0
      %2007 = vmatpush1.msra.mxu0 %v1842
      %2008 = vmatprep.subr.mxu0 0.0
      %2009 = vmatpush2.msra.mxu0 0.0
      %2010 = vmatprep.subr.mxu0 0.0
      %2011 = vmatpush2.msra.mxu0 0.0
      %2012 = vmatprep.subr.mxu0 0.0
      %2013 = vmatpush2.msra.mxu0 0.0
      %2014 = vmatprep.subr.mxu0 0.0
      %2015 = vmatpush2.msra.mxu0 0.0
      %2016 = vmatprep.subr.mxu0 0.0
      %2017 = vmatpush2.msra.mxu0 0.0
      %2018 = vmatprep.subr.mxu0 0.0
      %2019 = vmatpush2.msra.mxu0 0.0
      %2020 = vmatprep.subr.mxu0 0.0
      %2021 = vmatpush2.msra.mxu0 0.0
      %2022 = vmatprep.subr.mxu0 0.0
      %2023 = vmatpush2.msra.mxu0 0.0
      %2024 = vmatprep.subr.mxu0 0.0
      %2025 = vmatpush2.msra.mxu0 0.0
      %2026 = vmatprep.subr.mxu0 0.0
      %2027 = vmatpush2.msra.mxu0 0.0
      %2028 = vmatprep.subr.mxu0 0.0
      %2029 = vmatpush2.msra.mxu0 0.0
      %2030 = vmatprep.subr.mxu0 0.0
      %2031 = vmatpush2.msra.mxu0 0.0
      %2032 = vmatprep.subr.mxu0 0.0
      %2033 = vmatpush2.msra.mxu0 0.0
      %2034 = vmatprep.subr.mxu0 0.0
      %2035 = vmatpush2.msra.mxu0 0.0
      %2036 = vmatprep.subr.mxu0 0.0
      %2037 = vmatpush2.msra.mxu0 0.0
      %2038 = vmatprep.subr.mxu0 0.0
      %2039 = vmatpush2.msra.mxu0 0.0
      %2040 = vmatprep.mubr.f32.mxu0 0.0
      %2041 = vmatmul.mubr.f32.gmra.mxu0 %v1839
      %v2042 = vpop.f32.mrf.mxu0
      %v2043 = vadd.f32 %v1901, %v2042
      %v2044 = vpop.f32.mrf.mxu0
      %2045 = vdwg.mxu0
      %v2046 = vld [vmem:[#allocation17] sm:$0xff]
      %v2047 = vld [vmem:[#allocation17 + $0x8] sm:$0xff]
      %v2048 = vld [vmem:[#allocation17 + $0x10] sm:$0xff]
      %v2049 = vld [vmem:[#allocation17 + $0x18] sm:$0xff]
      %v2050 = vld [vmem:[#allocation17 + $0x20] sm:$0xff]
      %v2051 = vld [vmem:[#allocation17 + $0x28] sm:$0xff]
      %v2052 = vld [vmem:[#allocation17 + $0x30] sm:$0xff]
      %v2053 = vld [vmem:[#allocation17 + $0x38] sm:$0xff]
      %v2054 = vld [vmem:[#allocation17 + $0x40] sm:$0xff]
      %v2055 = vld [vmem:[#allocation17 + $0x48] sm:$0xff]
      %v2056 = vld [vmem:[#allocation17 + $0x50] sm:$0xff]
      %v2057 = vld [vmem:[#allocation17 + $0x58] sm:$0xff]
      %v2058 = vld [vmem:[#allocation17 + $0x60] sm:$0xff]
      %v2059 = vld [vmem:[#allocation17 + $0x68] sm:$0xff]
      %v2060 = vld [vmem:[#allocation17 + $0x70] sm:$0xff]
      %v2061 = vld [vmem:[#allocation17 + $0x78] sm:$0xff]
      %v2062 = vld [vmem:[#allocation17 + $0x80] sm:$0xff]
      %v2063 = vld [vmem:[#allocation17 + $0x88] sm:$0xff]
      %v2064 = vld [vmem:[#allocation17 + $0x90] sm:$0xff]
      %v2065 = vld [vmem:[#allocation17 + $0x98] sm:$0xff]
      %v2066 = vld [vmem:[#allocation17 + $0xa0] sm:$0xff]
      %v2067 = vld [vmem:[#allocation17 + $0xa8] sm:$0xff]
      %v2068 = vld [vmem:[#allocation17 + $0xb0] sm:$0xff]
      %v2069 = vld [vmem:[#allocation17 + $0xb8] sm:$0xff]
      %v2070 = vld [vmem:[#allocation17 + $0xc0] sm:$0xff]
      %v2071 = vld [vmem:[#allocation17 + $0xc8] sm:$0xff]
      %v2072 = vld [vmem:[#allocation17 + $0xd0] sm:$0xff]
      %v2073 = vld [vmem:[#allocation17 + $0xd8] sm:$0xff]
      %v2074 = vld [vmem:[#allocation17 + $0xe0] sm:$0xff]
      %v2075 = vld [vmem:[#allocation17 + $0xe8] sm:$0xff]
      %v2076 = vld [vmem:[#allocation17 + $0xf0] sm:$0xff]
      %v2077 = vld [vmem:[#allocation17 + $0xf8] sm:$0xff]
      %v2078 = vld [vmem:[#allocation17 + $0x100] sm:$0xff]
      %v2079 = vld [vmem:[#allocation17 + $0x108] sm:$0xff]
      %v2080 = vld [vmem:[#allocation17 + $0x110] sm:$0xff]
      %v2081 = vld [vmem:[#allocation17 + $0x118] sm:$0xff]
      %v2082 = vld [vmem:[#allocation17 + $0x120] sm:$0xff]
      %v2083 = vld [vmem:[#allocation17 + $0x128] sm:$0xff]
      %v2084 = vld [vmem:[#allocation17 + $0x130] sm:$0xff]
      %v2085 = vld [vmem:[#allocation17 + $0x138] sm:$0xff]
      %v2086 = vld [vmem:[#allocation17 + $0x140] sm:$0xff]
      %v2087 = vld [vmem:[#allocation17 + $0x148] sm:$0xff]
      %v2088 = vld [vmem:[#allocation17 + $0x150] sm:$0xff]
      %v2089 = vld [vmem:[#allocation17 + $0x158] sm:$0xff]
      %v2090 = vld [vmem:[#allocation17 + $0x160] sm:$0xff]
      %v2091 = vld [vmem:[#allocation17 + $0x168] sm:$0xff]
      %v2092 = vld [vmem:[#allocation17 + $0x170] sm:$0xff]
      %v2093 = vld [vmem:[#allocation17 + $0x178] sm:$0xff]
      %v2094 = vld [vmem:[%s12] sm:$0x7]
      %v2096 = vlaneseq
      %v2097 = vshrl.u32 %v2096, 7
      %v2098 = vsub.s32 0, %v2097
      %v2099 = vrot.slane %v2094, %v2098
      %v2100 = vlaneseq
      %v2101 = vshrl.u32 %v2100, 7
      %v2102 = vsub.s32 1, %v2101
      %v2103 = vrot.slane %v2094, %v2102
      %v2104 = vlaneseq
      %v2105 = vshrl.u32 %v2104, 7
      %v2106 = vsub.s32 2, %v2105
      %v2107 = vrot.slane %v2094, %v2106
      %2111 = vmatprep.subr.mxu0 %v2092
      %2112 = vmatpush1.msra.mxu0 %v2091
      %2113 = vmatprep.subr.mxu0 %v2089
      %2114 = vmatpush1.msra.mxu0 %v2088
      %2115 = vmatprep.subr.mxu0 %v2086
      %2116 = vmatpush1.msra.mxu0 %v2085
      %2117 = vmatprep.subr.mxu0 %v2083
      %2118 = vmatpush1.msra.mxu0 %v2082
      %2119 = vmatprep.subr.mxu0 %v2080
      %2120 = vmatpush1.msra.mxu0 %v2079
      %2121 = vmatprep.subr.mxu0 %v2077
      %2122 = vmatpush1.msra.mxu0 %v2076
      %2123 = vmatprep.subr.mxu0 %v2074
      %2124 = vmatpush1.msra.mxu0 %v2073
      %2125 = vmatprep.subr.mxu0 %v2071
      %2126 = vmatpush1.msra.mxu0 %v2070
      %2127 = vmatprep.subr.mxu0 %v2068
      %2128 = vmatpush1.msra.mxu0 %v2067
      %2129 = vmatprep.subr.mxu0 %v2065
      %2130 = vmatpush1.msra.mxu0 %v2064
      %2131 = vmatprep.subr.mxu0 %v2062
      %2132 = vmatpush1.msra.mxu0 %v2061
      %2133 = vmatprep.subr.mxu0 %v2059
      %2134 = vmatpush1.msra.mxu0 %v2058
      %2135 = vmatprep.subr.mxu0 %v2056
      %2136 = vmatpush1.msra.mxu0 %v2055
      %2137 = vmatprep.subr.mxu0 %v2053
      %2138 = vmatpush1.msra.mxu0 %v2052
      %2139 = vmatprep.subr.mxu0 %v2050
      %2140 = vmatpush1.msra.mxu0 %v2049
      %2141 = vmatprep.subr.mxu0 %v2047
      %2142 = vmatpush1.msra.mxu0 %v2046
      %2143 = vmatprep.subr.mxu0 0.0
      %2144 = vmatpush2.msra.mxu0 0.0
      %2145 = vmatprep.subr.mxu0 0.0
      %2146 = vmatpush2.msra.mxu0 0.0
      %2147 = vmatprep.subr.mxu0 0.0
      %2148 = vmatpush2.msra.mxu0 0.0
      %2149 = vmatprep.subr.mxu0 0.0
      %2150 = vmatpush2.msra.mxu0 0.0
      %2151 = vmatprep.subr.mxu0 0.0
      %2152 = vmatpush2.msra.mxu0 0.0
      %2153 = vmatprep.subr.mxu0 0.0
      %2154 = vmatpush2.msra.mxu0 0.0
      %2155 = vmatprep.subr.mxu0 0.0
      %2156 = vmatpush2.msra.mxu0 0.0
      %2157 = vmatprep.subr.mxu0 0.0
      %2158 = vmatpush2.msra.mxu0 0.0
      %2159 = vmatprep.subr.mxu0 0.0
      %2160 = vmatpush2.msra.mxu0 0.0
      %2161 = vmatprep.subr.mxu0 0.0
      %2162 = vmatpush2.msra.mxu0 0.0
      %2163 = vmatprep.subr.mxu0 0.0
      %2164 = vmatpush2.msra.mxu0 0.0
      %2165 = vmatprep.subr.mxu0 0.0
      %2166 = vmatpush2.msra.mxu0 0.0
      %2167 = vmatprep.subr.mxu0 0.0
      %2168 = vmatpush2.msra.mxu0 0.0
      %2169 = vmatprep.subr.mxu0 0.0
      %2170 = vmatpush2.msra.mxu0 0.0
      %2171 = vmatprep.subr.mxu0 0.0
      %2172 = vmatpush2.msra.mxu0 0.0
      %2173 = vmatprep.subr.mxu0 0.0
      %2174 = vmatpush2.msra.mxu0 0.0
      %2175 = vmatprep.mubr.f32.mxu0 0.0
      %2176 = vmatmul.mubr.f32.gmra.mxu0 %v284
      %v2177 = vpop.f32.mrf.mxu0
      %v2178 = vadd.f32 %v2099, %v2177
      %v2179 = vpop.f32.mrf.mxu0
      %v2180 = vadd.f32 %v2103, %v2179
      %2181 = vdwg.mxu0
      %2182 = vmatprep.subr.mxu0 0.0
      %2183 = vmatpush1.msra.mxu0 %v2093
      %2184 = vmatprep.subr.mxu0 0.0
      %2185 = vmatpush1.msra.mxu0 %v2090
      %2186 = vmatprep.subr.mxu0 0.0
      %2187 = vmatpush1.msra.mxu0 %v2087
      %2188 = vmatprep.subr.mxu0 0.0
      %2189 = vmatpush1.msra.mxu0 %v2084
      %2190 = vmatprep.subr.mxu0 0.0
      %2191 = vmatpush1.msra.mxu0 %v2081
      %2192 = vmatprep.subr.mxu0 0.0
      %2193 = vmatpush1.msra.mxu0 %v2078
      %2194 = vmatprep.subr.mxu0 0.0
      %2195 = vmatpush1.msra.mxu0 %v2075
      %2196 = vmatprep.subr.mxu0 0.0
      %2197 = vmatpush1.msra.mxu0 %v2072
      %2198 = vmatprep.subr.mxu0 0.0
      %2199 = vmatpush1.msra.mxu0 %v2069
      %2200 = vmatprep.subr.mxu0 0.0
      %2201 = vmatpush1.msra.mxu0 %v2066
      %2202 = vmatprep.subr.mxu0 0.0
      %2203 = vmatpush1.msra.mxu0 %v2063
      %2204 = vmatprep.subr.mxu0 0.0
      %2205 = vmatpush1.msra.mxu0 %v2060
      %2206 = vmatprep.subr.mxu0 0.0
      %2207 = vmatpush1.msra.mxu0 %v2057
      %2208 = vmatprep.subr.mxu0 0.0
      %2209 = vmatpush1.msra.mxu0 %v2054
      %2210 = vmatprep.subr.mxu0 0.0
      %2211 = vmatpush1.msra.mxu0 %v2051
      %2212 = vmatprep.subr.mxu0 0.0
      %2213 = vmatpush1.msra.mxu0 %v2048
      %2214 = vmatprep.subr.mxu0 0.0
      %2215 = vmatpush2.msra.mxu0 0.0
      %2216 = vmatprep.subr.mxu0 0.0
      %2217 = vmatpush2.msra.mxu0 0.0
      %2218 = vmatprep.subr.mxu0 0.0
      %2219 = vmatpush2.msra.mxu0 0.0
      %2220 = vmatprep.subr.mxu0 0.0
      %2221 = vmatpush2.msra.mxu0 0.0
      %2222 = vmatprep.subr.mxu0 0.0
      %2223 = vmatpush2.msra.mxu0 0.0
      %2224 = vmatprep.subr.mxu0 0.0
      %2225 = vmatpush2.msra.mxu0 0.0
      %2226 = vmatprep.subr.mxu0 0.0
      %2227 = vmatpush2.msra.mxu0 0.0
      %2228 = vmatprep.subr.mxu0 0.0
      %2229 = vmatpush2.msra.mxu0 0.0
      %2230 = vmatprep.subr.mxu0 0.0
      %2231 = vmatpush2.msra.mxu0 0.0
      %2232 = vmatprep.subr.mxu0 0.0
      %2233 = vmatpush2.msra.mxu0 0.0
      %2234 = vmatprep.subr.mxu0 0.0
      %2235 = vmatpush2.msra.mxu0 0.0
      %2236 = vmatprep.subr.mxu0 0.0
      %2237 = vmatpush2.msra.mxu0 0.0
      %2238 = vmatprep.subr.mxu0 0.0
      %2239 = vmatpush2.msra.mxu0 0.0
      %2240 = vmatprep.subr.mxu0 0.0
      %2241 = vmatpush2.msra.mxu0 0.0
      %2242 = vmatprep.subr.mxu0 0.0
      %2243 = vmatpush2.msra.mxu0 0.0
      %2244 = vmatprep.subr.mxu0 0.0
      %2245 = vmatpush2.msra.mxu0 0.0
      %2246 = vmatprep.mubr.f32.mxu0 0.0
      %2247 = vmatmul.mubr.f32.gmra.mxu0 %v284
      %v2248 = vpop.f32.mrf.mxu0
      %v2249 = vadd.f32 %v2107, %v2248
      %v2250 = vpop.f32.mrf.mxu0
      %2251 = vdwg.mxu0
      %v2252 = vadd.f32 %v1972, %v2178
      %v2253 = vxor.u32 %v2252, 2147483648
      %v2254 = vmul.f32 %v2253, 1.442695
      %v2255 = vpow.pop %v2254
      %v2256 = vadd.f32 %v2255, 1.0
      %v2257 = vrcp.pop %v2256
      %v2258 = vmul.f32 1.0, %v2257
      %v2259 = vadd.f32 %v1974, %v2180
      %v2260 = vxor.u32 %v2259, 2147483648
      %v2261 = vmul.f32 %v2260, 1.442695
      %v2262 = vpow.pop %v2261
      %v2263 = vadd.f32 %v2262, 1.0
      %v2264 = vrcp.pop %v2263
      %v2265 = vmul.f32 1.0, %v2264
      %v2266 = vmul.f32 %v2258, %v2249
      %v2267 = vadd.f32 %v2043, %v2266
      %v2268 = vtanh.pop %v2267
      %v2269 = vsub.f32 1.0, %v2265
      %v2270 = vmul.f32 %v2269, %v2268
      %v2271 = vmul.f32 %v2265, %v284
      %v2272 = vadd.f32 %v2270, %v2271
      %2273 = vst [vmem:[#allocation3] sm:$0xff] %v2272
      %2274 = vst [vmem:[#allocation21] sm:$0xff] %v2272
      %vm2275 = vcmask 7168
      %2276 = vst.msk [vmem:[#allocation4] sm:$0xff] %vm2275, -1e+30
      %2277 = vst.msk [vmem:[#allocation5] sm:$0xff] %vm2275, 0.0
    $region81: #{tpu_custom_call.1} parent=1 // pred_fallthru
      _
    %v2278 = vld [vmem:[#allocation3] sm:$0xff]
    %v2279 = vld [vmem:[#allocation18] sm:$0xff]
    %v2280 = vld [vmem:[#allocation18 + $0x8] sm:$0xff]
    %v2281 = vld [vmem:[#allocation18 + $0x10] sm:$0xff]
    %v2282 = vld [vmem:[#allocation18 + $0x18] sm:$0xff]
    %v2283 = vld [vmem:[#allocation18 + $0x20] sm:$0xff]
    %v2284 = vld [vmem:[#allocation18 + $0x28] sm:$0xff]
    %v2285 = vld [vmem:[#allocation18 + $0x30] sm:$0xff]
    %v2286 = vld [vmem:[#allocation18 + $0x38] sm:$0xff]
    %v2287 = vld [vmem:[#allocation18 + $0x40] sm:$0xff]
    %v2288 = vld [vmem:[#allocation18 + $0x48] sm:$0xff]
    %v2289 = vld [vmem:[#allocation18 + $0x50] sm:$0xff]
    %v2290 = vld [vmem:[#allocation18 + $0x58] sm:$0xff]
    %v2291 = vld [vmem:[#allocation18 + $0x60] sm:$0xff]
    %v2292 = vld [vmem:[#allocation18 + $0x68] sm:$0xff]
    %v2293 = vld [vmem:[#allocation18 + $0x70] sm:$0xff]
    %v2294 = vld [vmem:[#allocation18 + $0x78] sm:$0xff]
    %v2295 = vld [vmem:[%s14] sm:$0x1]
    %v2297 = vlaneseq
    %v2298 = vshrl.u32 %v2297, 7
    %v2299 = vsub.s32 0, %v2298
    %v2300 = vrot.slane %v2295, %v2299
    %2302 = vmatprep.subr.mxu0 0.0
    %2303 = vmatpush1.msra.mxu0 %v2294
    %2304 = vmatprep.subr.mxu0 0.0
    %2305 = vmatpush1.msra.mxu0 %v2293
    %2306 = vmatprep.subr.mxu0 0.0
    %2307 = vmatpush1.msra.mxu0 %v2292
    %2308 = vmatprep.subr.mxu0 0.0
    %2309 = vmatpush1.msra.mxu0 %v2291
    %2310 = vmatprep.subr.mxu0 0.0
    %2311 = vmatpush1.msra.mxu0 %v2290
    %2312 = vmatprep.subr.mxu0 0.0
    %2313 = vmatpush1.msra.mxu0 %v2289
    %2314 = vmatprep.subr.mxu0 0.0
    %2315 = vmatpush1.msra.mxu0 %v2288
    %2316 = vmatprep.subr.mxu0 0.0
    %2317 = vmatpush1.msra.mxu0 %v2287
    %2318 = vmatprep.subr.mxu0 0.0
    %2319 = vmatpush1.msra.mxu0 %v2286
    %2320 = vmatprep.subr.mxu0 0.0
    %2321 = vmatpush1.msra.mxu0 %v2285
    %2322 = vmatprep.subr.mxu0 0.0
    %2323 = vmatpush1.msra.mxu0 %v2284
    %2324 = vmatprep.subr.mxu0 0.0
    %2325 = vmatpush1.msra.mxu0 %v2283
    %2326 = vmatprep.subr.mxu0 0.0
    %2327 = vmatpush1.msra.mxu0 %v2282
    %2328 = vmatprep.subr.mxu0 0.0
    %2329 = vmatpush1.msra.mxu0 %v2281
    %2330 = vmatprep.subr.mxu0 0.0
    %2331 = vmatpush1.msra.mxu0 %v2280
    %2332 = vmatprep.subr.mxu0 0.0
    %2333 = vmatpush1.msra.mxu0 %v2279
    %2334 = vmatprep.subr.mxu0 0.0
    %2335 = vmatpush2.msra.mxu0 0.0
    %2336 = vmatprep.subr.mxu0 0.0
    %2337 = vmatpush2.msra.mxu0 0.0
    %2338 = vmatprep.subr.mxu0 0.0
    %2339 = vmatpush2.msra.mxu0 0.0
    %2340 = vmatprep.subr.mxu0 0.0
    %2341 = vmatpush2.msra.mxu0 0.0
    %2342 = vmatprep.subr.mxu0 0.0
    %2343 = vmatpush2.msra.mxu0 0.0
    %2344 = vmatprep.subr.mxu0 0.0
    %2345 = vmatpush2.msra.mxu0 0.0
    %2346 = vmatprep.subr.mxu0 0.0
    %2347 = vmatpush2.msra.mxu0 0.0
    %2348 = vmatprep.subr.mxu0 0.0
    %2349 = vmatpush2.msra.mxu0 0.0
    %2350 = vmatprep.subr.mxu0 0.0
    %2351 = vmatpush2.msra.mxu0 0.0
    %2352 = vmatprep.subr.mxu0 0.0
    %2353 = vmatpush2.msra.mxu0 0.0
    %2354 = vmatprep.subr.mxu0 0.0
    %2355 = vmatpush2.msra.mxu0 0.0
    %2356 = vmatprep.subr.mxu0 0.0
    %2357 = vmatpush2.msra.mxu0 0.0
    %2358 = vmatprep.subr.mxu0 0.0
    %2359 = vmatpush2.msra.mxu0 0.0
    %2360 = vmatprep.subr.mxu0 0.0
    %2361 = vmatpush2.msra.mxu0 0.0
    %2362 = vmatprep.subr.mxu0 0.0
    %2363 = vmatpush2.msra.mxu0 0.0
    %2364 = vmatprep.subr.mxu0 0.0
    %2365 = vmatpush2.msra.mxu0 0.0
    %2366 = vmatprep.mubr.f32.mxu0 0.0
    %2367 = vmatmul.mubr.f32.gmra.mxu0 %v2278
    %v2368 = vpop.f32.mrf.mxu0
    %v2369 = vadd.f32 %v2300, %v2368
    %v2370 = vpop.f32.mrf.mxu0
    %2371 = vdwg.mxu0
    %v2372 = vld [vmem:[#allocation4] sm:$0xff]
    %2373 = vmax.xlane.f32.xlu0 %v2369
    %v2374 = vpop.xlane.xlu0 %2373
    %v2375 = vmax.f32 %v2372, %v2374
    %v2376 = vld [vmem:[#allocation5] sm:$0xff]
    %v2377 = vsub.f32 %v2372, %v2375
    %v2378 = vmul.f32 %v2377, 1.442695
    %v2379 = vpow.pop %v2378
    %v2380 = vmul.f32 %v2376, %v2379
    %2382 = vset.pattern.permute.xlu0 0
    %2383 = vperm.xlu0 %2382, %v2375
    %v2384 = vpop.permute.xlu0 %2383
    %v2386 = vsub.f32 %v2369, %v2384
    %v2387 = vmul.f32 %v2386, 1.442695
    %v2388 = vpow.pop %v2387
    %2389 = vadd.xlane.f32.xlu0 %v2388
    %v2390 = vpop.xlane.xlu0 %2389
    %v2391 = vadd.f32 %v2380, %v2390
    %vm2392 = vcmask 7168
    %2393 = vst.msk [vmem:[#allocation5] sm:$0xff] %vm2392, %v2391
    %2394 = vst.msk [vmem:[#allocation4] sm:$0xff] %vm2392, %v2375
    %s2395 = smul.u32 0, 128
    %s2396 = sshra.s32 %s2395, 7
    %s2397 = sand.u32 %s2395, 127
    %s2398 = scalar_lea.vmem [#allocation20], %s2396
    %2399 = vst [vmem:[%s2398] sm:$0xff] %v2369
    // Predicated region
    $region114: #{tpu_custom_call.1} parent=1 // pred_check
      %p2400 = pneg %p137
    $region115: #{tpu_custom_call.1} parent=1 // pred_check_branch
      %2402 = sbr.rel (%p2400) target = $region117
    $region116: #{tpu_custom_call.1} parent=1 // pred_region
      %v2403 = vld [vmem:[#allocation20] sm:$0xff]
      %v2404 = vld [vmem:[#allocation4] sm:$0xff]
      %v2405 = vld [vmem:[#allocation5] sm:$0xff]
      %v2406 = vlog2.pop %v2405
      %v2407 = vmul.f32 %v2406, 0.6931472
      %v2408 = vadd.f32 %v2404, %v2407
      %2410 = vset.pattern.permute.xlu0 0
      %2411 = vperm.xlu0 %2410, %v2408
      %v2412 = vpop.permute.xlu0 %2411
      %v2414 = vsub.f32 %v2403, %v2412
      %2415 = vst [vmem:[#allocation20] sm:$0xff] %v2414
    $region117: #{tpu_custom_call.1} parent=1 // pred_fallthru
      _
    // Predicated region
    $region118: #{tpu_custom_call.1} parent=1 // pred_check
      _
    $region119: #{tpu_custom_call.1} parent=1 // pred_check_branch
      %2417 = sbr.rel (0) target = $region121
    $region120: #{tpu_custom_call.1} parent=1 // pred_region
      %s2419 = ssub.s32 128, 128
      %2420 = vsyncadd [#allocation11], %s2419
      %s2422 = sshll.u32 [#allocation20], 4
      %s2423 = int_to_ptr.vmem [resolvable:$true] %s2422
      %2425 = dma.vmem_to_hbm [thread:$0]  %s2423, 128, %s15, [#allocation11]
    $region121: #{tpu_custom_call.1} parent=1 // pred_fallthru
      _
    // Predicated region
    $region122: #{tpu_custom_call.1} parent=1 // pred_check
      _
    $region123: #{tpu_custom_call.1} parent=1 // pred_check_branch
      %2427 = sbr.rel (0) target = $region125
    $region124: #{tpu_custom_call.1} parent=1 // pred_region
      %s2429 = ssub.s32 128, 128
      %2430 = vsyncadd [#allocation22], %s2429
      %s2432 = sshll.u32 [#allocation21], 4
      %s2433 = int_to_ptr.vmem [resolvable:$true] %s2432
      %2435 = dma.vmem_to_hbm [thread:$0]  %s2433, 128, %s16, [#allocation22]
    $region125: #{tpu_custom_call.1} parent=1 // pred_fallthru
      _
    // Predicated region
    $region126: #{tpu_custom_call.1} parent=1 // pred_check
      _
    $region127: #{tpu_custom_call.1} parent=1 // pred_check_branch
      %2437 = sbr.rel (0) target = $region129
    $region128: #{tpu_custom_call.1} parent=1 // pred_region
      %s2439 = ssub.s32 128, 128
      %2440 = vsyncadd [#allocation22], %s2439
      %s2441 = sshll.u32 [#allocation23], 4
      %s2442 = int_to_ptr.vmem [resolvable:$true] %s2441
      %2447 = dma.vmem_to_hbm [thread:$0]  %s2442, 128, %s17, [#allocation22], 16, 16, 1
    $region129: #{tpu_custom_call.1} parent=1 // pred_fallthru
      _
    // Predicated region
    $region130: #{tpu_custom_call.1} parent=1 // pred_check
      _
    $region131: #{tpu_custom_call.1} parent=1 // pred_check_branch
      %2449 = sbr.rel (0) target = $region133
    $region132: #{tpu_custom_call.1} parent=1 // pred_region
      %2450 = dma.done [#allocation11], 128
    $region133: #{tpu_custom_call.1} parent=1 // pred_fallthru
      _
    // Predicated region
    $region134: #{tpu_custom_call.1} parent=1 // pred_check
      _
    $region135: #{tpu_custom_call.1} parent=1 // pred_check_branch
      %2452 = sbr.rel (0) target = $region137
    $region136: #{tpu_custom_call.1} parent=1 // pred_region
      %2453 = dma.done [#allocation22], 128
    $region137: #{tpu_custom_call.1} parent=1 // pred_fallthru
      _
    // Predicated region
    $region138: #{tpu_custom_call.1} parent=1 // pred_check
      _
    $region139: #{tpu_custom_call.1} parent=1 // pred_check_branch
      %2455 = sbr.rel (0) target = $region141
    $region140: #{tpu_custom_call.1} parent=1 // pred_region
      %2456 = dma.done [#allocation22], 128
    $region141: #{tpu_custom_call.1} parent=1 // pred_fallthru
      _
    %2457 = vsyncpa [#allocation10], 1
    %2458 = vsyncpa [#allocation13], 1
    %2459 = vsyncpa [#allocation16], 1
    %2460 = vsyncpa [#allocation19], 1
    %2461 = vsyncpa [#allocation11], 1
    %2462 = vsyncpa [#allocation22], 1
  %2463 = vsyncmov [#allocation6]
  %s2464 = vpop.sfrf %2463
  %p2465 = scmp.eq.s32.totalorder %s2464, 0
  %p2466 = pneg %p2465
  %2468 = shalt.err (%p2466)
  %s2469 = scalar_lea.sflag [#allocation6], 1
  %2470 = vsyncmov %s2469
  %s2471 = vpop.sfrf %2470
  %p2472 = scmp.eq.s32.totalorder %s2471, 0
  %p2473 = pneg %p2472
  %2475 = shalt.err (%p2473)
  %s2476 = scalar_lea.sflag [#allocation6], 2
  %2477 = vsyncmov %s2476
  %s2478 = vpop.sfrf %2477
  %p2479 = scmp.eq.s32.totalorder %s2478, 0
  %p2480 = pneg %p2479
  %2482 = shalt.err (%p2480)
  %s2483 = scalar_lea.sflag [#allocation6], 3
  %2484 = vsyncmov %s2483
  %s2485 = vpop.sfrf %2484
  %p2486 = scmp.eq.s32.totalorder %s2485, 0
  %p2487 = pneg %p2486
  %2489 = shalt.err (%p2487)
  %s2490 = scalar_lea.sflag [#allocation6], 4
  %2491 = vsyncmov %s2490
  %s2492 = vpop.sfrf %2491
  %p2493 = scmp.eq.s32.totalorder %s2492, 0
  %p2494 = pneg %p2493
  %2496 = shalt.err (%p2494)
  %s2497 = scalar_lea.sflag [#allocation6], 5
  %2498 = vsyncmov %s2497
  %s2499 = vpop.sfrf %2498
  %p2500 = scmp.eq.s32.totalorder %s2499, 0
  %p2501 = pneg %p2500
  %2503 = shalt.err (%p2501)
  %s2504 = scalar_lea.sflag [#allocation6], 6
  %2505 = vsyncmov %s2504
  %s2506 = vpop.sfrf %2505
  %p2507 = scmp.eq.s32.totalorder %s2506, 0
  %p2508 = pneg %p2507
  %2510 = shalt.err (%p2508)
  %s2511 = scalar_lea.sflag [#allocation6], 7
  %2512 = vsyncmov %s2511
  %s2513 = vpop.sfrf %2512
  %p2514 = scmp.eq.s32.totalorder %s2513, 0
  %p2515 = pneg %p2514
  %2517 = shalt.err (%p2515)

</llo_original>
